<compile_context>
chip_gen: v7x
topology: tpu7x:2x2x1
jax: 0.10.0
libtpu: 0.0.40
codegen_flags: <defaults>
</compile_context>

<pallas_src>
import functools

import numpy as np
import jax
import jax.numpy as jnp
from jax import lax
from jax.experimental import pallas as pl
from jax.experimental.pallas import tpu as pltpu


_LANE = 128  # every kernel feature dim is padded to one full lane tile


# ----------------------------------------------------------------------------
# Fused kernel: 3x3 conv (in-kernel shifted-slice im2col) + ReLU + masked
# global average pool + projection + L2 norm, per batch step; graph build +
# top-k threshold + 2-layer GCN in the tail of the last batch step.
# Grid = (B,), "arbitrary" (scratch node table carries across batch steps).
# ----------------------------------------------------------------------------
def _lsg_kernel(img_ref, mask_ref, wc_ref, bc_ref, wp_ref, bp_ref,
                text_ref, wblk_ref, gt_ref, w1_ref, w2_ref,
                f_ref, h_ref, c_ref, g_ref, nodes_ref,
                *, wp2, n_rows, t_nodes, k_keep, n_bisect):
    b = pl.program_id(0)

    # ---- backbone: 3x3 conv as 9 shifted sublane slices -> 9 MXU matmuls ----
    # img_ref holds the zero-padded image flattened over (row, col): shape
    # (1, (H+2)*(W+2), C).  Tap (dy, dx) of the conv is the contiguous slice
    # starting at dy*(W+2)+dx; rows that straddle the width padding are
    # killed later by the pooling mask.
    x = img_ref[0]                                       # ((H+2)*(W+2), C) f32
    y = None
    for dy in range(3):
        for dx in range(3):
            s0 = dy * wp2 + dx
            win = x[s0:s0 + n_rows, :].astype(jnp.bfloat16)
            part = jnp.dot(win, wc_ref[dy * 3 + dx],     # bf16 x bf16 -> f32
                           preferred_element_type=jnp.float32)
            y = part if y is None else y + part
    y = jnp.maximum(y + bc_ref[...], 0.0)                # bias + ReLU (f32)

    # masked global average pool: mask carries 1/HW on valid pixels, 0 on the
    # width-padding rows.  One reduction per image (no per-step accumulate).
    fv = jnp.sum(y * mask_ref[...], axis=0, keepdims=True)      # (1, 128)
    f_ref[pl.ds(b, 1), :] = fv

    # projection head + L2 norm
    hv = jnp.dot(fv, wp_ref[...], preferred_element_type=jnp.float32) + bp_ref[...]
    hv = hv * lax.rsqrt(jnp.sum(hv * hv, axis=-1, keepdims=True) + 1e-12)
    h_ref[pl.ds(b, 1), :] = hv

    # ---- stage graph nodes in VMEM scratch (no HBM round-trip for h) -------
    @pl.when(b == 0)
    def _():
        nodes_ref[0:t_nodes, :] = text_ref[...]
    nodes_ref[pl.ds(t_nodes + b, 1), :] = hv

    # ---- graph + 2-layer GCN, fused into the last batch step ---------------
    @pl.when(b == pl.num_programs(0) - 1)
    def _():
        xn = nodes_ref[...]
        xn = xn * lax.rsqrt(jnp.sum(xn * xn, axis=-1, keepdims=True) + 1e-12)
        # cosine similarity S = Xn @ Xn^T without an explicit transpose
        s = lax.dot_general(xn, xn, (((1,), (1,)), ((), ())),
                            preferred_element_type=jnp.float32)
        a = s * wblk_ref[...]                            # weighted adjacency

        n = a.shape[0]
        row = lax.broadcasted_iota(jnp.int32, (n, n), 0)
        col = lax.broadcasted_iota(jnp.int32, (n, n), 1)
        off = row != col

        def _red2(op, v):                                # full reduce -> (1,1)
            return op(op(v, axis=1, keepdims=True), axis=0, keepdims=True)

        # Exact-ish top-k edge threshold: bisection for the k-th largest
        # off-diagonal value.  a_off is built once so each of the n_bisect
        # iterations is only a compare + sum (shorter serial XLU chain).
        lo = _red2(jnp.min, a) - 1.0
        hi = _red2(jnp.max, a)
        a_off = jnp.where(off, a, lo)                    # diag always below thr
        kf = float(k_keep)
        for _ in range(n_bisect):
            mid = 0.5 * (lo + hi)
            cnt = _red2(jnp.sum, (a_off > mid).astype(jnp.float32))
            take = cnt >= kf
            lo = jnp.where(take, mid, lo)
            hi = jnp.where(take, hi, mid)

        # TODO(synk): ties at the converged threshold may keep a few more than
        # k_keep edges (same caveat as an exact quantile on tied values).
        keep = jnp.logical_or(a_off > lo, gt_ref[...] > 0.5)    # keep gt edges
        a_sl = jnp.where(off, jnp.where(keep, a, 0.0), 1.0)     # + self loops

        # symmetric normalization folded into the adjacency ONCE and reused by
        # both GCN layers: A_hat = D^-1/2 A D^-1/2.
        d_row = lax.rsqrt(jnp.sum(a_sl, axis=1, keepdims=True) + 1e-12)  # (N,1)
        d_col = lax.rsqrt(jnp.sum(a_sl, axis=0, keepdims=True) + 1e-12)  # (1,N)
        a_hat = d_row * a_sl * d_col

        xw = jnp.dot(xn, w1_ref[...], preferred_element_type=jnp.float32)
        g = jnp.maximum(jnp.dot(a_hat, xw, preferred_element_type=jnp.float32), 0.0)
        gw = jnp.dot(g, w2_ref[...], preferred_element_type=jnp.float32)
        c_ref[...] = jnp.dot(a_hat, gw, preferred_element_type=jnp.float32)
        g_ref[...] = g


# ----------------------------------------------------------------------------
# Jitted wrapper
# ----------------------------------------------------------------------------
@functools.partial(jax.jit, static_argnames=("w_ti", "w_ii", "edge_ratio"))
def lsg_forward(img, label, params, text_features, *,
                w_ti=1.0, w_ii=1.0, edge_ratio=0.25):
    img = img.astype(jnp.float32)
    B, C, H, W = img.shape
    n_classes, n_prompts, D = text_features.shape
    T = n_classes * n_prompts
    N = T + B
    F = params["wc"].shape[-1]            # wc: (3, 3, C, F)
    Hd = params["w1"].shape[1]
    n_out = params["w2"].shape[1]
    HW = H * W
    WP2 = W + 2
    LFLAT = (H + 2) * WP2
    NROWS = (H - 1) * WP2 + W             # rows spanned by every shifted window
    FP = _LANE

    # zero-padded NHWC image, flattened over (row, col): each conv tap becomes
    # one contiguous in-kernel slice (no 9x im2col blow-up in HBM).
    # TODO(synk): at real backbone resolutions / channel counts, tile the
    # padded rows with a halo via an inner emit_pipeline / manual DMA so the
    # per-image slab stays under the VMEM budget (esp. v7x's 64 MiB), and
    # split the batch grid axis across both v7x TensorCores.
    x_pad = jnp.pad(jnp.transpose(img, (0, 2, 3, 1)),
                    ((0, 0), (1, 1), (1, 1), (0, 0)))
    x_flat = x_pad.reshape(B, LFLAT, C)

    # pooling mask (trace-time constant): 1/HW on valid pixels, 0 on the two
    # width-padding columns that leak into the shifted windows.
    ridx = np.arange(NROWS)
    mask = np.where((ridx % WP2) < W, 1.0 / HW, 0.0).astype(np.float32)
    mask = jnp.asarray(mask.reshape(NROWS, 1))

    # ---- lane-pad parameters so every kernel output is a 128-lane slab -----
    wc_tap = params["wc"].reshape(9, C, F)               # (dy*3+dx, c, f)
    wc_p = (jnp.zeros((9, C, FP), jnp.float32).at[:, :, :F].set(wc_tap)
            .astype(jnp.bfloat16))                       # bf16 MXU operand
    bc_p = jnp.zeros((1, FP), jnp.float32).at[0, :F].set(params["bc"])
    wp_p = jnp.zeros((FP, FP), jnp.float32).at[:F, :D].set(params["wp"])
    bp_p = jnp.zeros((1, FP), jnp.float32).at[0, :D].set(params["bp"])
    w1_p = jnp.zeros((FP, FP), jnp.float32).at[:D, :Hd].set(params["w1"])
    w2_p = jnp.zeros((FP, FP), jnp.float32).at[:Hd, :n_out].set(params["w2"])

    # ---- graph constants (trace-time numpy => jit-time constants) ----------
    text_labels = np.repeat(np.arange(n_classes), n_prompts)
    tt = (text_labels[:, None] == text_labels[None, :]).astype(np.float32)
    wblk = np.zeros((N, N), np.float32)
    wblk[:T, :T] = tt                  # text-text: same-class prompt edges
    wblk[:T, T:] = w_ti                # text-image
    wblk[T:, :T] = w_ti                # image-text
    wblk[T:, T:] = w_ii                # image-image
    wblk = jnp.asarray(wblk)

    # ground-truth (label) text<->image edges, kept regardless of threshold
    gt_ti = (jnp.asarray(text_labels)[None, :] == label[:, None]).astype(jnp.float32)
    gt = jnp.zeros((N, N), jnp.float32).at[T:, :T].set(gt_ti).at[:T, T:].set(gt_ti.T)

    text_pad = jnp.zeros((T, FP), jnp.float32).at[:, :D].set(
        text_features.reshape(T, D).astype(jnp.float32))

    # number of off-diagonal edges to keep (static)
    k_keep = max(1, min(N * (N - 1), int(round(edge_ratio * N * (N - 1)))))

    kernel = functools.partial(_lsg_kernel, wp2=WP2, n_rows=NROWS, t_nodes=T,
                               k_keep=k_keep, n_bisect=22)

    cost = pl.CostEstimate(
        flops=(2 * B * NROWS * 9 * C * FP + 2 * B * FP * FP
               + 2 * N * N * FP + 4 * N * FP * FP + 24 * N * N),
        transcendentals=2 * N + 2 * B,
        bytes_accessed=4 * (B * LFLAT * C + 9 * C * FP + 4 * FP * FP
                            + 2 * N * N + (T + 4 * N + 2 * B) * FP))

    f_p, h_p, c_p, g_p = pl.pallas_call(
        kernel,
        out_shape=(jax.ShapeDtypeStruct((B, FP), jnp.float32),   # f (pooled)
                   jax.ShapeDtypeStruct((B, FP), jnp.float32),   # h (projected)
                   jax.ShapeDtypeStruct((N, FP), jnp.float32),   # c (graph out)
                   jax.ShapeDtypeStruct((N, FP), jnp.float32)),  # g (graph emb)
        grid=(B,),
        in_specs=[
            pl.BlockSpec((1, LFLAT, C), lambda b: (b, 0, 0)),    # padded image
            pl.BlockSpec((NROWS, 1), lambda b: (0, 0)),          # pool mask
            pl.BlockSpec((9, C, FP), lambda b: (0, 0, 0)),       # conv taps
            pl.BlockSpec((1, FP), lambda b: (0, 0)),             # conv bias
            pl.BlockSpec((FP, FP), lambda b: (0, 0)),            # proj weight
            pl.BlockSpec((1, FP), lambda b: (0, 0)),             # proj bias
            pl.BlockSpec((T, FP), lambda b: (0, 0)),             # text nodes
            pl.BlockSpec((N, N), lambda b: (0, 0)),              # wblk
            pl.BlockSpec((N, N), lambda b: (0, 0)),              # gt edges
            pl.BlockSpec((FP, FP), lambda b: (0, 0)),            # gcn w1
            pl.BlockSpec((FP, FP), lambda b: (0, 0)),            # gcn w2
        ],
        out_specs=(pl.BlockSpec((B, FP), lambda b: (0, 0)),
                   pl.BlockSpec((B, FP), lambda b: (0, 0)),
                   pl.BlockSpec((N, FP), lambda b: (0, 0)),
                   pl.BlockSpec((N, FP), lambda b: (0, 0))),
        scratch_shapes=[pltpu.VMEM((N, FP), jnp.float32)],       # node table
        compiler_params=pltpu.CompilerParams(
            dimension_semantics=("arbitrary",)),
        cost_estimate=cost,
    )(x_flat, mask, wc_p, bc_p, wp_p, bp_p, text_pad, wblk, gt, w1_p, w2_p)

    # slice off the lane padding (cheap, fused under jit)
    return (c_p[:, :n_out], g_p[:, :Hd], h_p[:, :D], f_p[:, :F])


# ----------------------------------------------------------------------------
# Deterministic setup + run
# ----------------------------------------------------------------------------
if __name__ == "__main__":
    # small shapes consistent with the module
    B, C, H, W = 2, 4, 16, 16
    class_num, n_prompts, D = 4, 2, 32
    F, Hd = 32, 16
    w_ti, w_ii, edge_ratio = 1.0, 1.0, 0.25

    key = jax.random.PRNGKey(0)
    k = jax.random.split(key, 8)

    # TODO(synk): the reference loads pretrained ResNet/GCN checkpoints; here a
    # small 3x3-conv backbone with in-script deterministic parameters stands in.
    params = {
        "wc": 0.1 * jax.random.normal(k[0], (3, 3, C, F), jnp.float32),
        "bc": 0.1 * jax.random.normal(k[1], (F,), jnp.float32),
        "wp": 0.1 * jax.random.normal(k[2], (F, D), jnp.float32),
        "bp": 0.1 * jax.random.normal(k[3], (D,), jnp.float32),
        "w1": 0.1 * jax.random.normal(k[4], (D, Hd), jnp.float32),
        "w2": 0.1 * jax.random.normal(k[5], (Hd, class_num), jnp.float32),
    }
    text_features = jax.random.normal(k[6], (class_num, n_prompts, D), jnp.float32)

    img = jax.random.normal(k[7], (B, C, H, W), jnp.float32)
    label = jnp.array([0, 2], dtype=jnp.int32)

    c, g, h, f = lsg_forward(img, label, params, text_features,
                             w_ti=w_ti, w_ii=w_ii, edge_ratio=edge_ratio)
    jax.block_until_ready((c, g, h, f))

    T = class_num * n_prompts
    assert c.shape == (T + B, class_num)
    assert g.shape == (T + B, Hd)
    assert h.shape == (B, D)
    assert f.shape == (B, F)
    assert bool(jnp.all(jnp.isfinite(c))) and bool(jnp.all(jnp.isfinite(g)))
    assert bool(jnp.all(jnp.isfinite(h))) and bool(jnp.all(jnp.isfinite(f)))
    print("KERNEL_OK")
</pallas_src>

<mosaic_0001>
module attributes {stable_mosaic.version = 11 : i64} {
  func.func @_lsg_kernel(%arg0: i32, %arg1: memref<1x324x4xf32, #tpu.memory_space<vmem>>, %arg2: memref<286x1xf32, #tpu.memory_space<vmem>>, %arg3: memref<9x4x128xbf16, #tpu.memory_space<vmem>>, %arg4: memref<1x128xf32, #tpu.memory_space<vmem>>, %arg5: memref<128x128xf32, #tpu.memory_space<vmem>>, %arg6: memref<1x128xf32, #tpu.memory_space<vmem>>, %arg7: memref<8x128xf32, #tpu.memory_space<vmem>>, %arg8: memref<10x10xf32, #tpu.memory_space<vmem>>, %arg9: memref<10x10xf32, #tpu.memory_space<vmem>>, %arg10: memref<128x128xf32, #tpu.memory_space<vmem>>, %arg11: memref<128x128xf32, #tpu.memory_space<vmem>>, %arg12: memref<2x128xf32, #tpu.memory_space<vmem>>, %arg13: memref<2x128xf32, #tpu.memory_space<vmem>>, %arg14: memref<10x128xf32, #tpu.memory_space<vmem>>, %arg15: memref<10x128xf32, #tpu.memory_space<vmem>>, %arg16: memref<10x128xf32, #tpu.memory_space<vmem>>) attributes {dimension_semantics = [#tpu.dimension_semantics<arbitrary>], iteration_bounds = array<i64: 2>, scalar_prefetch = 0 : i64, scratch_operands = 1 : i64, tpu.core_type = #tpu.core_type<tc>, window_params = [{transform_indices = @transform_0, window_bounds = array<i64: 1, 324, 4>}, {pipeline_mode = #tpu.pipeline_mode<synchronous>, transform_indices = @transform_1, window_bounds = array<i64: 286, 1>}, {pipeline_mode = #tpu.pipeline_mode<synchronous>, transform_indices = @transform_2, window_bounds = array<i64: 9, 4, 128>}, {pipeline_mode = #tpu.pipeline_mode<synchronous>, transform_indices = @transform_3, window_bounds = array<i64: 1, 128>}, {pipeline_mode = #tpu.pipeline_mode<synchronous>, transform_indices = @transform_4, window_bounds = array<i64: 128, 128>}, {pipeline_mode = #tpu.pipeline_mode<synchronous>, transform_indices = @transform_5, window_bounds = array<i64: 1, 128>}, {pipeline_mode = #tpu.pipeline_mode<synchronous>, transform_indices = @transform_6, window_bounds = array<i64: 8, 128>}, {pipeline_mode = #tpu.pipeline_mode<synchronous>, transform_indices = @transform_7, window_bounds = array<i64: 10, 10>}, {pipeline_mode = #tpu.pipeline_mode<synchronous>, transform_indices = @transform_8, window_bounds = array<i64: 10, 10>}, {pipeline_mode = #tpu.pipeline_mode<synchronous>, transform_indices = @transform_9, window_bounds = array<i64: 128, 128>}, {pipeline_mode = #tpu.pipeline_mode<synchronous>, transform_indices = @transform_10, window_bounds = array<i64: 128, 128>}, {pipeline_mode = #tpu.pipeline_mode<synchronous>, transform_indices = @transform_11, window_bounds = array<i64: 2, 128>}, {pipeline_mode = #tpu.pipeline_mode<synchronous>, transform_indices = @transform_12, window_bounds = array<i64: 2, 128>}, {pipeline_mode = #tpu.pipeline_mode<synchronous>, transform_indices = @transform_13, window_bounds = array<i64: 10, 128>}, {pipeline_mode = #tpu.pipeline_mode<synchronous>, transform_indices = @transform_14, window_bounds = array<i64: 10, 128>}]} {
    %c0 = arith.constant 0 : index
    %c0_0 = arith.constant 0 : index
    %c0_1 = arith.constant 0 : index
    %0 = vector.load %arg1[%c0, %c0_0, %c0_1] : memref<1x324x4xf32, #tpu.memory_space<vmem>>, vector<1x324x4xf32>
    %1 = vector.shape_cast %0 : vector<1x324x4xf32> to vector<324x4xf32>
    %2 = vector.extract_strided_slice %1 {offsets = [0, 0], sizes = [286, 4], strides = [1, 1]} : vector<324x4xf32> to vector<286x4xf32>
    %3 = arith.truncf %2 : vector<286x4xf32> to vector<286x4xbf16>
    %c0_2 = arith.constant 0 : index
    %c0_3 = arith.constant 0 : index
    %c0_4 = arith.constant 0 : index
    %4 = vector.load %arg3[%c0_2, %c0_3, %c0_4] : memref<9x4x128xbf16, #tpu.memory_space<vmem>>, vector<1x4x128xbf16>
    %5 = vector.shape_cast %4 : vector<1x4x128xbf16> to vector<4x128xbf16>
    %cst = arith.constant dense<0.000000e+00> : vector<286x128xf32>
    %6 = tpu.matmul %3, %5, %cst {dimension_numbers = #tpu.dot_dimension_numbers<[1], [0], [0], [1], [0, 0, 1, 1], [], []>} : vector<286x4xbf16>, vector<4x128xbf16>, vector<286x128xf32> -> vector<286x128xf32>
    %7 = vector.extract_strided_slice %1 {offsets = [1, 0], sizes = [286, 4], strides = [1, 1]} : vector<324x4xf32> to vector<286x4xf32>
    %8 = arith.truncf %7 : vector<286x4xf32> to vector<286x4xbf16>
    %c1 = arith.constant 1 : index
    %c0_5 = arith.constant 0 : index
    %c0_6 = arith.constant 0 : index
    %9 = vector.load %arg3[%c1, %c0_5, %c0_6] : memref<9x4x128xbf16, #tpu.memory_space<vmem>>, vector<1x4x128xbf16>
    %10 = vector.shape_cast %9 : vector<1x4x128xbf16> to vector<4x128xbf16>
    %cst_7 = arith.constant dense<0.000000e+00> : vector<286x128xf32>
    %11 = tpu.matmul %8, %10, %cst_7 {dimension_numbers = #tpu.dot_dimension_numbers<[1], [0], [0], [1], [0, 0, 1, 1], [], []>} : vector<286x4xbf16>, vector<4x128xbf16>, vector<286x128xf32> -> vector<286x128xf32>
    %12 = arith.addf %6, %11 : vector<286x128xf32>
    %13 = vector.extract_strided_slice %1 {offsets = [2, 0], sizes = [286, 4], strides = [1, 1]} : vector<324x4xf32> to vector<286x4xf32>
    %14 = arith.truncf %13 : vector<286x4xf32> to vector<286x4xbf16>
    %c2 = arith.constant 2 : index
    %c0_8 = arith.constant 0 : index
    %c0_9 = arith.constant 0 : index
    %15 = vector.load %arg3[%c2, %c0_8, %c0_9] : memref<9x4x128xbf16, #tpu.memory_space<vmem>>, vector<1x4x128xbf16>
    %16 = vector.shape_cast %15 : vector<1x4x128xbf16> to vector<4x128xbf16>
    %cst_10 = arith.constant dense<0.000000e+00> : vector<286x128xf32>
    %17 = tpu.matmul %14, %16, %cst_10 {dimension_numbers = #tpu.dot_dimension_numbers<[1], [0], [0], [1], [0, 0, 1, 1], [], []>} : vector<286x4xbf16>, vector<4x128xbf16>, vector<286x128xf32> -> vector<286x128xf32>
    %18 = arith.addf %12, %17 : vector<286x128xf32>
    %19 = vector.extract_strided_slice %1 {offsets = [18, 0], sizes = [286, 4], strides = [1, 1]} : vector<324x4xf32> to vector<286x4xf32>
    %20 = arith.truncf %19 : vector<286x4xf32> to vector<286x4xbf16>
    %c3 = arith.constant 3 : index
    %c0_11 = arith.constant 0 : index
    %c0_12 = arith.constant 0 : index
    %21 = vector.load %arg3[%c3, %c0_11, %c0_12] : memref<9x4x128xbf16, #tpu.memory_space<vmem>>, vector<1x4x128xbf16>
    %22 = vector.shape_cast %21 : vector<1x4x128xbf16> to vector<4x128xbf16>
    %cst_13 = arith.constant dense<0.000000e+00> : vector<286x128xf32>
    %23 = tpu.matmul %20, %22, %cst_13 {dimension_numbers = #tpu.dot_dimension_numbers<[1], [0], [0], [1], [0, 0, 1, 1], [], []>} : vector<286x4xbf16>, vector<4x128xbf16>, vector<286x128xf32> -> vector<286x128xf32>
    %24 = arith.addf %18, %23 : vector<286x128xf32>
    %25 = vector.extract_strided_slice %1 {offsets = [19, 0], sizes = [286, 4], strides = [1, 1]} : vector<324x4xf32> to vector<286x4xf32>
    %26 = arith.truncf %25 : vector<286x4xf32> to vector<286x4xbf16>
    %c4 = arith.constant 4 : index
    %c0_14 = arith.constant 0 : index
    %c0_15 = arith.constant 0 : index
    %27 = vector.load %arg3[%c4, %c0_14, %c0_15] : memref<9x4x128xbf16, #tpu.memory_space<vmem>>, vector<1x4x128xbf16>
    %28 = vector.shape_cast %27 : vector<1x4x128xbf16> to vector<4x128xbf16>
    %cst_16 = arith.constant dense<0.000000e+00> : vector<286x128xf32>
    %29 = tpu.matmul %26, %28, %cst_16 {dimension_numbers = #tpu.dot_dimension_numbers<[1], [0], [0], [1], [0, 0, 1, 1], [], []>} : vector<286x4xbf16>, vector<4x128xbf16>, vector<286x128xf32> -> vector<286x128xf32>
    %30 = arith.addf %24, %29 : vector<286x128xf32>
    %31 = vector.extract_strided_slice %1 {offsets = [20, 0], sizes = [286, 4], strides = [1, 1]} : vector<324x4xf32> to vector<286x4xf32>
    %32 = arith.truncf %31 : vector<286x4xf32> to vector<286x4xbf16>
    %c5 = arith.constant 5 : index
    %c0_17 = arith.constant 0 : index
    %c0_18 = arith.constant 0 : index
    %33 = vector.load %arg3[%c5, %c0_17, %c0_18] : memref<9x4x128xbf16, #tpu.memory_space<vmem>>, vector<1x4x128xbf16>
    %34 = vector.shape_cast %33 : vector<1x4x128xbf16> to vector<4x128xbf16>
    %cst_19 = arith.constant dense<0.000000e+00> : vector<286x128xf32>
    %35 = tpu.matmul %32, %34, %cst_19 {dimension_numbers = #tpu.dot_dimension_numbers<[1], [0], [0], [1], [0, 0, 1, 1], [], []>} : vector<286x4xbf16>, vector<4x128xbf16>, vector<286x128xf32> -> vector<286x128xf32>
    %36 = arith.addf %30, %35 : vector<286x128xf32>
    %37 = vector.extract_strided_slice %1 {offsets = [36, 0], sizes = [286, 4], strides = [1, 1]} : vector<324x4xf32> to vector<286x4xf32>
    %38 = arith.truncf %37 : vector<286x4xf32> to vector<286x4xbf16>
    %c6 = arith.constant 6 : index
    %c0_20 = arith.constant 0 : index
    %c0_21 = arith.constant 0 : index
    %39 = vector.load %arg3[%c6, %c0_20, %c0_21] : memref<9x4x128xbf16, #tpu.memory_space<vmem>>, vector<1x4x128xbf16>
    %40 = vector.shape_cast %39 : vector<1x4x128xbf16> to vector<4x128xbf16>
    %cst_22 = arith.constant dense<0.000000e+00> : vector<286x128xf32>
    %41 = tpu.matmul %38, %40, %cst_22 {dimension_numbers = #tpu.dot_dimension_numbers<[1], [0], [0], [1], [0, 0, 1, 1], [], []>} : vector<286x4xbf16>, vector<4x128xbf16>, vector<286x128xf32> -> vector<286x128xf32>
    %42 = arith.addf %36, %41 : vector<286x128xf32>
    %43 = vector.extract_strided_slice %1 {offsets = [37, 0], sizes = [286, 4], strides = [1, 1]} : vector<324x4xf32> to vector<286x4xf32>
    %44 = arith.truncf %43 : vector<286x4xf32> to vector<286x4xbf16>
    %c7 = arith.constant 7 : index
    %c0_23 = arith.constant 0 : index
    %c0_24 = arith.constant 0 : index
    %45 = vector.load %arg3[%c7, %c0_23, %c0_24] : memref<9x4x128xbf16, #tpu.memory_space<vmem>>, vector<1x4x128xbf16>
    %46 = vector.shape_cast %45 : vector<1x4x128xbf16> to vector<4x128xbf16>
    %cst_25 = arith.constant dense<0.000000e+00> : vector<286x128xf32>
    %47 = tpu.matmul %44, %46, %cst_25 {dimension_numbers = #tpu.dot_dimension_numbers<[1], [0], [0], [1], [0, 0, 1, 1], [], []>} : vector<286x4xbf16>, vector<4x128xbf16>, vector<286x128xf32> -> vector<286x128xf32>
    %48 = arith.addf %42, %47 : vector<286x128xf32>
    %49 = vector.extract_strided_slice %1 {offsets = [38, 0], sizes = [286, 4], strides = [1, 1]} : vector<324x4xf32> to vector<286x4xf32>
    %50 = arith.truncf %49 : vector<286x4xf32> to vector<286x4xbf16>
    %c8 = arith.constant 8 : index
    %c0_26 = arith.constant 0 : index
    %c0_27 = arith.constant 0 : index
    %51 = vector.load %arg3[%c8, %c0_26, %c0_27] : memref<9x4x128xbf16, #tpu.memory_space<vmem>>, vector<1x4x128xbf16>
    %52 = vector.shape_cast %51 : vector<1x4x128xbf16> to vector<4x128xbf16>
    %cst_28 = arith.constant dense<0.000000e+00> : vector<286x128xf32>
    %53 = tpu.matmul %50, %52, %cst_28 {dimension_numbers = #tpu.dot_dimension_numbers<[1], [0], [0], [1], [0, 0, 1, 1], [], []>} : vector<286x4xbf16>, vector<4x128xbf16>, vector<286x128xf32> -> vector<286x128xf32>
    %54 = arith.addf %48, %53 : vector<286x128xf32>
    %c0_29 = arith.constant 0 : index
    %c0_30 = arith.constant 0 : index
    %55 = vector.load %arg4[%c0_29, %c0_30] : memref<1x128xf32, #tpu.memory_space<vmem>>, vector<1x128xf32>
    %56 = vector.broadcast %55 : vector<1x128xf32> to vector<286x128xf32>
    %57 = arith.addf %54, %56 : vector<286x128xf32>
    %cst_31 = arith.constant 0.000000e+00 : f32
    %58 = vector.broadcast %cst_31 : f32 to vector<286x128xf32>
    %59 = arith.maximumf %57, %58 : vector<286x128xf32>
    %c0_32 = arith.constant 0 : index
    %c0_33 = arith.constant 0 : index
    %60 = vector.load %arg2[%c0_32, %c0_33] : memref<286x1xf32, #tpu.memory_space<vmem>>, vector<286x1xf32>
    %61 = vector.broadcast %60 : vector<286x1xf32> to vector<286x128xf32>
    %62 = arith.mulf %59, %61 : vector<286x128xf32>
    %cst_34 = arith.constant dense<0.000000e+00> : vector<128xf32>
    %63 = vector.multi_reduction <add>, %62, %cst_34 [0] : vector<286x128xf32> to vector<128xf32>
    %64 = vector.shape_cast %63 : vector<128xf32> to vector<1x128xf32>
    %65 = arith.index_cast %arg0 : i32 to index
    %c0_35 = arith.constant 0 : index
    %66 = vector.load %arg12[%65, %c0_35] : memref<2x128xf32, #tpu.memory_space<vmem>>, vector<1x128xf32>
    tpu.vector_store %arg12[%65, %c0_35], %64 {strides = array<i32>} : memref<2x128xf32, #tpu.memory_space<vmem>>, vector<1x128xf32>,
    %c0_36 = arith.constant 0 : index
    %c0_37 = arith.constant 0 : index
    %67 = vector.load %arg5[%c0_36, %c0_37] : memref<128x128xf32, #tpu.memory_space<vmem>>, vector<128x128xf32>
    %cst_38 = arith.constant dense<0.000000e+00> : vector<1x128xf32>
    %68 = tpu.matmul %64, %67, %cst_38 {dimension_numbers = #tpu.dot_dimension_numbers<[1], [0], [0], [1], [0, 0, 1, 1], [], []>} : vector<1x128xf32>, vector<128x128xf32>, vector<1x128xf32> -> vector<1x128xf32>
    %c0_39 = arith.constant 0 : index
    %c0_40 = arith.constant 0 : index
    %69 = vector.load %arg6[%c0_39, %c0_40] : memref<1x128xf32, #tpu.memory_space<vmem>>, vector<1x128xf32>
    %70 = arith.addf %68, %69 : vector<1x128xf32>
    %71 = arith.mulf %70, %70 : vector<1x128xf32>
    %cst_41 = arith.constant dense<0.000000e+00> : vector<1xf32>
    %72 = vector.multi_reduction <add>, %71, %cst_41 [1] : vector<1x128xf32> to vector<1xf32>
    %73 = vector.shape_cast %72 : vector<1xf32> to vector<1x1xf32>
    %cst_42 = arith.constant 9.99999996E-13 : f32
    %74 = vector.broadcast %cst_42 : f32 to vector<1x1xf32>
    %75 = arith.addf %73, %74 : vector<1x1xf32>
    %76 = math.rsqrt %75 : vector<1x1xf32>
    %77 = vector.broadcast %76 : vector<1x1xf32> to vector<1x128xf32>
    %78 = arith.mulf %70, %77 : vector<1x128xf32>
    %79 = arith.index_cast %arg0 : i32 to index
    %c0_43 = arith.constant 0 : index
    %80 = vector.load %arg13[%79, %c0_43] : memref<2x128xf32, #tpu.memory_space<vmem>>, vector<1x128xf32>
    tpu.vector_store %arg13[%79, %c0_43], %78 {strides = array<i32>} : memref<2x128xf32, #tpu.memory_space<vmem>>, vector<1x128xf32>,
    %c0_i32 = arith.constant 0 : i32
    %81 = arith.cmpi eq, %arg0, %c0_i32 : i32
    %82 = arith.extui %81 : i1 to i32
    %c0_i32_44 = arith.constant 0 : i32
    %83 = arith.cmpi ne, %82, %c0_i32_44 : i32
    scf.if %83 {
      %c0_47 = arith.constant 0 : index
      %c0_48 = arith.constant 0 : index
      %90 = vector.load %arg7[%c0_47, %c0_48] : memref<8x128xf32, #tpu.memory_space<vmem>>, vector<8x128xf32>
      %c0_49 = arith.constant 0 : index
      %c0_50 = arith.constant 0 : index
      %91 = vector.load %arg16[%c0_49, %c0_50] : memref<10x128xf32, #tpu.memory_space<vmem>>, vector<8x128xf32>
      tpu.vector_store %arg16[%c0_49, %c0_50], %90 {strides = array<i32>} : memref<10x128xf32, #tpu.memory_space<vmem>>, vector<8x128xf32>,
    } else {
    }
    %c8_i32 = arith.constant 8 : i32
    %84 = arith.addi %c8_i32, %arg0 : i32
    %85 = arith.index_cast %84 : i32 to index
    %c0_45 = arith.constant 0 : index
    %86 = vector.load %arg16[%85, %c0_45] : memref<10x128xf32, #tpu.memory_space<vmem>>, vector<1x128xf32>
    tpu.vector_store %arg16[%85, %c0_45], %78 {strides = array<i32>} : memref<10x128xf32, #tpu.memory_space<vmem>>, vector<1x128xf32>,
    %c1_i32 = arith.constant 1 : i32
    %87 = arith.cmpi eq, %arg0, %c1_i32 : i32
    %88 = arith.extui %87 : i1 to i32
    %c0_i32_46 = arith.constant 0 : i32
    %89 = arith.cmpi ne, %88, %c0_i32_46 : i32
    scf.if %89 {
      %c0_47 = arith.constant 0 : index
      %c0_48 = arith.constant 0 : index
      %90 = vector.load %arg16[%c0_47, %c0_48] : memref<10x128xf32, #tpu.memory_space<vmem>>, vector<10x128xf32>
      %91 = arith.mulf %90, %90 : vector<10x128xf32>
      %cst_49 = arith.constant dense<0.000000e+00> : vector<10xf32>
      %92 = vector.multi_reduction <add>, %91, %cst_49 [1] : vector<10x128xf32> to vector<10xf32>
      %93 = vector.shape_cast %92 : vector<10xf32> to vector<10x1xf32>
      %cst_50 = arith.constant 9.99999996E-13 : f32
      %94 = vector.broadcast %cst_50 : f32 to vector<10x1xf32>
      %95 = arith.addf %93, %94 : vector<10x1xf32>
      %96 = math.rsqrt %95 : vector<10x1xf32>
      %97 = vector.broadcast %96 : vector<10x1xf32> to vector<10x128xf32>
      %98 = arith.mulf %90, %97 : vector<10x128xf32>
      %cst_51 = arith.constant dense<0.000000e+00> : vector<10x10xf32>
      %99 = tpu.matmul %98, %98, %cst_51 {dimension_numbers = #tpu.dot_dimension_numbers<[1], [1], [0], [0], [0, 0, 1, 0], [], []>} : vector<10x128xf32>, vector<10x128xf32>, vector<10x10xf32> -> vector<10x10xf32>
      %c0_52 = arith.constant 0 : index
      %c0_53 = arith.constant 0 : index
      %100 = vector.load %arg8[%c0_52, %c0_53] : memref<10x10xf32, #tpu.memory_space<vmem>>, vector<10x10xf32>
      %101 = arith.mulf %99, %100 : vector<10x10xf32>
      %102 = tpu.iota {dimensions = array<i32: 0>} : vector<10x10xi32>
      %103 = tpu.iota {dimensions = array<i32: 1>} : vector<10x10xi32>
      %104 = arith.cmpi ne, %102, %103 : vector<10x10xi32>
      %cst_54 = arith.constant dense<0x7F800000> : vector<10xf32>
      %105 = vector.multi_reduction <minimumf>, %101, %cst_54 [1] : vector<10x10xf32> to vector<10xf32>
      %106 = vector.shape_cast %105 : vector<10xf32> to vector<10x1xf32>
      %cst_55 = arith.constant dense<0x7F800000> : vector<1xf32>
      %107 = vector.multi_reduction <minimumf>, %106, %cst_55 [0] : vector<10x1xf32> to vector<1xf32>
      %108 = vector.shape_cast %107 : vector<1xf32> to vector<1x1xf32>
      %cst_56 = arith.constant 1.000000e+00 : f32
      %109 = vector.broadcast %cst_56 : f32 to vector<1x1xf32>
      %110 = arith.subf %108, %109 : vector<1x1xf32>
      %cst_57 = arith.constant dense<0xFF800000> : vector<10xf32>
      %111 = vector.multi_reduction <maximumf>, %101, %cst_57 [1] : vector<10x10xf32> to vector<10xf32>
      %112 = vector.shape_cast %111 : vector<10xf32> to vector<10x1xf32>
      %cst_58 = arith.constant dense<0xFF800000> : vector<1xf32>
      %113 = vector.multi_reduction <maximumf>, %112, %cst_58 [0] : vector<10x1xf32> to vector<1xf32>
      %114 = vector.shape_cast %113 : vector<1xf32> to vector<1x1xf32>
      %115 = vector.shape_cast %110 : vector<1x1xf32> to vector<1x1xf32>
      %116 = vector.broadcast %115 : vector<1x1xf32> to vector<10x10xf32>
      %117 = arith.select %104, %101, %116 : vector<10x10xi1>, vector<10x10xf32>
      %118 = arith.addf %110, %114 : vector<1x1xf32>
      %cst_59 = arith.constant 5.000000e-01 : f32
      %119 = vector.broadcast %cst_59 : f32 to vector<1x1xf32>
      %120 = arith.mulf %119, %118 : vector<1x1xf32>
      %121 = vector.broadcast %120 : vector<1x1xf32> to vector<10x10xf32>
      %122 = arith.cmpf ogt, %117, %121 : vector<10x10xf32>
      %123 = arith.extui %122 : vector<10x10xi1> to vector<10x10xi32>
      %124 = arith.sitofp %123 : vector<10x10xi32> to vector<10x10xf32>
      %cst_60 = arith.constant dense<0.000000e+00> : vector<10xf32>
      %125 = vector.multi_reduction <add>, %124, %cst_60 [1] : vector<10x10xf32> to vector<10xf32>
      %126 = vector.shape_cast %125 : vector<10xf32> to vector<10x1xf32>
      %cst_61 = arith.constant dense<0.000000e+00> : vector<1xf32>
      %127 = vector.multi_reduction <add>, %126, %cst_61 [0] : vector<10x1xf32> to vector<1xf32>
      %128 = vector.shape_cast %127 : vector<1xf32> to vector<1x1xf32>
      %cst_62 = arith.constant 2.200000e+01 : f32
      %129 = vector.broadcast %cst_62 : f32 to vector<1x1xf32>
      %130 = arith.cmpf oge, %128, %129 : vector<1x1xf32>
      %131 = arith.select %130, %120, %110 : vector<1x1xi1>, vector<1x1xf32>
      %132 = arith.select %130, %114, %120 : vector<1x1xi1>, vector<1x1xf32>
      %133 = arith.addf %131, %132 : vector<1x1xf32>
      %cst_63 = arith.constant 5.000000e-01 : f32
      %134 = vector.broadcast %cst_63 : f32 to vector<1x1xf32>
      %135 = arith.mulf %134, %133 : vector<1x1xf32>
      %136 = vector.broadcast %135 : vector<1x1xf32> to vector<10x10xf32>
      %137 = arith.cmpf ogt, %117, %136 : vector<10x10xf32>
      %138 = arith.extui %137 : vector<10x10xi1> to vector<10x10xi32>
      %139 = arith.sitofp %138 : vector<10x10xi32> to vector<10x10xf32>
      %cst_64 = arith.constant dense<0.000000e+00> : vector<10xf32>
      %140 = vector.multi_reduction <add>, %139, %cst_64 [1] : vector<10x10xf32> to vector<10xf32>
      %141 = vector.shape_cast %140 : vector<10xf32> to vector<10x1xf32>
      %cst_65 = arith.constant dense<0.000000e+00> : vector<1xf32>
      %142 = vector.multi_reduction <add>, %141, %cst_65 [0] : vector<10x1xf32> to vector<1xf32>
      %143 = vector.shape_cast %142 : vector<1xf32> to vector<1x1xf32>
      %cst_66 = arith.constant 2.200000e+01 : f32
      %144 = vector.broadcast %cst_66 : f32 to vector<1x1xf32>
      %145 = arith.cmpf oge, %143, %144 : vector<1x1xf32>
      %146 = arith.select %145, %135, %131 : vector<1x1xi1>, vector<1x1xf32>
      %147 = arith.select %145, %132, %135 : vector<1x1xi1>, vector<1x1xf32>
      %148 = arith.addf %146, %147 : vector<1x1xf32>
      %cst_67 = arith.constant 5.000000e-01 : f32
      %149 = vector.broadcast %cst_67 : f32 to vector<1x1xf32>
      %150 = arith.mulf %149, %148 : vector<1x1xf32>
      %151 = vector.broadcast %150 : vector<1x1xf32> to vector<10x10xf32>
      %152 = arith.cmpf ogt, %117, %151 : vector<10x10xf32>
      %153 = arith.extui %152 : vector<10x10xi1> to vector<10x10xi32>
      %154 = arith.sitofp %153 : vector<10x10xi32> to vector<10x10xf32>
      %cst_68 = arith.constant dense<0.000000e+00> : vector<10xf32>
      %155 = vector.multi_reduction <add>, %154, %cst_68 [1] : vector<10x10xf32> to vector<10xf32>
      %156 = vector.shape_cast %155 : vector<10xf32> to vector<10x1xf32>
      %cst_69 = arith.constant dense<0.000000e+00> : vector<1xf32>
      %157 = vector.multi_reduction <add>, %156, %cst_69 [0] : vector<10x1xf32> to vector<1xf32>
      %158 = vector.shape_cast %157 : vector<1xf32> to vector<1x1xf32>
      %cst_70 = arith.constant 2.200000e+01 : f32
      %159 = vector.broadcast %cst_70 : f32 to vector<1x1xf32>
      %160 = arith.cmpf oge, %158, %159 : vector<1x1xf32>
      %161 = arith.select %160, %150, %146 : vector<1x1xi1>, vector<1x1xf32>
      %162 = arith.select %160, %147, %150 : vector<1x1xi1>, vector<1x1xf32>
      %163 = arith.addf %161, %162 : vector<1x1xf32>
      %cst_71 = arith.constant 5.000000e-01 : f32
      %164 = vector.broadcast %cst_71 : f32 to vector<1x1xf32>
      %165 = arith.mulf %164, %163 : vector<1x1xf32>
      %166 = vector.broadcast %165 : vector<1x1xf32> to vector<10x10xf32>
      %167 = arith.cmpf ogt, %117, %166 : vector<10x10xf32>
      %168 = arith.extui %167 : vector<10x10xi1> to vector<10x10xi32>
      %169 = arith.sitofp %168 : vector<10x10xi32> to vector<10x10xf32>
      %cst_72 = arith.constant dense<0.000000e+00> : vector<10xf32>
      %170 = vector.multi_reduction <add>, %169, %cst_72 [1] : vector<10x10xf32> to vector<10xf32>
      %171 = vector.shape_cast %170 : vector<10xf32> to vector<10x1xf32>
      %cst_73 = arith.constant dense<0.000000e+00> : vector<1xf32>
      %172 = vector.multi_reduction <add>, %171, %cst_73 [0] : vector<10x1xf32> to vector<1xf32>
      %173 = vector.shape_cast %172 : vector<1xf32> to vector<1x1xf32>
      %cst_74 = arith.constant 2.200000e+01 : f32
      %174 = vector.broadcast %cst_74 : f32 to vector<1x1xf32>
      %175 = arith.cmpf oge, %173, %174 : vector<1x1xf32>
      %176 = arith.select %175, %165, %161 : vector<1x1xi1>, vector<1x1xf32>
      %177 = arith.select %175, %162, %165 : vector<1x1xi1>, vector<1x1xf32>
      %178 = arith.addf %176, %177 : vector<1x1xf32>
      %cst_75 = arith.constant 5.000000e-01 : f32
      %179 = vector.broadcast %cst_75 : f32 to vector<1x1xf32>
      %180 = arith.mulf %179, %178 : vector<1x1xf32>
      %181 = vector.broadcast %180 : vector<1x1xf32> to vector<10x10xf32>
      %182 = arith.cmpf ogt, %117, %181 : vector<10x10xf32>
      %183 = arith.extui %182 : vector<10x10xi1> to vector<10x10xi32>
      %184 = arith.sitofp %183 : vector<10x10xi32> to vector<10x10xf32>
      %cst_76 = arith.constant dense<0.000000e+00> : vector<10xf32>
      %185 = vector.multi_reduction <add>, %184, %cst_76 [1] : vector<10x10xf32> to vector<10xf32>
      %186 = vector.shape_cast %185 : vector<10xf32> to vector<10x1xf32>
      %cst_77 = arith.constant dense<0.000000e+00> : vector<1xf32>
      %187 = vector.multi_reduction <add>, %186, %cst_77 [0] : vector<10x1xf32> to vector<1xf32>
      %188 = vector.shape_cast %187 : vector<1xf32> to vector<1x1xf32>
      %cst_78 = arith.constant 2.200000e+01 : f32
      %189 = vector.broadcast %cst_78 : f32 to vector<1x1xf32>
      %190 = arith.cmpf oge, %188, %189 : vector<1x1xf32>
      %191 = arith.select %190, %180, %176 : vector<1x1xi1>, vector<1x1xf32>
      %192 = arith.select %190, %177, %180 : vector<1x1xi1>, vector<1x1xf32>
      %193 = arith.addf %191, %192 : vector<1x1xf32>
      %cst_79 = arith.constant 5.000000e-01 : f32
      %194 = vector.broadcast %cst_79 : f32 to vector<1x1xf32>
      %195 = arith.mulf %194, %193 : vector<1x1xf32>
      %196 = vector.broadcast %195 : vector<1x1xf32> to vector<10x10xf32>
      %197 = arith.cmpf ogt, %117, %196 : vector<10x10xf32>
      %198 = arith.extui %197 : vector<10x10xi1> to vector<10x10xi32>
      %199 = arith.sitofp %198 : vector<10x10xi32> to vector<10x10xf32>
      %cst_80 = arith.constant dense<0.000000e+00> : vector<10xf32>
      %200 = vector.multi_reduction <add>, %199, %cst_80 [1] : vector<10x10xf32> to vector<10xf32>
      %201 = vector.shape_cast %200 : vector<10xf32> to vector<10x1xf32>
      %cst_81 = arith.constant dense<0.000000e+00> : vector<1xf32>
      %202 = vector.multi_reduction <add>, %201, %cst_81 [0] : vector<10x1xf32> to vector<1xf32>
      %203 = vector.shape_cast %202 : vector<1xf32> to vector<1x1xf32>
      %cst_82 = arith.constant 2.200000e+01 : f32
      %204 = vector.broadcast %cst_82 : f32 to vector<1x1xf32>
      %205 = arith.cmpf oge, %203, %204 : vector<1x1xf32>
      %206 = arith.select %205, %195, %191 : vector<1x1xi1>, vector<1x1xf32>
      %207 = arith.select %205, %192, %195 : vector<1x1xi1>, vector<1x1xf32>
      %208 = arith.addf %206, %207 : vector<1x1xf32>
      %cst_83 = arith.constant 5.000000e-01 : f32
      %209 = vector.broadcast %cst_83 : f32 to vector<1x1xf32>
      %210 = arith.mulf %209, %208 : vector<1x1xf32>
      %211 = vector.broadcast %210 : vector<1x1xf32> to vector<10x10xf32>
      %212 = arith.cmpf ogt, %117, %211 : vector<10x10xf32>
      %213 = arith.extui %212 : vector<10x10xi1> to vector<10x10xi32>
      %214 = arith.sitofp %213 : vector<10x10xi32> to vector<10x10xf32>
      %cst_84 = arith.constant dense<0.000000e+00> : vector<10xf32>
      %215 = vector.multi_reduction <add>, %214, %cst_84 [1] : vector<10x10xf32> to vector<10xf32>
      %216 = vector.shape_cast %215 : vector<10xf32> to vector<10x1xf32>
      %cst_85 = arith.constant dense<0.000000e+00> : vector<1xf32>
      %217 = vector.multi_reduction <add>, %216, %cst_85 [0] : vector<10x1xf32> to vector<1xf32>
      %218 = vector.shape_cast %217 : vector<1xf32> to vector<1x1xf32>
      %cst_86 = arith.constant 2.200000e+01 : f32
      %219 = vector.broadcast %cst_86 : f32 to vector<1x1xf32>
      %220 = arith.cmpf oge, %218, %219 : vector<1x1xf32>
      %221 = arith.select %220, %210, %206 : vector<1x1xi1>, vector<1x1xf32>
      %222 = arith.select %220, %207, %210 : vector<1x1xi1>, vector<1x1xf32>
      %223 = arith.addf %221, %222 : vector<1x1xf32>
      %cst_87 = arith.constant 5.000000e-01 : f32
      %224 = vector.broadcast %cst_87 : f32 to vector<1x1xf32>
      %225 = arith.mulf %224, %223 : vector<1x1xf32>
      %226 = vector.broadcast %225 : vector<1x1xf32> to vector<10x10xf32>
      %227 = arith.cmpf ogt, %117, %226 : vector<10x10xf32>
      %228 = arith.extui %227 : vector<10x10xi1> to vector<10x10xi32>
      %229 = arith.sitofp %228 : vector<10x10xi32> to vector<10x10xf32>
      %cst_88 = arith.constant dense<0.000000e+00> : vector<10xf32>
      %230 = vector.multi_reduction <add>, %229, %cst_88 [1] : vector<10x10xf32> to vector<10xf32>
      %231 = vector.shape_cast %230 : vector<10xf32> to vector<10x1xf32>
      %cst_89 = arith.constant dense<0.000000e+00> : vector<1xf32>
      %232 = vector.multi_reduction <add>, %231, %cst_89 [0] : vector<10x1xf32> to vector<1xf32>
      %233 = vector.shape_cast %232 : vector<1xf32> to vector<1x1xf32>
      %cst_90 = arith.constant 2.200000e+01 : f32
      %234 = vector.broadcast %cst_90 : f32 to vector<1x1xf32>
      %235 = arith.cmpf oge, %233, %234 : vector<1x1xf32>
      %236 = arith.select %235, %225, %221 : vector<1x1xi1>, vector<1x1xf32>
      %237 = arith.select %235, %222, %225 : vector<1x1xi1>, vector<1x1xf32>
      %238 = arith.addf %236, %237 : vector<1x1xf32>
      %cst_91 = arith.constant 5.000000e-01 : f32
      %239 = vector.broadcast %cst_91 : f32 to vector<1x1xf32>
      %240 = arith.mulf %239, %238 : vector<1x1xf32>
      %241 = vector.broadcast %240 : vector<1x1xf32> to vector<10x10xf32>
      %242 = arith.cmpf ogt, %117, %241 : vector<10x10xf32>
      %243 = arith.extui %242 : vector<10x10xi1> to vector<10x10xi32>
      %244 = arith.sitofp %243 : vector<10x10xi32> to vector<10x10xf32>
      %cst_92 = arith.constant dense<0.000000e+00> : vector<10xf32>
      %245 = vector.multi_reduction <add>, %244, %cst_92 [1] : vector<10x10xf32> to vector<10xf32>
      %246 = vector.shape_cast %245 : vector<10xf32> to vector<10x1xf32>
      %cst_93 = arith.constant dense<0.000000e+00> : vector<1xf32>
      %247 = vector.multi_reduction <add>, %246, %cst_93 [0] : vector<10x1xf32> to vector<1xf32>
      %248 = vector.shape_cast %247 : vector<1xf32> to vector<1x1xf32>
      %cst_94 = arith.constant 2.200000e+01 : f32
      %249 = vector.broadcast %cst_94 : f32 to vector<1x1xf32>
      %250 = arith.cmpf oge, %248, %249 : vector<1x1xf32>
      %251 = arith.select %250, %240, %236 : vector<1x1xi1>, vector<1x1xf32>
      %252 = arith.select %250, %237, %240 : vector<1x1xi1>, vector<1x1xf32>
      %253 = arith.addf %251, %252 : vector<1x1xf32>
      %cst_95 = arith.constant 5.000000e-01 : f32
      %254 = vector.broadcast %cst_95 : f32 to vector<1x1xf32>
      %255 = arith.mulf %254, %253 : vector<1x1xf32>
      %256 = vector.broadcast %255 : vector<1x1xf32> to vector<10x10xf32>
      %257 = arith.cmpf ogt, %117, %256 : vector<10x10xf32>
      %258 = arith.extui %257 : vector<10x10xi1> to vector<10x10xi32>
      %259 = arith.sitofp %258 : vector<10x10xi32> to vector<10x10xf32>
      %cst_96 = arith.constant dense<0.000000e+00> : vector<10xf32>
      %260 = vector.multi_reduction <add>, %259, %cst_96 [1] : vector<10x10xf32> to vector<10xf32>
      %261 = vector.shape_cast %260 : vector<10xf32> to vector<10x1xf32>
      %cst_97 = arith.constant dense<0.000000e+00> : vector<1xf32>
      %262 = vector.multi_reduction <add>, %261, %cst_97 [0] : vector<10x1xf32> to vector<1xf32>
      %263 = vector.shape_cast %262 : vector<1xf32> to vector<1x1xf32>
      %cst_98 = arith.constant 2.200000e+01 : f32
      %264 = vector.broadcast %cst_98 : f32 to vector<1x1xf32>
      %265 = arith.cmpf oge, %263, %264 : vector<1x1xf32>
      %266 = arith.select %265, %255, %251 : vector<1x1xi1>, vector<1x1xf32>
      %267 = arith.select %265, %252, %255 : vector<1x1xi1>, vector<1x1xf32>
      %268 = arith.addf %266, %267 : vector<1x1xf32>
      %cst_99 = arith.constant 5.000000e-01 : f32
      %269 = vector.broadcast %cst_99 : f32 to vector<1x1xf32>
      %270 = arith.mulf %269, %268 : vector<1x1xf32>
      %271 = vector.broadcast %270 : vector<1x1xf32> to vector<10x10xf32>
      %272 = arith.cmpf ogt, %117, %271 : vector<10x10xf32>
      %273 = arith.extui %272 : vector<10x10xi1> to vector<10x10xi32>
      %274 = arith.sitofp %273 : vector<10x10xi32> to vector<10x10xf32>
      %cst_100 = arith.constant dense<0.000000e+00> : vector<10xf32>
      %275 = vector.multi_reduction <add>, %274, %cst_100 [1] : vector<10x10xf32> to vector<10xf32>
      %276 = vector.shape_cast %275 : vector<10xf32> to vector<10x1xf32>
      %cst_101 = arith.constant dense<0.000000e+00> : vector<1xf32>
      %277 = vector.multi_reduction <add>, %276, %cst_101 [0] : vector<10x1xf32> to vector<1xf32>
      %278 = vector.shape_cast %277 : vector<1xf32> to vector<1x1xf32>
      %cst_102 = arith.constant 2.200000e+01 : f32
      %279 = vector.broadcast %cst_102 : f32 to vector<1x1xf32>
      %280 = arith.cmpf oge, %278, %279 : vector<1x1xf32>
      %281 = arith.select %280, %270, %266 : vector<1x1xi1>, vector<1x1xf32>
      %282 = arith.select %280, %267, %270 : vector<1x1xi1>, vector<1x1xf32>
      %283 = arith.addf %281, %282 : vector<1x1xf32>
      %cst_103 = arith.constant 5.000000e-01 : f32
      %284 = vector.broadcast %cst_103 : f32 to vector<1x1xf32>
      %285 = arith.mulf %284, %283 : vector<1x1xf32>
      %286 = vector.broadcast %285 : vector<1x1xf32> to vector<10x10xf32>
      %287 = arith.cmpf ogt, %117, %286 : vector<10x10xf32>
      %288 = arith.extui %287 : vector<10x10xi1> to vector<10x10xi32>
      %289 = arith.sitofp %288 : vector<10x10xi32> to vector<10x10xf32>
      %cst_104 = arith.constant dense<0.000000e+00> : vector<10xf32>
      %290 = vector.multi_reduction <add>, %289, %cst_104 [1] : vector<10x10xf32> to vector<10xf32>
      %291 = vector.shape_cast %290 : vector<10xf32> to vector<10x1xf32>
      %cst_105 = arith.constant dense<0.000000e+00> : vector<1xf32>
      %292 = vector.multi_reduction <add>, %291, %cst_105 [0] : vector<10x1xf32> to vector<1xf32>
      %293 = vector.shape_cast %292 : vector<1xf32> to vector<1x1xf32>
      %cst_106 = arith.constant 2.200000e+01 : f32
      %294 = vector.broadcast %cst_106 : f32 to vector<1x1xf32>
      %295 = arith.cmpf oge, %293, %294 : vector<1x1xf32>
      %296 = arith.select %295, %285, %281 : vector<1x1xi1>, vector<1x1xf32>
      %297 = arith.select %295, %282, %285 : vector<1x1xi1>, vector<1x1xf32>
      %298 = arith.addf %296, %297 : vector<1x1xf32>
      %cst_107 = arith.constant 5.000000e-01 : f32
      %299 = vector.broadcast %cst_107 : f32 to vector<1x1xf32>
      %300 = arith.mulf %299, %298 : vector<1x1xf32>
      %301 = vector.broadcast %300 : vector<1x1xf32> to vector<10x10xf32>
      %302 = arith.cmpf ogt, %117, %301 : vector<10x10xf32>
      %303 = arith.extui %302 : vector<10x10xi1> to vector<10x10xi32>
      %304 = arith.sitofp %303 : vector<10x10xi32> to vector<10x10xf32>
      %cst_108 = arith.constant dense<0.000000e+00> : vector<10xf32>
      %305 = vector.multi_reduction <add>, %304, %cst_108 [1] : vector<10x10xf32> to vector<10xf32>
      %306 = vector.shape_cast %305 : vector<10xf32> to vector<10x1xf32>
      %cst_109 = arith.constant dense<0.000000e+00> : vector<1xf32>
      %307 = vector.multi_reduction <add>, %306, %cst_109 [0] : vector<10x1xf32> to vector<1xf32>
      %308 = vector.shape_cast %307 : vector<1xf32> to vector<1x1xf32>
      %cst_110 = arith.constant 2.200000e+01 : f32
      %309 = vector.broadcast %cst_110 : f32 to vector<1x1xf32>
      %310 = arith.cmpf oge, %308, %309 : vector<1x1xf32>
      %311 = arith.select %310, %300, %296 : vector<1x1xi1>, vector<1x1xf32>
      %312 = arith.select %310, %297, %300 : vector<1x1xi1>, vector<1x1xf32>
      %313 = arith.addf %311, %312 : vector<1x1xf32>
      %cst_111 = arith.constant 5.000000e-01 : f32
      %314 = vector.broadcast %cst_111 : f32 to vector<1x1xf32>
      %315 = arith.mulf %314, %313 : vector<1x1xf32>
      %316 = vector.broadcast %315 : vector<1x1xf32> to vector<10x10xf32>
      %317 = arith.cmpf ogt, %117, %316 : vector<10x10xf32>
      %318 = arith.extui %317 : vector<10x10xi1> to vector<10x10xi32>
      %319 = arith.sitofp %318 : vector<10x10xi32> to vector<10x10xf32>
      %cst_112 = arith.constant dense<0.000000e+00> : vector<10xf32>
      %320 = vector.multi_reduction <add>, %319, %cst_112 [1] : vector<10x10xf32> to vector<10xf32>
      %321 = vector.shape_cast %320 : vector<10xf32> to vector<10x1xf32>
      %cst_113 = arith.constant dense<0.000000e+00> : vector<1xf32>
      %322 = vector.multi_reduction <add>, %321, %cst_113 [0] : vector<10x1xf32> to vector<1xf32>
      %323 = vector.shape_cast %322 : vector<1xf32> to vector<1x1xf32>
      %cst_114 = arith.constant 2.200000e+01 : f32
      %324 = vector.broadcast %cst_114 : f32 to vector<1x1xf32>
      %325 = arith.cmpf oge, %323, %324 : vector<1x1xf32>
      %326 = arith.select %325, %315, %311 : vector<1x1xi1>, vector<1x1xf32>
      %327 = arith.select %325, %312, %315 : vector<1x1xi1>, vector<1x1xf32>
      %328 = arith.addf %326, %327 : vector<1x1xf32>
      %cst_115 = arith.constant 5.000000e-01 : f32
      %329 = vector.broadcast %cst_115 : f32 to vector<1x1xf32>
      %330 = arith.mulf %329, %328 : vector<1x1xf32>
      %331 = vector.broadcast %330 : vector<1x1xf32> to vector<10x10xf32>
      %332 = arith.cmpf ogt, %117, %331 : vector<10x10xf32>
      %333 = arith.extui %332 : vector<10x10xi1> to vector<10x10xi32>
      %334 = arith.sitofp %333 : vector<10x10xi32> to vector<10x10xf32>
      %cst_116 = arith.constant dense<0.000000e+00> : vector<10xf32>
      %335 = vector.multi_reduction <add>, %334, %cst_116 [1] : vector<10x10xf32> to vector<10xf32>
      %336 = vector.shape_cast %335 : vector<10xf32> to vector<10x1xf32>
      %cst_117 = arith.constant dense<0.000000e+00> : vector<1xf32>
      %337 = vector.multi_reduction <add>, %336, %cst_117 [0] : vector<10x1xf32> to vector<1xf32>
      %338 = vector.shape_cast %337 : vector<1xf32> to vector<1x1xf32>
      %cst_118 = arith.constant 2.200000e+01 : f32
      %339 = vector.broadcast %cst_118 : f32 to vector<1x1xf32>
      %340 = arith.cmpf oge, %338, %339 : vector<1x1xf32>
      %341 = arith.select %340, %330, %326 : vector<1x1xi1>, vector<1x1xf32>
      %342 = arith.select %340, %327, %330 : vector<1x1xi1>, vector<1x1xf32>
      %343 = arith.addf %341, %342 : vector<1x1xf32>
      %cst_119 = arith.constant 5.000000e-01 : f32
      %344 = vector.broadcast %cst_119 : f32 to vector<1x1xf32>
      %345 = arith.mulf %344, %343 : vector<1x1xf32>
      %346 = vector.broadcast %345 : vector<1x1xf32> to vector<10x10xf32>
      %347 = arith.cmpf ogt, %117, %346 : vector<10x10xf32>
      %348 = arith.extui %347 : vector<10x10xi1> to vector<10x10xi32>
      %349 = arith.sitofp %348 : vector<10x10xi32> to vector<10x10xf32>
      %cst_120 = arith.constant dense<0.000000e+00> : vector<10xf32>
      %350 = vector.multi_reduction <add>, %349, %cst_120 [1] : vector<10x10xf32> to vector<10xf32>
      %351 = vector.shape_cast %350 : vector<10xf32> to vector<10x1xf32>
      %cst_121 = arith.constant dense<0.000000e+00> : vector<1xf32>
      %352 = vector.multi_reduction <add>, %351, %cst_121 [0] : vector<10x1xf32> to vector<1xf32>
      %353 = vector.shape_cast %352 : vector<1xf32> to vector<1x1xf32>
      %cst_122 = arith.constant 2.200000e+01 : f32
      %354 = vector.broadcast %cst_122 : f32 to vector<1x1xf32>
      %355 = arith.cmpf oge, %353, %354 : vector<1x1xf32>
      %356 = arith.select %355, %345, %341 : vector<1x1xi1>, vector<1x1xf32>
      %357 = arith.select %355, %342, %345 : vector<1x1xi1>, vector<1x1xf32>
      %358 = arith.addf %356, %357 : vector<1x1xf32>
      %cst_123 = arith.constant 5.000000e-01 : f32
      %359 = vector.broadcast %cst_123 : f32 to vector<1x1xf32>
      %360 = arith.mulf %359, %358 : vector<1x1xf32>
      %361 = vector.broadcast %360 : vector<1x1xf32> to vector<10x10xf32>
      %362 = arith.cmpf ogt, %117, %361 : vector<10x10xf32>
      %363 = arith.extui %362 : vector<10x10xi1> to vector<10x10xi32>
      %364 = arith.sitofp %363 : vector<10x10xi32> to vector<10x10xf32>
      %cst_124 = arith.constant dense<0.000000e+00> : vector<10xf32>
      %365 = vector.multi_reduction <add>, %364, %cst_124 [1] : vector<10x10xf32> to vector<10xf32>
      %366 = vector.shape_cast %365 : vector<10xf32> to vector<10x1xf32>
      %cst_125 = arith.constant dense<0.000000e+00> : vector<1xf32>
      %367 = vector.multi_reduction <add>, %366, %cst_125 [0] : vector<10x1xf32> to vector<1xf32>
      %368 = vector.shape_cast %367 : vector<1xf32> to vector<1x1xf32>
      %cst_126 = arith.constant 2.200000e+01 : f32
      %369 = vector.broadcast %cst_126 : f32 to vector<1x1xf32>
      %370 = arith.cmpf oge, %368, %369 : vector<1x1xf32>
      %371 = arith.select %370, %360, %356 : vector<1x1xi1>, vector<1x1xf32>
      %372 = arith.select %370, %357, %360 : vector<1x1xi1>, vector<1x1xf32>
      %373 = arith.addf %371, %372 : vector<1x1xf32>
      %cst_127 = arith.constant 5.000000e-01 : f32
      %374 = vector.broadcast %cst_127 : f32 to vector<1x1xf32>
      %375 = arith.mulf %374, %373 : vector<1x1xf32>
      %376 = vector.broadcast %375 : vector<1x1xf32> to vector<10x10xf32>
      %377 = arith.cmpf ogt, %117, %376 : vector<10x10xf32>
      %378 = arith.extui %377 : vector<10x10xi1> to vector<10x10xi32>
      %379 = arith.sitofp %378 : vector<10x10xi32> to vector<10x10xf32>
      %cst_128 = arith.constant dense<0.000000e+00> : vector<10xf32>
      %380 = vector.multi_reduction <add>, %379, %cst_128 [1] : vector<10x10xf32> to vector<10xf32>
      %381 = vector.shape_cast %380 : vector<10xf32> to vector<10x1xf32>
      %cst_129 = arith.constant dense<0.000000e+00> : vector<1xf32>
      %382 = vector.multi_reduction <add>, %381, %cst_129 [0] : vector<10x1xf32> to vector<1xf32>
      %383 = vector.shape_cast %382 : vector<1xf32> to vector<1x1xf32>
      %cst_130 = arith.constant 2.200000e+01 : f32
      %384 = vector.broadcast %cst_130 : f32 to vector<1x1xf32>
      %385 = arith.cmpf oge, %383, %384 : vector<1x1xf32>
      %386 = arith.select %385, %375, %371 : vector<1x1xi1>, vector<1x1xf32>
      %387 = arith.select %385, %372, %375 : vector<1x1xi1>, vector<1x1xf32>
      %388 = arith.addf %386, %387 : vector<1x1xf32>
      %cst_131 = arith.constant 5.000000e-01 : f32
      %389 = vector.broadcast %cst_131 : f32 to vector<1x1xf32>
      %390 = arith.mulf %389, %388 : vector<1x1xf32>
      %391 = vector.broadcast %390 : vector<1x1xf32> to vector<10x10xf32>
      %392 = arith.cmpf ogt, %117, %391 : vector<10x10xf32>
      %393 = arith.extui %392 : vector<10x10xi1> to vector<10x10xi32>
      %394 = arith.sitofp %393 : vector<10x10xi32> to vector<10x10xf32>
      %cst_132 = arith.constant dense<0.000000e+00> : vector<10xf32>
      %395 = vector.multi_reduction <add>, %394, %cst_132 [1] : vector<10x10xf32> to vector<10xf32>
      %396 = vector.shape_cast %395 : vector<10xf32> to vector<10x1xf32>
      %cst_133 = arith.constant dense<0.000000e+00> : vector<1xf32>
      %397 = vector.multi_reduction <add>, %396, %cst_133 [0] : vector<10x1xf32> to vector<1xf32>
      %398 = vector.shape_cast %397 : vector<1xf32> to vector<1x1xf32>
      %cst_134 = arith.constant 2.200000e+01 : f32
      %399 = vector.broadcast %cst_134 : f32 to vector<1x1xf32>
      %400 = arith.cmpf oge, %398, %399 : vector<1x1xf32>
      %401 = arith.select %400, %390, %386 : vector<1x1xi1>, vector<1x1xf32>
      %402 = arith.select %400, %387, %390 : vector<1x1xi1>, vector<1x1xf32>
      %403 = arith.addf %401, %402 : vector<1x1xf32>
      %cst_135 = arith.constant 5.000000e-01 : f32
      %404 = vector.broadcast %cst_135 : f32 to vector<1x1xf32>
      %405 = arith.mulf %404, %403 : vector<1x1xf32>
      %406 = vector.broadcast %405 : vector<1x1xf32> to vector<10x10xf32>
      %407 = arith.cmpf ogt, %117, %406 : vector<10x10xf32>
      %408 = arith.extui %407 : vector<10x10xi1> to vector<10x10xi32>
      %409 = arith.sitofp %408 : vector<10x10xi32> to vector<10x10xf32>
      %cst_136 = arith.constant dense<0.000000e+00> : vector<10xf32>
      %410 = vector.multi_reduction <add>, %409, %cst_136 [1] : vector<10x10xf32> to vector<10xf32>
      %411 = vector.shape_cast %410 : vector<10xf32> to vector<10x1xf32>
      %cst_137 = arith.constant dense<0.000000e+00> : vector<1xf32>
      %412 = vector.multi_reduction <add>, %411, %cst_137 [0] : vector<10x1xf32> to vector<1xf32>
      %413 = vector.shape_cast %412 : vector<1xf32> to vector<1x1xf32>
      %cst_138 = arith.constant 2.200000e+01 : f32
      %414 = vector.broadcast %cst_138 : f32 to vector<1x1xf32>
      %415 = arith.cmpf oge, %413, %414 : vector<1x1xf32>
      %416 = arith.select %415, %405, %401 : vector<1x1xi1>, vector<1x1xf32>
      %417 = arith.select %415, %402, %405 : vector<1x1xi1>, vector<1x1xf32>
      %418 = arith.addf %416, %417 : vector<1x1xf32>
      %cst_139 = arith.constant 5.000000e-01 : f32
      %419 = vector.broadcast %cst_139 : f32 to vector<1x1xf32>
      %420 = arith.mulf %419, %418 : vector<1x1xf32>
      %421 = vector.broadcast %420 : vector<1x1xf32> to vector<10x10xf32>
      %422 = arith.cmpf ogt, %117, %421 : vector<10x10xf32>
      %423 = arith.extui %422 : vector<10x10xi1> to vector<10x10xi32>
      %424 = arith.sitofp %423 : vector<10x10xi32> to vector<10x10xf32>
      %cst_140 = arith.constant dense<0.000000e+00> : vector<10xf32>
      %425 = vector.multi_reduction <add>, %424, %cst_140 [1] : vector<10x10xf32> to vector<10xf32>
      %426 = vector.shape_cast %425 : vector<10xf32> to vector<10x1xf32>
      %cst_141 = arith.constant dense<0.000000e+00> : vector<1xf32>
      %427 = vector.multi_reduction <add>, %426, %cst_141 [0] : vector<10x1xf32> to vector<1xf32>
      %428 = vector.shape_cast %427 : vector<1xf32> to vector<1x1xf32>
      %cst_142 = arith.constant 2.200000e+01 : f32
      %429 = vector.broadcast %cst_142 : f32 to vector<1x1xf32>
      %430 = arith.cmpf oge, %428, %429 : vector<1x1xf32>
      %431 = arith.select %430, %420, %416 : vector<1x1xi1>, vector<1x1xf32>
      %432 = arith.select %430, %417, %420 : vector<1x1xi1>, vector<1x1xf32>
      %433 = arith.addf %431, %432 : vector<1x1xf32>
      %cst_143 = arith.constant 5.000000e-01 : f32
      %434 = vector.broadcast %cst_143 : f32 to vector<1x1xf32>
      %435 = arith.mulf %434, %433 : vector<1x1xf32>
      %436 = vector.broadcast %435 : vector<1x1xf32> to vector<10x10xf32>
      %437 = arith.cmpf ogt, %117, %436 : vector<10x10xf32>
      %438 = arith.extui %437 : vector<10x10xi1> to vector<10x10xi32>
      %439 = arith.sitofp %438 : vector<10x10xi32> to vector<10x10xf32>
      %cst_144 = arith.constant dense<0.000000e+00> : vector<10xf32>
      %440 = vector.multi_reduction <add>, %439, %cst_144 [1] : vector<10x10xf32> to vector<10xf32>
      %441 = vector.shape_cast %440 : vector<10xf32> to vector<10x1xf32>
      %cst_145 = arith.constant dense<0.000000e+00> : vector<1xf32>
      %442 = vector.multi_reduction <add>, %441, %cst_145 [0] : vector<10x1xf32> to vector<1xf32>
      %443 = vector.shape_cast %442 : vector<1xf32> to vector<1x1xf32>
      %cst_146 = arith.constant 2.200000e+01 : f32
      %444 = vector.broadcast %cst_146 : f32 to vector<1x1xf32>
      %445 = arith.cmpf oge, %443, %444 : vector<1x1xf32>
      %446 = arith.select %445, %435, %431 : vector<1x1xi1>, vector<1x1xf32>
      %447 = vector.broadcast %446 : vector<1x1xf32> to vector<10x10xf32>
      %448 = arith.cmpf ogt, %117, %447 : vector<10x10xf32>
      %c0_147 = arith.constant 0 : index
      %c0_148 = arith.constant 0 : index
      %449 = vector.load %arg9[%c0_147, %c0_148] : memref<10x10xf32, #tpu.memory_space<vmem>>, vector<10x10xf32>
      %cst_149 = arith.constant 5.000000e-01 : f32
      %450 = vector.broadcast %cst_149 : f32 to vector<10x10xf32>
      %451 = arith.cmpf ogt, %449, %450 : vector<10x10xf32>
      %452 = arith.ori %448, %451 : vector<10x10xi1>
      %cst_150 = arith.constant 0.000000e+00 : f32
      %453 = vector.broadcast %cst_150 : f32 to vector<10x10xf32>
      %454 = arith.select %452, %101, %453 : vector<10x10xi1>, vector<10x10xf32>
      %cst_151 = arith.constant 1.000000e+00 : f32
      %455 = vector.broadcast %cst_151 : f32 to vector<10x10xf32>
      %456 = arith.select %104, %454, %455 : vector<10x10xi1>, vector<10x10xf32>
      %cst_152 = arith.constant dense<0.000000e+00> : vector<10xf32>
      %457 = vector.multi_reduction <add>, %456, %cst_152 [1] : vector<10x10xf32> to vector<10xf32>
      %458 = vector.shape_cast %457 : vector<10xf32> to vector<10x1xf32>
      %cst_153 = arith.constant 9.99999996E-13 : f32
      %459 = vector.broadcast %cst_153 : f32 to vector<10x1xf32>
      %460 = arith.addf %458, %459 : vector<10x1xf32>
      %461 = math.rsqrt %460 : vector<10x1xf32>
      %cst_154 = arith.constant dense<0.000000e+00> : vector<10xf32>
      %462 = vector.multi_reduction <add>, %456, %cst_154 [0] : vector<10x10xf32> to vector<10xf32>
      %463 = vector.shape_cast %462 : vector<10xf32> to vector<1x10xf32>
      %cst_155 = arith.constant 9.99999996E-13 : f32
      %464 = vector.broadcast %cst_155 : f32 to vector<1x10xf32>
      %465 = arith.addf %463, %464 : vector<1x10xf32>
      %466 = math.rsqrt %465 : vector<1x10xf32>
      %467 = vector.broadcast %461 : vector<10x1xf32> to vector<10x10xf32>
      %468 = arith.mulf %467, %456 : vector<10x10xf32>
      %469 = vector.broadcast %466 : vector<1x10xf32> to vector<10x10xf32>
      %470 = arith.mulf %468, %469 : vector<10x10xf32>
      %c0_156 = arith.constant 0 : index
      %c0_157 = arith.constant 0 : index
      %471 = vector.load %arg10[%c0_156, %c0_157] : memref<128x128xf32, #tpu.memory_space<vmem>>, vector<128x128xf32>
      %cst_158 = arith.constant dense<0.000000e+00> : vector<10x128xf32>
      %472 = tpu.matmul %98, %471, %cst_158 {dimension_numbers = #tpu.dot_dimension_numbers<[1], [0], [0], [1], [0, 0, 1, 1], [], []>} : vector<10x128xf32>, vector<128x128xf32>, vector<10x128xf32> -> vector<10x128xf32>
      %cst_159 = arith.constant dense<0.000000e+00> : vector<10x128xf32>
      %473 = tpu.matmul %470, %472, %cst_159 {dimension_numbers = #tpu.dot_dimension_numbers<[1], [0], [0], [1], [0, 0, 1, 1], [], []>} : vector<10x10xf32>, vector<10x128xf32>, vector<10x128xf32> -> vector<10x128xf32>
      %cst_160 = arith.constant 0.000000e+00 : f32
      %474 = vector.broadcast %cst_160 : f32 to vector<10x128xf32>
      %475 = arith.maximumf %473, %474 : vector<10x128xf32>
      %c0_161 = arith.constant 0 : index
      %c0_162 = arith.constant 0 : index
      %476 = vector.load %arg11[%c0_161, %c0_162] : memref<128x128xf32, #tpu.memory_space<vmem>>, vector<128x128xf32>
      %cst_163 = arith.constant dense<0.000000e+00> : vector<10x128xf32>
      %477 = tpu.matmul %475, %476, %cst_163 {dimension_numbers = #tpu.dot_dimension_numbers<[1], [0], [0], [1], [0, 0, 1, 1], [], []>} : vector<10x128xf32>, vector<128x128xf32>, vector<10x128xf32> -> vector<10x128xf32>
      %cst_164 = arith.constant dense<0.000000e+00> : vector<10x128xf32>
      %478 = tpu.matmul %470, %477, %cst_164 {dimension_numbers = #tpu.dot_dimension_numbers<[1], [0], [0], [1], [0, 0, 1, 1], [], []>} : vector<10x10xf32>, vector<10x128xf32>, vector<10x128xf32> -> vector<10x128xf32>
      %c0_165 = arith.constant 0 : index
      %c0_166 = arith.constant 0 : index
      %479 = vector.load %arg14[%c0_165, %c0_166] : memref<10x128xf32, #tpu.memory_space<vmem>>, vector<10x128xf32>
      tpu.vector_store %arg14[%c0_165, %c0_166], %478 {strides = array<i32>} : memref<10x128xf32, #tpu.memory_space<vmem>>, vector<10x128xf32>,
      %c0_167 = arith.constant 0 : index
      %c0_168 = arith.constant 0 : index
      %480 = vector.load %arg15[%c0_167, %c0_168] : memref<10x128xf32, #tpu.memory_space<vmem>>, vector<10x128xf32>
      tpu.vector_store %arg15[%c0_167, %c0_168], %475 {strides = array<i32>} : memref<10x128xf32, #tpu.memory_space<vmem>>, vector<10x128xf32>,
    } else {
    }
    return
  }
  func.func @transform_0(%arg0: i32) -> (i32, i32, i32) {
    %c0_i32 = arith.constant 0 : i32
    %c0_i32_0 = arith.constant 0 : i32
    %c0_i32_1 = arith.constant 0 : i32
    return %arg0, %c0_i32, %c0_i32_0 : i32, i32, i32
  }
  func.func @transform_1(%arg0: i32) -> (i32, i32) {
    %c0_i32 = arith.constant 0 : i32
    %c0_i32_0 = arith.constant 0 : i32
    %c0_i32_1 = arith.constant 0 : i32
    return %c0_i32, %c0_i32_0 : i32, i32
  }
  func.func @transform_2(%arg0: i32) -> (i32, i32, i32) {
    %c0_i32 = arith.constant 0 : i32
    %c0_i32_0 = arith.constant 0 : i32
    %c0_i32_1 = arith.constant 0 : i32
    %c0_i32_2 = arith.constant 0 : i32
    return %c0_i32, %c0_i32_0, %c0_i32_1 : i32, i32, i32
  }
  func.func @transform_3(%arg0: i32) -> (i32, i32) {
    %c0_i32 = arith.constant 0 : i32
    %c0_i32_0 = arith.constant 0 : i32
    %c0_i32_1 = arith.constant 0 : i32
    return %c0_i32, %c0_i32_0 : i32, i32
  }
  func.func @transform_4(%arg0: i32) -> (i32, i32) {
    %c0_i32 = arith.constant 0 : i32
    %c0_i32_0 = arith.constant 0 : i32
    %c0_i32_1 = arith.constant 0 : i32
    return %c0_i32, %c0_i32_0 : i32, i32
  }
  func.func @transform_5(%arg0: i32) -> (i32, i32) {
    %c0_i32 = arith.constant 0 : i32
    %c0_i32_0 = arith.constant 0 : i32
    %c0_i32_1 = arith.constant 0 : i32
    return %c0_i32, %c0_i32_0 : i32, i32
  }
  func.func @transform_6(%arg0: i32) -> (i32, i32) {
    %c0_i32 = arith.constant 0 : i32
    %c0_i32_0 = arith.constant 0 : i32
    %c0_i32_1 = arith.constant 0 : i32
    return %c0_i32, %c0_i32_0 : i32, i32
  }
  func.func @transform_7(%arg0: i32) -> (i32, i32) {
    %c0_i32 = arith.constant 0 : i32
    %c0_i32_0 = arith.constant 0 : i32
    %c0_i32_1 = arith.constant 0 : i32
    return %c0_i32, %c0_i32_0 : i32, i32
  }
  func.func @transform_8(%arg0: i32) -> (i32, i32) {
    %c0_i32 = arith.constant 0 : i32
    %c0_i32_0 = arith.constant 0 : i32
    %c0_i32_1 = arith.constant 0 : i32
    return %c0_i32, %c0_i32_0 : i32, i32
  }
  func.func @transform_9(%arg0: i32) -> (i32, i32) {
    %c0_i32 = arith.constant 0 : i32
    %c0_i32_0 = arith.constant 0 : i32
    %c0_i32_1 = arith.constant 0 : i32
    return %c0_i32, %c0_i32_0 : i32, i32
  }
  func.func @transform_10(%arg0: i32) -> (i32, i32) {
    %c0_i32 = arith.constant 0 : i32
    %c0_i32_0 = arith.constant 0 : i32
    %c0_i32_1 = arith.constant 0 : i32
    return %c0_i32, %c0_i32_0 : i32, i32
  }
  func.func @transform_11(%arg0: i32) -> (i32, i32) {
    %c0_i32 = arith.constant 0 : i32
    %c0_i32_0 = arith.constant 0 : i32
    %c0_i32_1 = arith.constant 0 : i32
    return %c0_i32, %c0_i32_0 : i32, i32
  }
  func.func @transform_12(%arg0: i32) -> (i32, i32) {
    %c0_i32 = arith.constant 0 : i32
    %c0_i32_0 = arith.constant 0 : i32
    %c0_i32_1 = arith.constant 0 : i32
    return %c0_i32, %c0_i32_0 : i32, i32
  }
  func.func @transform_13(%arg0: i32) -> (i32, i32) {
    %c0_i32 = arith.constant 0 : i32
    %c0_i32_0 = arith.constant 0 : i32
    %c0_i32_1 = arith.constant 0 : i32
    return %c0_i32, %c0_i32_0 : i32, i32
  }
  func.func @transform_14(%arg0: i32) -> (i32, i32) {
    %c0_i32 = arith.constant 0 : i32
    %c0_i32_0 = arith.constant 0 : i32
    %c0_i32_1 = arith.constant 0 : i32
    return %c0_i32, %c0_i32_0 : i32, i32
  }
}

</mosaic_0001>

<llo_original>
// kernel: lsg_forward.1
$region0: #{lsg_forward.1}
  #allocation0 [shape = 'u32[]', space=smem, size = 0x4, offset = 0x4, fixed_abs, tag = 'smem constant byte address 0x4 - core index']
  #allocation1 [shape = 'u32[144,128]{1,0:T(1,128)}', space=vmem, size = 0x12000, scoped, tag = 'internal scratch']
  #allocation2 [shape = 'f32[10,128]{1,0:T(8,128)}', space=vmem, size = 0x2000, scoped, tag = 'scratch operand']
  %s0 = inlined_call_operand.vmem [shape: f32[2,324,4], index: 0, kind: input, shape index: {}]
  %s1 = inlined_call_operand.vmem [shape: f32[286,1], index: 1, kind: input, shape index: {}]
  %s2 = inlined_call_operand.vmem [shape: bf16[9,4,128], index: 2, kind: input, shape index: {}]
  %s3 = inlined_call_operand.vmem [shape: f32[1,128], index: 3, kind: input, shape index: {}]
  %s4 = inlined_call_operand.vmem [shape: f32[128,128], index: 4, kind: input, shape index: {}]
  %s5 = inlined_call_operand.vmem [shape: f32[1,128], index: 5, kind: input, shape index: {}]
  %s6 = inlined_call_operand.vmem [shape: f32[8,128], index: 6, kind: input, shape index: {}]
  %s7 = inlined_call_operand.vmem [shape: f32[10,10], index: 7, kind: input, shape index: {}]
  %s8 = inlined_call_operand.vmem [shape: f32[10,10], index: 8, kind: input, shape index: {}]
  %s9 = inlined_call_operand.vmem [shape: f32[128,128], index: 9, kind: input, shape index: {}]
  %s10 = inlined_call_operand.vmem [shape: f32[128,128], index: 10, kind: input, shape index: {}]
  %s11 = inlined_call_operand.hbm [shape: f32[2,128], index: 11, kind: output, shape index: {0}]
  %s12 = inlined_call_operand.hbm [shape: f32[2,128], index: 12, kind: output, shape index: {1}]
  %s13 = inlined_call_operand.vmem [shape: f32[10,128], index: 13, kind: output, shape index: {2}]
  %s14 = inlined_call_operand.hbm [shape: f32[10,128], index: 14, kind: output, shape index: {3}]
  %15 = xla_tuple %s11, %s12, %s13, %s14
  %s16 = sld [smem:[#allocation0]]
  $region109: #{lsg_forward.1} parent=0
    _
  %s18 = ssub.s32 1, %s16
  %s19 = scalar_select 0, %s18, %s16
  $region1: #{lsg_forward.1} parent=0
    #allocation3 [shape = 'u8[1024]{0}', space=vmem, size = 0x400, scoped, tag = 'output window, operand 0, single buffered']
    #allocation4 [shape = 's32[2]{0}', space=sflag, size = 0x8, scoped, tag = 'scoped memory for lsg_forward.1']
    #allocation5 [shape = 'u8[1024]{0}', space=vmem, size = 0x400, scoped, tag = 'output window, operand 1, single buffered']
    #allocation6 [shape = 's32[1]{0}', space=sflag, size = 0x4, scoped, tag = 'scoped memory for lsg_forward.1']
    #allocation7 [shape = 'u8[8192]{0}', space=vmem, size = 0x2000, scoped, tag = 'output window, operand 3, single buffered']
    %20 = vsyncpa [#allocation4], 0
    %21 = vsyncpa [#allocation6], 0
    loop: start=0, step=1, limit=4
    $region2: #{lsg_forward.1} parent=1 // loop_pre_header
      _
    $region3: #{lsg_forward.1} parent=1 // loop_header
      %s23 = sphi 0, %s27
      %p24 = scmp.ge.s32.totalorder %s23, 4
      %s33 = sphi 0, %s35
      %s36 = sphi 0, %s33
      %s37 = sphi 0, %s36
      %s53 = sphi 0, %s37
      %s57 = sphi 0, %s57
      %s59 = sphi 0, %s57
      %s60 = sphi 0, %s59
      %s74 = sphi 0, %s60
      %s78 = sphi 0, %s78
      %s80 = sphi 0, %s78
      %s81 = sphi 0, %s80
      %s95 = sphi 0, %s81
      %s99 = sphi 0, %s99
      %s101 = sphi 0, %s99
      %s102 = sphi 0, %s101
      %s116 = sphi 0, %s102
      %s120 = sphi 0, %s120
      %s122 = sphi 0, %s120
      %s123 = sphi 0, %s122
      %s137 = sphi 0, %s123
      %s141 = sphi 0, %s141
      %s143 = sphi 0, %s141
      %s144 = sphi 0, %s143
      %s158 = sphi 0, %s144
      %s162 = sphi 0, %s162
      %s164 = sphi 0, %s162
      %s165 = sphi 0, %s164
      %s179 = sphi 0, %s165
      %s183 = sphi 0, %s183
      %s185 = sphi 0, %s183
      %s186 = sphi 0, %s185
      %s200 = sphi 0, %s186
      %s204 = sphi 0, %s204
      %s206 = sphi 0, %s204
      %s207 = sphi 0, %s206
      %s221 = sphi 0, %s207
      %s225 = sphi 0, %s225
      %s227 = sphi 0, %s225
      %s228 = sphi 0, %s227
      %s242 = sphi 0, %s228
      %s246 = sphi 0, %s246
      %s248 = sphi 0, %s246
      %s249 = sphi 0, %s248
      %s263 = sphi 0, %s249
      %s267 = sphi 0, %s267
      %s269 = sphi 0, %s267
      %s270 = sphi 0, %s269
      %s284 = sphi 0, %s270
      %s288 = sphi 0, %s288
      %s290 = sphi 0, %s288
      %s291 = sphi 0, %s290
      %s305 = sphi 0, %s291
      %s309 = sphi 0, %s309
      %s311 = sphi 0, %s309
      %s312 = sphi 0, %s311
      %s326 = sphi 0, %s312
      %s330 = sphi 0, %s330
      %s332 = sphi 0, %s330
      %s333 = sphi 0, %s332
      %s347 = sphi 0, %s333
    $region4: #{lsg_forward.1} parent=1 // loop_header_branch
      %26 = sbr.rel (%p24) target = $region8
    $region5: #{lsg_forward.1} parent=1 // loop_body
      %s28 = ssub.s32 %s23, 1
      %s29 = ssub.s32 %s23, 2
      %s30 = sadd.s32 %s23, 1
      %s31 = ssub.s32 %s23, %s30
      %p32 = scmp.eq.s32.totalorder %s31, 0
      %s34 = sadd.s32 %s33, 1
      %s35 = scalar_select %p32, %s33, %s34
      %p38 = pneg %p32
      %p39 = scmp.eq.s32.totalorder %s23, 1
      %p40 = por %p38, %p39
      %p41 = scmp.ne.s32.totalorder %s33, %s36
      %p42 = scmp.eq.s32.totalorder %s23, 0
      %p43 = por %p41, %p42
      %p44 = scmp.ne.s32.totalorder %s33, %s36
      %p45 = scmp.eq.s32.totalorder %s28, 1
      %p46 = por %p44, %p45
      %p47 = scmp.ne.s32.totalorder %s36, %s37
      %p48 = scmp.eq.s32.totalorder %s28, 0
      %p49 = por %p47, %p48
      %p50 = scmp.ne.s32.totalorder %s36, %s37
      %p51 = scmp.eq.s32.totalorder %s29, 1
      %p52 = por %p50, %p51
      %p54 = scmp.ne.s32.totalorder %s37, %s53
      %p55 = scmp.eq.s32.totalorder %s29, 0
      %p56 = por %p54, %p55
      %s58 = sadd.s32 %s57, 1
      %p61 = scmp.eq.s32.totalorder %s23, 1
      %p62 = scmp.ne.s32.totalorder %s57, %s59
      %p63 = scmp.eq.s32.totalorder %s23, 0
      %p64 = por %p62, %p63
      %p65 = scmp.ne.s32.totalorder %s57, %s59
      %p66 = scmp.eq.s32.totalorder %s28, 1
      %p67 = por %p65, %p66
      %p68 = scmp.ne.s32.totalorder %s59, %s60
      %p69 = scmp.eq.s32.totalorder %s28, 0
      %p70 = por %p68, %p69
      %p71 = scmp.ne.s32.totalorder %s59, %s60
      %p72 = scmp.eq.s32.totalorder %s29, 1
      %p73 = por %p71, %p72
      %p75 = scmp.ne.s32.totalorder %s60, %s74
      %p76 = scmp.eq.s32.totalorder %s29, 0
      %p77 = por %p75, %p76
      %s79 = sadd.s32 %s78, 1
      %p82 = scmp.eq.s32.totalorder %s23, 1
      %p83 = scmp.ne.s32.totalorder %s78, %s80
      %p84 = scmp.eq.s32.totalorder %s23, 0
      %p85 = por %p83, %p84
      %p86 = scmp.ne.s32.totalorder %s78, %s80
      %p87 = scmp.eq.s32.totalorder %s28, 1
      %p88 = por %p86, %p87
      %p89 = scmp.ne.s32.totalorder %s80, %s81
      %p90 = scmp.eq.s32.totalorder %s28, 0
      %p91 = por %p89, %p90
      %p92 = scmp.ne.s32.totalorder %s80, %s81
      %p93 = scmp.eq.s32.totalorder %s29, 1
      %p94 = por %p92, %p93
      %p96 = scmp.ne.s32.totalorder %s81, %s95
      %p97 = scmp.eq.s32.totalorder %s29, 0
      %p98 = por %p96, %p97
      %s100 = sadd.s32 %s99, 1
      %p103 = scmp.eq.s32.totalorder %s23, 1
      %p104 = scmp.ne.s32.totalorder %s99, %s101
      %p105 = scmp.eq.s32.totalorder %s23, 0
      %p106 = por %p104, %p105
      %p107 = scmp.ne.s32.totalorder %s99, %s101
      %p108 = scmp.eq.s32.totalorder %s28, 1
      %p109 = por %p107, %p108
      %p110 = scmp.ne.s32.totalorder %s101, %s102
      %p111 = scmp.eq.s32.totalorder %s28, 0
      %p112 = por %p110, %p111
      %p113 = scmp.ne.s32.totalorder %s101, %s102
      %p114 = scmp.eq.s32.totalorder %s29, 1
      %p115 = por %p113, %p114
      %p117 = scmp.ne.s32.totalorder %s102, %s116
      %p118 = scmp.eq.s32.totalorder %s29, 0
      %p119 = por %p117, %p118
      %s121 = sadd.s32 %s120, 1
      %p124 = scmp.eq.s32.totalorder %s23, 1
      %p125 = scmp.ne.s32.totalorder %s120, %s122
      %p126 = scmp.eq.s32.totalorder %s23, 0
      %p127 = por %p125, %p126
      %p128 = scmp.ne.s32.totalorder %s120, %s122
      %p129 = scmp.eq.s32.totalorder %s28, 1
      %p130 = por %p128, %p129
      %p131 = scmp.ne.s32.totalorder %s122, %s123
      %p132 = scmp.eq.s32.totalorder %s28, 0
      %p133 = por %p131, %p132
      %p134 = scmp.ne.s32.totalorder %s122, %s123
      %p135 = scmp.eq.s32.totalorder %s29, 1
      %p136 = por %p134, %p135
      %p138 = scmp.ne.s32.totalorder %s123, %s137
      %p139 = scmp.eq.s32.totalorder %s29, 0
      %p140 = por %p138, %p139
      %s142 = sadd.s32 %s141, 1
      %p145 = scmp.eq.s32.totalorder %s23, 1
      %p146 = scmp.ne.s32.totalorder %s141, %s143
      %p147 = scmp.eq.s32.totalorder %s23, 0
      %p148 = por %p146, %p147
      %p149 = scmp.ne.s32.totalorder %s141, %s143
      %p150 = scmp.eq.s32.totalorder %s28, 1
      %p151 = por %p149, %p150
      %p152 = scmp.ne.s32.totalorder %s143, %s144
      %p153 = scmp.eq.s32.totalorder %s28, 0
      %p154 = por %p152, %p153
      %p155 = scmp.ne.s32.totalorder %s143, %s144
      %p156 = scmp.eq.s32.totalorder %s29, 1
      %p157 = por %p155, %p156
      %p159 = scmp.ne.s32.totalorder %s144, %s158
      %p160 = scmp.eq.s32.totalorder %s29, 0
      %p161 = por %p159, %p160
      %s163 = sadd.s32 %s162, 1
      %p166 = scmp.eq.s32.totalorder %s23, 1
      %p167 = scmp.ne.s32.totalorder %s162, %s164
      %p168 = scmp.eq.s32.totalorder %s23, 0
      %p169 = por %p167, %p168
      %p170 = scmp.ne.s32.totalorder %s162, %s164
      %p171 = scmp.eq.s32.totalorder %s28, 1
      %p172 = por %p170, %p171
      %p173 = scmp.ne.s32.totalorder %s164, %s165
      %p174 = scmp.eq.s32.totalorder %s28, 0
      %p175 = por %p173, %p174
      %p176 = scmp.ne.s32.totalorder %s164, %s165
      %p177 = scmp.eq.s32.totalorder %s29, 1
      %p178 = por %p176, %p177
      %p180 = scmp.ne.s32.totalorder %s165, %s179
      %p181 = scmp.eq.s32.totalorder %s29, 0
      %p182 = por %p180, %p181
      %s184 = sadd.s32 %s183, 1
      %p187 = scmp.eq.s32.totalorder %s23, 1
      %p188 = scmp.ne.s32.totalorder %s183, %s185
      %p189 = scmp.eq.s32.totalorder %s23, 0
      %p190 = por %p188, %p189
      %p191 = scmp.ne.s32.totalorder %s183, %s185
      %p192 = scmp.eq.s32.totalorder %s28, 1
      %p193 = por %p191, %p192
      %p194 = scmp.ne.s32.totalorder %s185, %s186
      %p195 = scmp.eq.s32.totalorder %s28, 0
      %p196 = por %p194, %p195
      %p197 = scmp.ne.s32.totalorder %s185, %s186
      %p198 = scmp.eq.s32.totalorder %s29, 1
      %p199 = por %p197, %p198
      %p201 = scmp.ne.s32.totalorder %s186, %s200
      %p202 = scmp.eq.s32.totalorder %s29, 0
      %p203 = por %p201, %p202
      %s205 = sadd.s32 %s204, 1
      %p208 = scmp.eq.s32.totalorder %s23, 1
      %p209 = scmp.ne.s32.totalorder %s204, %s206
      %p210 = scmp.eq.s32.totalorder %s23, 0
      %p211 = por %p209, %p210
      %p212 = scmp.ne.s32.totalorder %s204, %s206
      %p213 = scmp.eq.s32.totalorder %s28, 1
      %p214 = por %p212, %p213
      %p215 = scmp.ne.s32.totalorder %s206, %s207
      %p216 = scmp.eq.s32.totalorder %s28, 0
      %p217 = por %p215, %p216
      %p218 = scmp.ne.s32.totalorder %s206, %s207
      %p219 = scmp.eq.s32.totalorder %s29, 1
      %p220 = por %p218, %p219
      %p222 = scmp.ne.s32.totalorder %s207, %s221
      %p223 = scmp.eq.s32.totalorder %s29, 0
      %p224 = por %p222, %p223
      %s226 = sadd.s32 %s225, 1
      %p229 = scmp.eq.s32.totalorder %s23, 1
      %p230 = scmp.ne.s32.totalorder %s225, %s227
      %p231 = scmp.eq.s32.totalorder %s23, 0
      %p232 = por %p230, %p231
      %p233 = scmp.ne.s32.totalorder %s225, %s227
      %p234 = scmp.eq.s32.totalorder %s28, 1
      %p235 = por %p233, %p234
      %p236 = scmp.ne.s32.totalorder %s227, %s228
      %p237 = scmp.eq.s32.totalorder %s28, 0
      %p238 = por %p236, %p237
      %p239 = scmp.ne.s32.totalorder %s227, %s228
      %p240 = scmp.eq.s32.totalorder %s29, 1
      %p241 = por %p239, %p240
      %p243 = scmp.ne.s32.totalorder %s228, %s242
      %p244 = scmp.eq.s32.totalorder %s29, 0
      %p245 = por %p243, %p244
      %s247 = sadd.s32 %s246, 1
      %p250 = scmp.eq.s32.totalorder %s23, 1
      %p251 = scmp.ne.s32.totalorder %s246, %s248
      %p252 = scmp.eq.s32.totalorder %s23, 0
      %p253 = por %p251, %p252
      %p254 = scmp.ne.s32.totalorder %s246, %s248
      %p255 = scmp.eq.s32.totalorder %s28, 1
      %p256 = por %p254, %p255
      %p257 = scmp.ne.s32.totalorder %s248, %s249
      %p258 = scmp.eq.s32.totalorder %s28, 0
      %p259 = por %p257, %p258
      %p260 = scmp.ne.s32.totalorder %s248, %s249
      %p261 = scmp.eq.s32.totalorder %s29, 1
      %p262 = por %p260, %p261
      %p264 = scmp.ne.s32.totalorder %s249, %s263
      %p265 = scmp.eq.s32.totalorder %s29, 0
      %p266 = por %p264, %p265
      %s268 = sadd.s32 %s267, 1
      %p271 = scmp.eq.s32.totalorder %s23, 1
      %p272 = scmp.ne.s32.totalorder %s267, %s269
      %p273 = scmp.eq.s32.totalorder %s23, 0
      %p274 = por %p272, %p273
      %p275 = scmp.ne.s32.totalorder %s267, %s269
      %p276 = scmp.eq.s32.totalorder %s28, 1
      %p277 = por %p275, %p276
      %p278 = scmp.ne.s32.totalorder %s269, %s270
      %p279 = scmp.eq.s32.totalorder %s28, 0
      %p280 = por %p278, %p279
      %p281 = scmp.ne.s32.totalorder %s269, %s270
      %p282 = scmp.eq.s32.totalorder %s29, 1
      %p283 = por %p281, %p282
      %p285 = scmp.ne.s32.totalorder %s270, %s284
      %p286 = scmp.eq.s32.totalorder %s29, 0
      %p287 = por %p285, %p286
      %s289 = sadd.s32 %s288, 1
      %p292 = scmp.eq.s32.totalorder %s23, 1
      %p293 = scmp.ne.s32.totalorder %s288, %s290
      %p294 = scmp.eq.s32.totalorder %s23, 0
      %p295 = por %p293, %p294
      %p296 = scmp.ne.s32.totalorder %s288, %s290
      %p297 = scmp.eq.s32.totalorder %s28, 1
      %p298 = por %p296, %p297
      %p299 = scmp.ne.s32.totalorder %s290, %s291
      %p300 = scmp.eq.s32.totalorder %s28, 0
      %p301 = por %p299, %p300
      %p302 = scmp.ne.s32.totalorder %s290, %s291
      %p303 = scmp.eq.s32.totalorder %s29, 1
      %p304 = por %p302, %p303
      %p306 = scmp.ne.s32.totalorder %s291, %s305
      %p307 = scmp.eq.s32.totalorder %s29, 0
      %p308 = por %p306, %p307
      %s310 = sadd.s32 %s309, 1
      %p313 = scmp.eq.s32.totalorder %s23, 1
      %p314 = scmp.ne.s32.totalorder %s309, %s311
      %p315 = scmp.eq.s32.totalorder %s23, 0
      %p316 = por %p314, %p315
      %p317 = scmp.ne.s32.totalorder %s309, %s311
      %p318 = scmp.eq.s32.totalorder %s28, 1
      %p319 = por %p317, %p318
      %p320 = scmp.ne.s32.totalorder %s311, %s312
      %p321 = scmp.eq.s32.totalorder %s28, 0
      %p322 = por %p320, %p321
      %p323 = scmp.ne.s32.totalorder %s311, %s312
      %p324 = scmp.eq.s32.totalorder %s29, 1
      %p325 = por %p323, %p324
      %p327 = scmp.ne.s32.totalorder %s312, %s326
      %p328 = scmp.eq.s32.totalorder %s29, 0
      %p329 = por %p327, %p328
      %s331 = sadd.s32 %s330, 1
      %p334 = scmp.eq.s32.totalorder %s23, 1
      %p335 = scmp.ne.s32.totalorder %s330, %s332
      %p336 = scmp.eq.s32.totalorder %s23, 0
      %p337 = por %p335, %p336
      %p338 = scmp.ne.s32.totalorder %s330, %s332
      %p339 = scmp.eq.s32.totalorder %s28, 1
      %p340 = por %p338, %p339
      %p341 = scmp.ne.s32.totalorder %s332, %s333
      %p342 = scmp.eq.s32.totalorder %s28, 0
      %p343 = por %p341, %p342
      %p344 = scmp.ne.s32.totalorder %s332, %s333
      %p345 = scmp.eq.s32.totalorder %s29, 1
      %p346 = por %p344, %p345
      %p348 = scmp.ne.s32.totalorder %s333, %s347
      %p349 = scmp.eq.s32.totalorder %s29, 0
      %p350 = por %p348, %p349
      %p351 = scmp.le.s32.totalorder 1, %s23
      %p352 = scmp.lt.s32.totalorder %s23, 3
      %p353 = pnand %p351, %p352
      %p354 = pneg %p353
      // Predicated region
      $region9: #{lsg_forward.1} parent=5 // pred_check
        _
      $region10: #{lsg_forward.1} parent=5 // pred_check_branch
        %356 = sbr.rel (%p353) target = $region12
      $region11: #{lsg_forward.1} parent=5 // pred_region
        %s357 = ssub.s32 %s23, 1
        // Predicated region
        $region13: #{lsg_forward.1} parent=11 // pred_check
          %p358 = pneg %p70
        $region14: #{lsg_forward.1} parent=11 // pred_check_branch
          %360 = sbr.rel (%p358) target = $region16
        $region15: #{lsg_forward.1} parent=11 // pred_region
          _
        $region16: #{lsg_forward.1} parent=11 // pred_fallthru
          _
        // Predicated region
        $region17: #{lsg_forward.1} parent=11 // pred_check
          %p361 = pneg %p91
        $region18: #{lsg_forward.1} parent=11 // pred_check_branch
          %363 = sbr.rel (%p361) target = $region20
        $region19: #{lsg_forward.1} parent=11 // pred_region
          _
        $region20: #{lsg_forward.1} parent=11 // pred_fallthru
          _
        // Predicated region
        $region21: #{lsg_forward.1} parent=11 // pred_check
          %p364 = pneg %p112
        $region22: #{lsg_forward.1} parent=11 // pred_check_branch
          %366 = sbr.rel (%p364) target = $region24
        $region23: #{lsg_forward.1} parent=11 // pred_region
          _
        $region24: #{lsg_forward.1} parent=11 // pred_fallthru
          _
        // Predicated region
        $region25: #{lsg_forward.1} parent=11 // pred_check
          %p367 = pneg %p133
        $region26: #{lsg_forward.1} parent=11 // pred_check_branch
          %369 = sbr.rel (%p367) target = $region28
        $region27: #{lsg_forward.1} parent=11 // pred_region
          _
        $region28: #{lsg_forward.1} parent=11 // pred_fallthru
          _
        // Predicated region
        $region29: #{lsg_forward.1} parent=11 // pred_check
          %p370 = pneg %p154
        $region30: #{lsg_forward.1} parent=11 // pred_check_branch
          %372 = sbr.rel (%p370) target = $region32
        $region31: #{lsg_forward.1} parent=11 // pred_region
          _
        $region32: #{lsg_forward.1} parent=11 // pred_fallthru
          _
        // Predicated region
        $region33: #{lsg_forward.1} parent=11 // pred_check
          %p373 = pneg %p175
        $region34: #{lsg_forward.1} parent=11 // pred_check_branch
          %375 = sbr.rel (%p373) target = $region36
        $region35: #{lsg_forward.1} parent=11 // pred_region
          _
        $region36: #{lsg_forward.1} parent=11 // pred_fallthru
          _
        // Predicated region
        $region37: #{lsg_forward.1} parent=11 // pred_check
          %p376 = pneg %p196
        $region38: #{lsg_forward.1} parent=11 // pred_check_branch
          %378 = sbr.rel (%p376) target = $region40
        $region39: #{lsg_forward.1} parent=11 // pred_region
          _
        $region40: #{lsg_forward.1} parent=11 // pred_fallthru
          _
        // Predicated region
        $region41: #{lsg_forward.1} parent=11 // pred_check
          %p379 = pneg %p217
        $region42: #{lsg_forward.1} parent=11 // pred_check_branch
          %381 = sbr.rel (%p379) target = $region44
        $region43: #{lsg_forward.1} parent=11 // pred_region
          _
        $region44: #{lsg_forward.1} parent=11 // pred_fallthru
          _
        // Predicated region
        $region45: #{lsg_forward.1} parent=11 // pred_check
          %p382 = pneg %p238
        $region46: #{lsg_forward.1} parent=11 // pred_check_branch
          %384 = sbr.rel (%p382) target = $region48
        $region47: #{lsg_forward.1} parent=11 // pred_region
          _
        $region48: #{lsg_forward.1} parent=11 // pred_fallthru
          _
        // Predicated region
        $region49: #{lsg_forward.1} parent=11 // pred_check
          %p385 = pneg %p259
        $region50: #{lsg_forward.1} parent=11 // pred_check_branch
          %387 = sbr.rel (%p385) target = $region52
        $region51: #{lsg_forward.1} parent=11 // pred_region
          _
        $region52: #{lsg_forward.1} parent=11 // pred_fallthru
          _
      $region12: #{lsg_forward.1} parent=5 // pred_fallthru
        _
      %p388 = scmp.lt.s32.totalorder %s23, 2
      // Predicated region
      $region53: #{lsg_forward.1} parent=5 // pred_check
        %p389 = pneg %p388
      $region54: #{lsg_forward.1} parent=5 // pred_check_branch
        %391 = sbr.rel (%p389) target = $region56
      $region55: #{lsg_forward.1} parent=5 // pred_region
        // Predicated region
        $region57: #{lsg_forward.1} parent=55 // pred_check
          %p392 = pneg %p43
        $region58: #{lsg_forward.1} parent=55 // pred_check_branch
          %394 = sbr.rel (%p392) target = $region60
        $region59: #{lsg_forward.1} parent=55 // pred_region
          %p395 = scmp.lt.s32.totalorder %s23, 1
          %s396 = scalar_select %p395, %s23, 1
          %s397 = smul.addr %s396, 41
          %s398 = smul.addr %s397, 8
          %s399 = scalar_lea.vmem %s0, %s398
        $region60: #{lsg_forward.1} parent=55 // pred_fallthru
          _
      $region56: #{lsg_forward.1} parent=5 // pred_fallthru
        _
      %p400 = scmp.le.s32.totalorder 1, %s23
      %p401 = scmp.lt.s32.totalorder %s23, 3
      %p402 = pnand %p400, %p401
      %p403 = pneg %p402
      // Predicated region
      $region61: #{lsg_forward.1} parent=5 // pred_check
        _
      $region62: #{lsg_forward.1} parent=5 // pred_check_branch
        %405 = sbr.rel (%p402) target = $region64
      $region63: #{lsg_forward.1} parent=5 // pred_region
        %s406 = ssub.s32 %s23, 1
        %p407 = scmp.lt.s32.totalorder %s28, 1
        %s408 = scalar_select %p407, %s28, 1
        %s409 = smul.addr %s408, 41
        %s410 = smul.addr %s409, 8
        %s411 = scalar_lea.vmem %s0, %s410
        %p412 = pneg %p49
        %p413 = pneg %p46
        %p414 = pneg %p70
        %p415 = pneg %p67
        %p416 = pneg %p91
        %p417 = pneg %p88
        %p418 = pneg %p112
        %p419 = pneg %p109
        %p420 = pneg %p133
        %p421 = pneg %p130
        %p422 = pneg %p154
        %p423 = pneg %p151
        %p424 = pneg %p175
        %p425 = pneg %p172
        %p426 = pneg %p196
        %p427 = pneg %p193
        %p428 = pneg %p217
        %p429 = pneg %p214
        %p430 = pneg %p238
        %p431 = pneg %p235
        %p432 = pneg %p259
        %p433 = pneg %p256
        %p434 = pneg %p280
        %p435 = pneg %p277
        %p436 = pneg %p301
        %p437 = pneg %p298
        %p438 = pneg %p322
        %p439 = pneg %p319
        %p440 = pneg %p343
        %p441 = pneg %p340
        %p442 = scmp.lt.s32.totalorder %s28, 1
        %s443 = scalar_select %p442, %s28, 1
        %s444 = smul.addr %s443, 41
        %s445 = smul.addr %s444, 8
        %s446 = scalar_lea.vmem %s0, %s445
        %v448 = vld [vmem:[%s446] sm:$0xff]
        %v449 = vld [vmem:[%s446 + $0x8] sm:$0xff]
        %v450 = vld [vmem:[%s446 + $0x10] sm:$0xff]
        %v451 = vld [vmem:[%s446 + $0x18] sm:$0xff]
        %v452 = vld [vmem:[%s446 + $0x20] sm:$0xff]
        %v453 = vld [vmem:[%s446 + $0x28] sm:$0xff]
        %v454 = vld [vmem:[%s446 + $0x30] sm:$0xff]
        %v455 = vld [vmem:[%s446 + $0x38] sm:$0xff]
        %v456 = vld [vmem:[%s446 + $0x40] sm:$0xff]
        %v457 = vld [vmem:[%s446 + $0x48] sm:$0xff]
        %v458 = vld [vmem:[%s446 + $0x50] sm:$0xff]
        %v459 = vld [vmem:[%s446 + $0x58] sm:$0xff]
        %v460 = vld [vmem:[%s446 + $0x60] sm:$0xff]
        %v461 = vld [vmem:[%s446 + $0x68] sm:$0xff]
        %v462 = vld [vmem:[%s446 + $0x70] sm:$0xff]
        %v463 = vld [vmem:[%s446 + $0x78] sm:$0xff]
        %v464 = vld [vmem:[%s446 + $0x80] sm:$0xff]
        %v465 = vld [vmem:[%s446 + $0x88] sm:$0xff]
        %v466 = vld [vmem:[%s446 + $0x90] sm:$0xff]
        %v467 = vld [vmem:[%s446 + $0x98] sm:$0xff]
        %v468 = vld [vmem:[%s446 + $0xa0] sm:$0xff]
        %v469 = vld [vmem:[%s446 + $0xa8] sm:$0xff]
        %v470 = vld [vmem:[%s446 + $0xb0] sm:$0xff]
        %v471 = vld [vmem:[%s446 + $0xb8] sm:$0xff]
        %v472 = vld [vmem:[%s446 + $0xc0] sm:$0xff]
        %v473 = vld [vmem:[%s446 + $0xc8] sm:$0xff]
        %v474 = vld [vmem:[%s446 + $0xd0] sm:$0xff]
        %v475 = vld [vmem:[%s446 + $0xd8] sm:$0xff]
        %v476 = vld [vmem:[%s446 + $0xe0] sm:$0xff]
        %v477 = vld [vmem:[%s446 + $0xe8] sm:$0xff]
        %v478 = vld [vmem:[%s446 + $0xf0] sm:$0xff]
        %v479 = vld [vmem:[%s446 + $0xf8] sm:$0xff]
        %v480 = vld [vmem:[%s446 + $0x100] sm:$0xff]
        %v481 = vld [vmem:[%s446 + $0x108] sm:$0xff]
        %v482 = vld [vmem:[%s446 + $0x110] sm:$0xff]
        %v483 = vld [vmem:[%s446 + $0x118] sm:$0xff]
        %v484 = vld [vmem:[%s446 + $0x120] sm:$0xff]
        %v485 = vld [vmem:[%s446 + $0x128] sm:$0xff]
        %v486 = vld [vmem:[%s446 + $0x130] sm:$0xff]
        %v487 = vld [vmem:[%s446 + $0x138] sm:$0xff]
        %v488 = vld [vmem:[%s446 + $0x140] sm:$0xf]
        %v489 = vpack.c.bf16 %v449, %v448
        %v490 = vpack.c.bf16 %v451, %v450
        %v491 = vpack.c.bf16 %v453, %v452
        %v492 = vpack.c.bf16 %v455, %v454
        %v493 = vpack.c.bf16 %v457, %v456
        %v494 = vpack.c.bf16 %v459, %v458
        %v495 = vpack.c.bf16 %v461, %v460
        %v496 = vpack.c.bf16 %v463, %v462
        %v497 = vpack.c.bf16 %v465, %v464
        %v498 = vpack.c.bf16 %v467, %v466
        %v499 = vpack.c.bf16 %v469, %v468
        %v500 = vpack.c.bf16 %v471, %v470
        %v501 = vpack.c.bf16 %v473, %v472
        %v502 = vpack.c.bf16 %v475, %v474
        %v503 = vpack.c.bf16 %v477, %v476
        %v504 = vpack.c.bf16 %v479, %v478
        %v505 = vpack.c.bf16 %v481, %v480
        %v506 = vpack.c.bf16 %v483, %v482
        %v507 = vld [vmem:[%s2] sm:$0x3]
        %s508 = scalar_lea.vmem %s2, 2
        %v509 = vld [vmem:[%s508] sm:$0x3]
        %vm510 = vsmask.f32 7424
        %v512 = vshrl.u32 %v489, 16
        %v514 = vshll.u32 %v489, 16
        %v516 = vrot.slane %v514, 1
        %v517 = vor.u32 %v512, %v516
        %v519 = vshll.u32 %v490, 16
        %v521 = vrot.slane %v519, 1
        %v522 = vsel %vm510, %v517, %v521
        %v523 = vshrl.u32 %v490, 16
        %v525 = vor.u32 %v523, %v521
        %v527 = vshll.u32 %v491, 16
        %v529 = vrot.slane %v527, 1
        %v530 = vsel %vm510, %v525, %v529
        %v531 = vshrl.u32 %v491, 16
        %v533 = vor.u32 %v531, %v529
        %v535 = vshll.u32 %v492, 16
        %v537 = vrot.slane %v535, 1
        %v538 = vsel %vm510, %v533, %v537
        %v539 = vshrl.u32 %v492, 16
        %v541 = vor.u32 %v539, %v537
        %v543 = vshll.u32 %v493, 16
        %v545 = vrot.slane %v543, 1
        %v546 = vsel %vm510, %v541, %v545
        %v547 = vshrl.u32 %v493, 16
        %v549 = vor.u32 %v547, %v545
        %v551 = vshll.u32 %v494, 16
        %v553 = vrot.slane %v551, 1
        %v554 = vsel %vm510, %v549, %v553
        %v555 = vshrl.u32 %v494, 16
        %v557 = vor.u32 %v555, %v553
        %v559 = vshll.u32 %v495, 16
        %v561 = vrot.slane %v559, 1
        %v562 = vsel %vm510, %v557, %v561
        %v563 = vshrl.u32 %v495, 16
        %v565 = vor.u32 %v563, %v561
        %v567 = vshll.u32 %v496, 16
        %v569 = vrot.slane %v567, 1
        %v570 = vsel %vm510, %v565, %v569
        %v571 = vshrl.u32 %v496, 16
        %v573 = vor.u32 %v571, %v569
        %v575 = vshll.u32 %v497, 16
        %v577 = vrot.slane %v575, 1
        %v578 = vsel %vm510, %v573, %v577
        %v579 = vshrl.u32 %v497, 16
        %v581 = vor.u32 %v579, %v577
        %v583 = vshll.u32 %v498, 16
        %v585 = vrot.slane %v583, 1
        %v586 = vsel %vm510, %v581, %v585
        %v587 = vshrl.u32 %v498, 16
        %v589 = vor.u32 %v587, %v585
        %v591 = vshll.u32 %v499, 16
        %v593 = vrot.slane %v591, 1
        %v594 = vsel %vm510, %v589, %v593
        %v595 = vshrl.u32 %v499, 16
        %v597 = vor.u32 %v595, %v593
        %v599 = vshll.u32 %v500, 16
        %v601 = vrot.slane %v599, 1
        %v602 = vsel %vm510, %v597, %v601
        %v603 = vshrl.u32 %v500, 16
        %v605 = vor.u32 %v603, %v601
        %v607 = vshll.u32 %v501, 16
        %v609 = vrot.slane %v607, 1
        %v610 = vsel %vm510, %v605, %v609
        %v611 = vshrl.u32 %v501, 16
        %v613 = vor.u32 %v611, %v609
        %v615 = vshll.u32 %v502, 16
        %v617 = vrot.slane %v615, 1
        %v618 = vsel %vm510, %v613, %v617
        %v619 = vshrl.u32 %v502, 16
        %v621 = vor.u32 %v619, %v617
        %v623 = vshll.u32 %v503, 16
        %v625 = vrot.slane %v623, 1
        %v626 = vsel %vm510, %v621, %v625
        %v627 = vshrl.u32 %v503, 16
        %v629 = vor.u32 %v627, %v625
        %v631 = vshll.u32 %v504, 16
        %v633 = vrot.slane %v631, 1
        %v634 = vsel %vm510, %v629, %v633
        %v635 = vshrl.u32 %v504, 16
        %v637 = vor.u32 %v635, %v633
        %v639 = vshll.u32 %v505, 16
        %v641 = vrot.slane %v639, 1
        %v642 = vsel %vm510, %v637, %v641
        %v643 = vshrl.u32 %v505, 16
        %v645 = vor.u32 %v643, %v641
        %v647 = vshll.u32 %v506, 16
        %v649 = vrot.slane %v647, 1
        %v650 = vsel %vm510, %v645, %v649
        %v651 = vshrl.u32 %v506, 16
        %v653 = vor.u32 %v651, %v649
        %vm654 = vcmask 31744
        %v656 = vsel %vm654, %v522, 0
        %v659 = vsel %vm654, %v530, 0
        %v662 = vsel %vm654, %v538, 0
        %v665 = vsel %vm654, %v546, 0
        %v668 = vsel %vm654, %v554, 0
        %v671 = vsel %vm654, %v562, 0
        %v674 = vsel %vm654, %v570, 0
        %v677 = vsel %vm654, %v578, 0
        %v680 = vsel %vm654, %v586, 0
        %v683 = vsel %vm654, %v594, 0
        %v686 = vsel %vm654, %v602, 0
        %v689 = vsel %vm654, %v610, 0
        %v692 = vsel %vm654, %v618, 0
        %v695 = vsel %vm654, %v626, 0
        %v698 = vsel %vm654, %v634, 0
        %v701 = vsel %vm654, %v642, 0
        %v704 = vsel %vm654, %v650, 0
        %v707 = vsel %vm654, %v653, 0
        %vm709 = vcmask 1041408
        %v711 = vsel %vm709, %v509, 0
        %713 = vmatprep.subr.bf16.mxu0 0
        %714 = vmatpush1.bf16.msra.mxu0 %v711
        %715 = vmatprep.subr.bf16.mxu0 0
        %716 = vmatpush1.bf16.msra.mxu0 0
        %717 = vmatprep.subr.bf16.mxu0 0
        %718 = vmatpush1.bf16.msra.mxu0 0
        %719 = vmatprep.subr.bf16.mxu0 0
        %720 = vmatpush1.bf16.msra.mxu0 0
        %721 = vmatprep.subr.bf16.mxu0 0
        %722 = vmatpush1.bf16.msra.mxu0 0
        %723 = vmatprep.subr.bf16.mxu0 0
        %724 = vmatpush1.bf16.msra.mxu0 0
        %725 = vmatprep.subr.bf16.mxu0 0
        %726 = vmatpush1.bf16.msra.mxu0 0
        %727 = vmatprep.subr.bf16.mxu0 0
        %728 = vmatpush1.bf16.msra.mxu0 0
        %729 = vmatprep.subr.bf16.mxu0 0
        %730 = vmatpush1.bf16.msra.mxu0 0
        %731 = vmatprep.subr.bf16.mxu0 0
        %732 = vmatpush1.bf16.msra.mxu0 0
        %733 = vmatprep.subr.bf16.mxu0 0
        %734 = vmatpush1.bf16.msra.mxu0 0
        %735 = vmatprep.subr.bf16.mxu0 0
        %736 = vmatpush1.bf16.msra.mxu0 0
        %737 = vmatprep.subr.bf16.mxu0 0
        %738 = vmatpush1.bf16.msra.mxu0 0
        %739 = vmatprep.subr.bf16.mxu0 0
        %740 = vmatpush1.bf16.msra.mxu0 0
        %741 = vmatprep.subr.bf16.mxu0 0
        %742 = vmatpush1.bf16.msra.mxu0 0
        %743 = vmatprep.subr.bf16.mxu0 0
        %744 = vmatpush1.bf16.msra.mxu0 0
        %745 = vmatprep.mubr.bf16.mxu0 0
        %746 = vmatmul.mubr.bf16.gmra.mrb[0].mxu0 %v656
        %v747 = vpop.f32.mrb[0].mxu0
        %v748 = vadd.f32 0.0, %v747
        %v749 = vpop.f32.mrb[0].mxu0
        %v750 = vpop.f32.mrb[0].mxu0
        %v751 = vadd.f32 0.0, %v750
        %v752 = vpop.f32.mrb[0].mxu0
        %753 = vmatprep.mubr.bf16.mxu0 0
        %754 = vmatmul.mubr.bf16.gmra.mrb[0].mxu0 %v659
        %v755 = vpop.f32.mrb[0].mxu0
        %v756 = vadd.f32 0.0, %v755
        %v757 = vpop.f32.mrb[0].mxu0
        %v758 = vpop.f32.mrb[0].mxu0
        %v759 = vadd.f32 0.0, %v758
        %v760 = vpop.f32.mrb[0].mxu0
        %761 = vmatprep.mubr.bf16.mxu0 0
        %762 = vmatmul.mubr.bf16.gmra.mrb[0].mxu0 %v662
        %v763 = vpop.f32.mrb[0].mxu0
        %v764 = vadd.f32 0.0, %v763
        %v765 = vpop.f32.mrb[0].mxu0
        %v766 = vpop.f32.mrb[0].mxu0
        %v767 = vadd.f32 0.0, %v766
        %v768 = vpop.f32.mrb[0].mxu0
        %769 = vmatprep.mubr.bf16.mxu0 0
        %770 = vmatmul.mubr.bf16.gmra.mrb[0].mxu0 %v665
        %v771 = vpop.f32.mrb[0].mxu0
        %v772 = vadd.f32 0.0, %v771
        %v773 = vpop.f32.mrb[0].mxu0
        %v774 = vpop.f32.mrb[0].mxu0
        %v775 = vadd.f32 0.0, %v774
        %v776 = vpop.f32.mrb[0].mxu0
        %777 = vmatprep.mubr.bf16.mxu0 0
        %778 = vmatmul.mubr.bf16.gmra.mrb[0].mxu0 %v668
        %v779 = vpop.f32.mrb[0].mxu0
        %v780 = vadd.f32 0.0, %v779
        %v781 = vpop.f32.mrb[0].mxu0
        %v782 = vpop.f32.mrb[0].mxu0
        %v783 = vadd.f32 0.0, %v782
        %v784 = vpop.f32.mrb[0].mxu0
        %785 = vmatprep.mubr.bf16.mxu0 0
        %786 = vmatmul.mubr.bf16.gmra.mrb[0].mxu0 %v671
        %v787 = vpop.f32.mrb[0].mxu0
        %v788 = vadd.f32 0.0, %v787
        %v789 = vpop.f32.mrb[0].mxu0
        %v790 = vpop.f32.mrb[0].mxu0
        %v791 = vadd.f32 0.0, %v790
        %v792 = vpop.f32.mrb[0].mxu0
        %793 = vmatprep.mubr.bf16.mxu0 0
        %794 = vmatmul.mubr.bf16.gmra.mrb[0].mxu0 %v674
        %v795 = vpop.f32.mrb[0].mxu0
        %v796 = vadd.f32 0.0, %v795
        %v797 = vpop.f32.mrb[0].mxu0
        %v798 = vpop.f32.mrb[0].mxu0
        %v799 = vadd.f32 0.0, %v798
        %v800 = vpop.f32.mrb[0].mxu0
        %801 = vmatprep.mubr.bf16.mxu0 0
        %802 = vmatmul.mubr.bf16.gmra.mrb[0].mxu0 %v677
        %v803 = vpop.f32.mrb[0].mxu0
        %v804 = vadd.f32 0.0, %v803
        %v805 = vpop.f32.mrb[0].mxu0
        %v806 = vpop.f32.mrb[0].mxu0
        %v807 = vadd.f32 0.0, %v806
        %v808 = vpop.f32.mrb[0].mxu0
        %809 = vmatprep.mubr.bf16.mxu0 0
        %810 = vmatmul.mubr.bf16.gmra.mrb[0].mxu0 %v680
        %v811 = vpop.f32.mrb[0].mxu0
        %v812 = vadd.f32 0.0, %v811
        %v813 = vpop.f32.mrb[0].mxu0
        %v814 = vpop.f32.mrb[0].mxu0
        %v815 = vadd.f32 0.0, %v814
        %v816 = vpop.f32.mrb[0].mxu0
        %817 = vmatprep.mubr.bf16.mxu0 0
        %818 = vmatmul.mubr.bf16.gmra.mrb[0].mxu0 %v683
        %v819 = vpop.f32.mrb[0].mxu0
        %v820 = vadd.f32 0.0, %v819
        %v821 = vpop.f32.mrb[0].mxu0
        %v822 = vpop.f32.mrb[0].mxu0
        %v823 = vadd.f32 0.0, %v822
        %v824 = vpop.f32.mrb[0].mxu0
        %825 = vmatprep.mubr.bf16.mxu0 0
        %826 = vmatmul.mubr.bf16.gmra.mrb[0].mxu0 %v686
        %v827 = vpop.f32.mrb[0].mxu0
        %v828 = vadd.f32 0.0, %v827
        %v829 = vpop.f32.mrb[0].mxu0
        %v830 = vpop.f32.mrb[0].mxu0
        %v831 = vadd.f32 0.0, %v830
        %v832 = vpop.f32.mrb[0].mxu0
        %833 = vmatprep.mubr.bf16.mxu0 0
        %834 = vmatmul.mubr.bf16.gmra.mrb[0].mxu0 %v689
        %v835 = vpop.f32.mrb[0].mxu0
        %v836 = vadd.f32 0.0, %v835
        %v837 = vpop.f32.mrb[0].mxu0
        %v838 = vpop.f32.mrb[0].mxu0
        %v839 = vadd.f32 0.0, %v838
        %v840 = vpop.f32.mrb[0].mxu0
        %841 = vmatprep.mubr.bf16.mxu0 0
        %842 = vmatmul.mubr.bf16.gmra.mrb[0].mxu0 %v692
        %v843 = vpop.f32.mrb[0].mxu0
        %v844 = vadd.f32 0.0, %v843
        %v845 = vpop.f32.mrb[0].mxu0
        %v846 = vpop.f32.mrb[0].mxu0
        %v847 = vadd.f32 0.0, %v846
        %v848 = vpop.f32.mrb[0].mxu0
        %849 = vmatprep.mubr.bf16.mxu0 0
        %850 = vmatmul.mubr.bf16.gmra.mrb[0].mxu0 %v695
        %v851 = vpop.f32.mrb[0].mxu0
        %v852 = vadd.f32 0.0, %v851
        %v853 = vpop.f32.mrb[0].mxu0
        %v854 = vpop.f32.mrb[0].mxu0
        %v855 = vadd.f32 0.0, %v854
        %v856 = vpop.f32.mrb[0].mxu0
        %857 = vmatprep.mubr.bf16.mxu0 0
        %858 = vmatmul.mubr.bf16.gmra.mrb[0].mxu0 %v698
        %v859 = vpop.f32.mrb[0].mxu0
        %v860 = vadd.f32 0.0, %v859
        %v861 = vpop.f32.mrb[0].mxu0
        %v862 = vpop.f32.mrb[0].mxu0
        %v863 = vadd.f32 0.0, %v862
        %v864 = vpop.f32.mrb[0].mxu0
        %865 = vmatprep.mubr.bf16.mxu0 0
        %866 = vmatmul.mubr.bf16.gmra.mrb[0].mxu0 %v701
        %v867 = vpop.f32.mrb[0].mxu0
        %v868 = vadd.f32 0.0, %v867
        %v869 = vpop.f32.mrb[0].mxu0
        %v870 = vpop.f32.mrb[0].mxu0
        %v871 = vadd.f32 0.0, %v870
        %v872 = vpop.f32.mrb[0].mxu0
        %873 = vmatprep.mubr.bf16.mxu0 0
        %874 = vmatmul.mubr.bf16.gmra.mrb[0].mxu0 %v704
        %v875 = vpop.f32.mrb[0].mxu0
        %v876 = vadd.f32 0.0, %v875
        %v877 = vpop.f32.mrb[0].mxu0
        %v878 = vpop.f32.mrb[0].mxu0
        %v879 = vadd.f32 0.0, %v878
        %v880 = vpop.f32.mrb[0].mxu0
        %881 = vmatprep.mubr.bf16.mxu0 0
        %882 = vmatmul.mubr.bf16.gmra.mrb[0].mxu0 %v707
        %v883 = vpop.f32.mrb[0].mxu0
        %v884 = vadd.f32 0.0, %v883
        %v885 = vpop.f32.mrb[0].mxu0
        %v886 = vpop.f32.mrb[0].mxu0
        %v887 = vadd.f32 0.0, %v886
        %v888 = vpop.f32.mrb[0].mxu0
        %889 = vdwg.mxu0
        %v890 = vsel %vm654, %v489, 0
        %v892 = vsel %vm654, %v490, 0
        %v894 = vsel %vm654, %v491, 0
        %v896 = vsel %vm654, %v492, 0
        %v898 = vsel %vm654, %v493, 0
        %v900 = vsel %vm654, %v494, 0
        %v902 = vsel %vm654, %v495, 0
        %v904 = vsel %vm654, %v496, 0
        %v906 = vsel %vm654, %v497, 0
        %v908 = vsel %vm654, %v498, 0
        %v910 = vsel %vm654, %v499, 0
        %v912 = vsel %vm654, %v500, 0
        %v914 = vsel %vm654, %v501, 0
        %v916 = vsel %vm654, %v502, 0
        %v918 = vsel %vm654, %v503, 0
        %v920 = vsel %vm654, %v504, 0
        %v922 = vsel %vm654, %v505, 0
        %v924 = vsel %vm654, %v506, 0
        %v927 = vsel %vm709, %v507, 0
        %929 = vmatprep.subr.bf16.mxu0 0
        %930 = vmatpush1.bf16.msra.mxu0 %v927
        %931 = vmatprep.subr.bf16.mxu0 0
        %932 = vmatpush1.bf16.msra.mxu0 0
        %933 = vmatprep.subr.bf16.mxu0 0
        %934 = vmatpush1.bf16.msra.mxu0 0
        %935 = vmatprep.subr.bf16.mxu0 0
        %936 = vmatpush1.bf16.msra.mxu0 0
        %937 = vmatprep.subr.bf16.mxu0 0
        %938 = vmatpush1.bf16.msra.mxu0 0
        %939 = vmatprep.subr.bf16.mxu0 0
        %940 = vmatpush1.bf16.msra.mxu0 0
        %941 = vmatprep.subr.bf16.mxu0 0
        %942 = vmatpush1.bf16.msra.mxu0 0
        %943 = vmatprep.subr.bf16.mxu0 0
        %944 = vmatpush1.bf16.msra.mxu0 0
        %945 = vmatprep.subr.bf16.mxu0 0
        %946 = vmatpush1.bf16.msra.mxu0 0
        %947 = vmatprep.subr.bf16.mxu0 0
        %948 = vmatpush1.bf16.msra.mxu0 0
        %949 = vmatprep.subr.bf16.mxu0 0
        %950 = vmatpush1.bf16.msra.mxu0 0
        %951 = vmatprep.subr.bf16.mxu0 0
        %952 = vmatpush1.bf16.msra.mxu0 0
        %953 = vmatprep.subr.bf16.mxu0 0
        %954 = vmatpush1.bf16.msra.mxu0 0
        %955 = vmatprep.subr.bf16.mxu0 0
        %956 = vmatpush1.bf16.msra.mxu0 0
        %957 = vmatprep.subr.bf16.mxu0 0
        %958 = vmatpush1.bf16.msra.mxu0 0
        %959 = vmatprep.subr.bf16.mxu0 0
        %960 = vmatpush1.bf16.msra.mxu0 0
        %961 = vmatprep.mubr.bf16.mxu0 0
        %962 = vmatmul.mubr.bf16.gmra.mrb[0].mxu0 %v890
        %v963 = vpop.f32.mrb[0].mxu0
        %v964 = vadd.f32 %v748, %v963
        %v965 = vpop.f32.mrb[0].mxu0
        %v966 = vpop.f32.mrb[0].mxu0
        %v967 = vadd.f32 %v751, %v966
        %v968 = vpop.f32.mrb[0].mxu0
        %969 = vmatprep.mubr.bf16.mxu0 0
        %970 = vmatmul.mubr.bf16.gmra.mrb[0].mxu0 %v892
        %v971 = vpop.f32.mrb[0].mxu0
        %v972 = vadd.f32 %v756, %v971
        %v973 = vpop.f32.mrb[0].mxu0
        %v974 = vpop.f32.mrb[0].mxu0
        %v975 = vadd.f32 %v759, %v974
        %v976 = vpop.f32.mrb[0].mxu0
        %977 = vmatprep.mubr.bf16.mxu0 0
        %978 = vmatmul.mubr.bf16.gmra.mrb[0].mxu0 %v894
        %v979 = vpop.f32.mrb[0].mxu0
        %v980 = vadd.f32 %v764, %v979
        %v981 = vpop.f32.mrb[0].mxu0
        %v982 = vpop.f32.mrb[0].mxu0
        %v983 = vadd.f32 %v767, %v982
        %v984 = vpop.f32.mrb[0].mxu0
        %985 = vmatprep.mubr.bf16.mxu0 0
        %986 = vmatmul.mubr.bf16.gmra.mrb[0].mxu0 %v896
        %v987 = vpop.f32.mrb[0].mxu0
        %v988 = vadd.f32 %v772, %v987
        %v989 = vpop.f32.mrb[0].mxu0
        %v990 = vpop.f32.mrb[0].mxu0
        %v991 = vadd.f32 %v775, %v990
        %v992 = vpop.f32.mrb[0].mxu0
        %993 = vmatprep.mubr.bf16.mxu0 0
        %994 = vmatmul.mubr.bf16.gmra.mrb[0].mxu0 %v898
        %v995 = vpop.f32.mrb[0].mxu0
        %v996 = vadd.f32 %v780, %v995
        %v997 = vpop.f32.mrb[0].mxu0
        %v998 = vpop.f32.mrb[0].mxu0
        %v999 = vadd.f32 %v783, %v998
        %v1000 = vpop.f32.mrb[0].mxu0
        %1001 = vmatprep.mubr.bf16.mxu0 0
        %1002 = vmatmul.mubr.bf16.gmra.mrb[0].mxu0 %v900
        %v1003 = vpop.f32.mrb[0].mxu0
        %v1004 = vadd.f32 %v788, %v1003
        %v1005 = vpop.f32.mrb[0].mxu0
        %v1006 = vpop.f32.mrb[0].mxu0
        %v1007 = vadd.f32 %v791, %v1006
        %v1008 = vpop.f32.mrb[0].mxu0
        %1009 = vmatprep.mubr.bf16.mxu0 0
        %1010 = vmatmul.mubr.bf16.gmra.mrb[0].mxu0 %v902
        %v1011 = vpop.f32.mrb[0].mxu0
        %v1012 = vadd.f32 %v796, %v1011
        %v1013 = vpop.f32.mrb[0].mxu0
        %v1014 = vpop.f32.mrb[0].mxu0
        %v1015 = vadd.f32 %v799, %v1014
        %v1016 = vpop.f32.mrb[0].mxu0
        %1017 = vmatprep.mubr.bf16.mxu0 0
        %1018 = vmatmul.mubr.bf16.gmra.mrb[0].mxu0 %v904
        %v1019 = vpop.f32.mrb[0].mxu0
        %v1020 = vadd.f32 %v804, %v1019
        %v1021 = vpop.f32.mrb[0].mxu0
        %v1022 = vpop.f32.mrb[0].mxu0
        %v1023 = vadd.f32 %v807, %v1022
        %v1024 = vpop.f32.mrb[0].mxu0
        %1025 = vmatprep.mubr.bf16.mxu0 0
        %1026 = vmatmul.mubr.bf16.gmra.mrb[0].mxu0 %v906
        %v1027 = vpop.f32.mrb[0].mxu0
        %v1028 = vadd.f32 %v812, %v1027
        %v1029 = vpop.f32.mrb[0].mxu0
        %v1030 = vpop.f32.mrb[0].mxu0
        %v1031 = vadd.f32 %v815, %v1030
        %v1032 = vpop.f32.mrb[0].mxu0
        %1033 = vmatprep.mubr.bf16.mxu0 0
        %1034 = vmatmul.mubr.bf16.gmra.mrb[0].mxu0 %v908
        %v1035 = vpop.f32.mrb[0].mxu0
        %v1036 = vadd.f32 %v820, %v1035
        %v1037 = vpop.f32.mrb[0].mxu0
        %v1038 = vpop.f32.mrb[0].mxu0
        %v1039 = vadd.f32 %v823, %v1038
        %v1040 = vpop.f32.mrb[0].mxu0
        %1041 = vmatprep.mubr.bf16.mxu0 0
        %1042 = vmatmul.mubr.bf16.gmra.mrb[0].mxu0 %v910
        %v1043 = vpop.f32.mrb[0].mxu0
        %v1044 = vadd.f32 %v828, %v1043
        %v1045 = vpop.f32.mrb[0].mxu0
        %v1046 = vpop.f32.mrb[0].mxu0
        %v1047 = vadd.f32 %v831, %v1046
        %v1048 = vpop.f32.mrb[0].mxu0
        %1049 = vmatprep.mubr.bf16.mxu0 0
        %1050 = vmatmul.mubr.bf16.gmra.mrb[0].mxu0 %v912
        %v1051 = vpop.f32.mrb[0].mxu0
        %v1052 = vadd.f32 %v836, %v1051
        %v1053 = vpop.f32.mrb[0].mxu0
        %v1054 = vpop.f32.mrb[0].mxu0
        %v1055 = vadd.f32 %v839, %v1054
        %v1056 = vpop.f32.mrb[0].mxu0
        %1057 = vmatprep.mubr.bf16.mxu0 0
        %1058 = vmatmul.mubr.bf16.gmra.mrb[0].mxu0 %v914
        %v1059 = vpop.f32.mrb[0].mxu0
        %v1060 = vadd.f32 %v844, %v1059
        %v1061 = vpop.f32.mrb[0].mxu0
        %v1062 = vpop.f32.mrb[0].mxu0
        %v1063 = vadd.f32 %v847, %v1062
        %v1064 = vpop.f32.mrb[0].mxu0
        %1065 = vmatprep.mubr.bf16.mxu0 0
        %1066 = vmatmul.mubr.bf16.gmra.mrb[0].mxu0 %v916
        %v1067 = vpop.f32.mrb[0].mxu0
        %v1068 = vadd.f32 %v852, %v1067
        %v1069 = vpop.f32.mrb[0].mxu0
        %v1070 = vpop.f32.mrb[0].mxu0
        %v1071 = vadd.f32 %v855, %v1070
        %v1072 = vpop.f32.mrb[0].mxu0
        %1073 = vmatprep.mubr.bf16.mxu0 0
        %1074 = vmatmul.mubr.bf16.gmra.mrb[0].mxu0 %v918
        %v1075 = vpop.f32.mrb[0].mxu0
        %v1076 = vadd.f32 %v860, %v1075
        %v1077 = vpop.f32.mrb[0].mxu0
        %v1078 = vpop.f32.mrb[0].mxu0
        %v1079 = vadd.f32 %v863, %v1078
        %v1080 = vpop.f32.mrb[0].mxu0
        %1081 = vmatprep.mubr.bf16.mxu0 0
        %1082 = vmatmul.mubr.bf16.gmra.mrb[0].mxu0 %v920
        %v1083 = vpop.f32.mrb[0].mxu0
        %v1084 = vadd.f32 %v868, %v1083
        %v1085 = vpop.f32.mrb[0].mxu0
        %v1086 = vpop.f32.mrb[0].mxu0
        %v1087 = vadd.f32 %v871, %v1086
        %v1088 = vpop.f32.mrb[0].mxu0
        %1089 = vmatprep.mubr.bf16.mxu0 0
        %1090 = vmatmul.mubr.bf16.gmra.mrb[0].mxu0 %v922
        %v1091 = vpop.f32.mrb[0].mxu0
        %v1092 = vadd.f32 %v876, %v1091
        %v1093 = vpop.f32.mrb[0].mxu0
        %v1094 = vpop.f32.mrb[0].mxu0
        %v1095 = vadd.f32 %v879, %v1094
        %v1096 = vpop.f32.mrb[0].mxu0
        %1097 = vmatprep.mubr.bf16.mxu0 0
        %1098 = vmatmul.mubr.bf16.gmra.mrb[0].mxu0 %v924
        %v1099 = vpop.f32.mrb[0].mxu0
        %v1100 = vadd.f32 %v884, %v1099
        %v1101 = vpop.f32.mrb[0].mxu0
        %v1102 = vpop.f32.mrb[0].mxu0
        %v1103 = vadd.f32 %v887, %v1102
        %v1104 = vpop.f32.mrb[0].mxu0
        %1105 = vdwg.mxu0
        %s1106 = scalar_lea.vmem %s2, 4
        %v1107 = vld [vmem:[%s1106] sm:$0x3]
        %vm1126 = vcmask 1046528
        %v1127 = vrot.slane %v489, 1
        %v1128 = vrot.slane %v490, 1
        %v1129 = vsel %vm1126, %v1127, %v1128
        %v1130 = vrot.slane %v491, 1
        %v1131 = vsel %vm1126, %v1128, %v1130
        %v1132 = vrot.slane %v492, 1
        %v1133 = vsel %vm1126, %v1130, %v1132
        %v1134 = vrot.slane %v493, 1
        %v1135 = vsel %vm1126, %v1132, %v1134
        %v1136 = vrot.slane %v494, 1
        %v1137 = vsel %vm1126, %v1134, %v1136
        %v1138 = vrot.slane %v495, 1
        %v1139 = vsel %vm1126, %v1136, %v1138
        %v1140 = vrot.slane %v496, 1
        %v1141 = vsel %vm1126, %v1138, %v1140
        %v1142 = vrot.slane %v497, 1
        %v1143 = vsel %vm1126, %v1140, %v1142
        %v1144 = vrot.slane %v498, 1
        %v1145 = vsel %vm1126, %v1142, %v1144
        %v1146 = vrot.slane %v499, 1
        %v1147 = vsel %vm1126, %v1144, %v1146
        %v1148 = vrot.slane %v500, 1
        %v1149 = vsel %vm1126, %v1146, %v1148
        %v1150 = vrot.slane %v501, 1
        %v1151 = vsel %vm1126, %v1148, %v1150
        %v1152 = vrot.slane %v502, 1
        %v1153 = vsel %vm1126, %v1150, %v1152
        %v1154 = vrot.slane %v503, 1
        %v1155 = vsel %vm1126, %v1152, %v1154
        %v1156 = vrot.slane %v504, 1
        %v1157 = vsel %vm1126, %v1154, %v1156
        %v1158 = vrot.slane %v505, 1
        %v1159 = vsel %vm1126, %v1156, %v1158
        %v1160 = vrot.slane %v506, 1
        %v1161 = vsel %vm1126, %v1158, %v1160
        %v1163 = vsel %vm654, %v1129, 0
        %v1166 = vsel %vm654, %v1131, 0
        %v1169 = vsel %vm654, %v1133, 0
        %v1172 = vsel %vm654, %v1135, 0
        %v1175 = vsel %vm654, %v1137, 0
        %v1178 = vsel %vm654, %v1139, 0
        %v1181 = vsel %vm654, %v1141, 0
        %v1184 = vsel %vm654, %v1143, 0
        %v1187 = vsel %vm654, %v1145, 0
        %v1190 = vsel %vm654, %v1147, 0
        %v1193 = vsel %vm654, %v1149, 0
        %v1196 = vsel %vm654, %v1151, 0
        %v1199 = vsel %vm654, %v1153, 0
        %v1202 = vsel %vm654, %v1155, 0
        %v1205 = vsel %vm654, %v1157, 0
        %v1208 = vsel %vm654, %v1159, 0
        %v1211 = vsel %vm654, %v1161, 0
        %v1214 = vsel %vm654, %v1160, 0
        %v1217 = vsel %vm709, %v1107, 0
        %1219 = vmatprep.subr.bf16.mxu0 0
        %1220 = vmatpush1.bf16.msra.mxu0 %v1217
        %1221 = vmatprep.subr.bf16.mxu0 0
        %1222 = vmatpush1.bf16.msra.mxu0 0
        %1223 = vmatprep.subr.bf16.mxu0 0
        %1224 = vmatpush1.bf16.msra.mxu0 0
        %1225 = vmatprep.subr.bf16.mxu0 0
        %1226 = vmatpush1.bf16.msra.mxu0 0
        %1227 = vmatprep.subr.bf16.mxu0 0
        %1228 = vmatpush1.bf16.msra.mxu0 0
        %1229 = vmatprep.subr.bf16.mxu0 0
        %1230 = vmatpush1.bf16.msra.mxu0 0
        %1231 = vmatprep.subr.bf16.mxu0 0
        %1232 = vmatpush1.bf16.msra.mxu0 0
        %1233 = vmatprep.subr.bf16.mxu0 0
        %1234 = vmatpush1.bf16.msra.mxu0 0
        %1235 = vmatprep.subr.bf16.mxu0 0
        %1236 = vmatpush1.bf16.msra.mxu0 0
        %1237 = vmatprep.subr.bf16.mxu0 0
        %1238 = vmatpush1.bf16.msra.mxu0 0
        %1239 = vmatprep.subr.bf16.mxu0 0
        %1240 = vmatpush1.bf16.msra.mxu0 0
        %1241 = vmatprep.subr.bf16.mxu0 0
        %1242 = vmatpush1.bf16.msra.mxu0 0
        %1243 = vmatprep.subr.bf16.mxu0 0
        %1244 = vmatpush1.bf16.msra.mxu0 0
        %1245 = vmatprep.subr.bf16.mxu0 0
        %1246 = vmatpush1.bf16.msra.mxu0 0
        %1247 = vmatprep.subr.bf16.mxu0 0
        %1248 = vmatpush1.bf16.msra.mxu0 0
        %1249 = vmatprep.subr.bf16.mxu0 0
        %1250 = vmatpush1.bf16.msra.mxu0 0
        %1251 = vmatprep.mubr.bf16.mxu0 0
        %1252 = vmatmul.mubr.bf16.gmra.mrb[0].mxu0 %v1163
        %v1253 = vpop.f32.mrb[0].mxu0
        %v1254 = vadd.f32 0.0, %v1253
        %v1255 = vpop.f32.mrb[0].mxu0
        %v1256 = vpop.f32.mrb[0].mxu0
        %v1257 = vadd.f32 0.0, %v1256
        %v1258 = vpop.f32.mrb[0].mxu0
        %1259 = vmatprep.mubr.bf16.mxu0 0
        %1260 = vmatmul.mubr.bf16.gmra.mrb[0].mxu0 %v1166
        %v1261 = vpop.f32.mrb[0].mxu0
        %v1262 = vadd.f32 0.0, %v1261
        %v1263 = vpop.f32.mrb[0].mxu0
        %v1264 = vpop.f32.mrb[0].mxu0
        %v1265 = vadd.f32 0.0, %v1264
        %v1266 = vpop.f32.mrb[0].mxu0
        %1267 = vmatprep.mubr.bf16.mxu0 0
        %1268 = vmatmul.mubr.bf16.gmra.mrb[0].mxu0 %v1169
        %v1269 = vpop.f32.mrb[0].mxu0
        %v1270 = vadd.f32 0.0, %v1269
        %v1271 = vpop.f32.mrb[0].mxu0
        %v1272 = vpop.f32.mrb[0].mxu0
        %v1273 = vadd.f32 0.0, %v1272
        %v1274 = vpop.f32.mrb[0].mxu0
        %1275 = vmatprep.mubr.bf16.mxu0 0
        %1276 = vmatmul.mubr.bf16.gmra.mrb[0].mxu0 %v1172
        %v1277 = vpop.f32.mrb[0].mxu0
        %v1278 = vadd.f32 0.0, %v1277
        %v1279 = vpop.f32.mrb[0].mxu0
        %v1280 = vpop.f32.mrb[0].mxu0
        %v1281 = vadd.f32 0.0, %v1280
        %v1282 = vpop.f32.mrb[0].mxu0
        %1283 = vmatprep.mubr.bf16.mxu0 0
        %1284 = vmatmul.mubr.bf16.gmra.mrb[0].mxu0 %v1175
        %v1285 = vpop.f32.mrb[0].mxu0
        %v1286 = vadd.f32 0.0, %v1285
        %v1287 = vpop.f32.mrb[0].mxu0
        %v1288 = vpop.f32.mrb[0].mxu0
        %v1289 = vadd.f32 0.0, %v1288
        %v1290 = vpop.f32.mrb[0].mxu0
        %1291 = vmatprep.mubr.bf16.mxu0 0
        %1292 = vmatmul.mubr.bf16.gmra.mrb[0].mxu0 %v1178
        %v1293 = vpop.f32.mrb[0].mxu0
        %v1294 = vadd.f32 0.0, %v1293
        %v1295 = vpop.f32.mrb[0].mxu0
        %v1296 = vpop.f32.mrb[0].mxu0
        %v1297 = vadd.f32 0.0, %v1296
        %v1298 = vpop.f32.mrb[0].mxu0
        %1299 = vmatprep.mubr.bf16.mxu0 0
        %1300 = vmatmul.mubr.bf16.gmra.mrb[0].mxu0 %v1181
        %v1301 = vpop.f32.mrb[0].mxu0
        %v1302 = vadd.f32 0.0, %v1301
        %v1303 = vpop.f32.mrb[0].mxu0
        %v1304 = vpop.f32.mrb[0].mxu0
        %v1305 = vadd.f32 0.0, %v1304
        %v1306 = vpop.f32.mrb[0].mxu0
        %1307 = vmatprep.mubr.bf16.mxu0 0
        %1308 = vmatmul.mubr.bf16.gmra.mrb[0].mxu0 %v1184
        %v1309 = vpop.f32.mrb[0].mxu0
        %v1310 = vadd.f32 0.0, %v1309
        %v1311 = vpop.f32.mrb[0].mxu0
        %v1312 = vpop.f32.mrb[0].mxu0
        %v1313 = vadd.f32 0.0, %v1312
        %v1314 = vpop.f32.mrb[0].mxu0
        %1315 = vmatprep.mubr.bf16.mxu0 0
        %1316 = vmatmul.mubr.bf16.gmra.mrb[0].mxu0 %v1187
        %v1317 = vpop.f32.mrb[0].mxu0
        %v1318 = vadd.f32 0.0, %v1317
        %v1319 = vpop.f32.mrb[0].mxu0
        %v1320 = vpop.f32.mrb[0].mxu0
        %v1321 = vadd.f32 0.0, %v1320
        %v1322 = vpop.f32.mrb[0].mxu0
        %1323 = vmatprep.mubr.bf16.mxu0 0
        %1324 = vmatmul.mubr.bf16.gmra.mrb[0].mxu0 %v1190
        %v1325 = vpop.f32.mrb[0].mxu0
        %v1326 = vadd.f32 0.0, %v1325
        %v1327 = vpop.f32.mrb[0].mxu0
        %v1328 = vpop.f32.mrb[0].mxu0
        %v1329 = vadd.f32 0.0, %v1328
        %v1330 = vpop.f32.mrb[0].mxu0
        %1331 = vmatprep.mubr.bf16.mxu0 0
        %1332 = vmatmul.mubr.bf16.gmra.mrb[0].mxu0 %v1193
        %v1333 = vpop.f32.mrb[0].mxu0
        %v1334 = vadd.f32 0.0, %v1333
        %v1335 = vpop.f32.mrb[0].mxu0
        %v1336 = vpop.f32.mrb[0].mxu0
        %v1337 = vadd.f32 0.0, %v1336
        %v1338 = vpop.f32.mrb[0].mxu0
        %1339 = vmatprep.mubr.bf16.mxu0 0
        %1340 = vmatmul.mubr.bf16.gmra.mrb[0].mxu0 %v1196
        %v1341 = vpop.f32.mrb[0].mxu0
        %v1342 = vadd.f32 0.0, %v1341
        %v1343 = vpop.f32.mrb[0].mxu0
        %v1344 = vpop.f32.mrb[0].mxu0
        %v1345 = vadd.f32 0.0, %v1344
        %v1346 = vpop.f32.mrb[0].mxu0
        %1347 = vmatprep.mubr.bf16.mxu0 0
        %1348 = vmatmul.mubr.bf16.gmra.mrb[0].mxu0 %v1199
        %v1349 = vpop.f32.mrb[0].mxu0
        %v1350 = vadd.f32 0.0, %v1349
        %v1351 = vpop.f32.mrb[0].mxu0
        %v1352 = vpop.f32.mrb[0].mxu0
        %v1353 = vadd.f32 0.0, %v1352
        %v1354 = vpop.f32.mrb[0].mxu0
        %1355 = vmatprep.mubr.bf16.mxu0 0
        %1356 = vmatmul.mubr.bf16.gmra.mrb[0].mxu0 %v1202
        %v1357 = vpop.f32.mrb[0].mxu0
        %v1358 = vadd.f32 0.0, %v1357
        %v1359 = vpop.f32.mrb[0].mxu0
        %v1360 = vpop.f32.mrb[0].mxu0
        %v1361 = vadd.f32 0.0, %v1360
        %v1362 = vpop.f32.mrb[0].mxu0
        %1363 = vmatprep.mubr.bf16.mxu0 0
        %1364 = vmatmul.mubr.bf16.gmra.mrb[0].mxu0 %v1205
        %v1365 = vpop.f32.mrb[0].mxu0
        %v1366 = vadd.f32 0.0, %v1365
        %v1367 = vpop.f32.mrb[0].mxu0
        %v1368 = vpop.f32.mrb[0].mxu0
        %v1369 = vadd.f32 0.0, %v1368
        %v1370 = vpop.f32.mrb[0].mxu0
        %1371 = vmatprep.mubr.bf16.mxu0 0
        %1372 = vmatmul.mubr.bf16.gmra.mrb[0].mxu0 %v1208
        %v1373 = vpop.f32.mrb[0].mxu0
        %v1374 = vadd.f32 0.0, %v1373
        %v1375 = vpop.f32.mrb[0].mxu0
        %v1376 = vpop.f32.mrb[0].mxu0
        %v1377 = vadd.f32 0.0, %v1376
        %v1378 = vpop.f32.mrb[0].mxu0
        %1379 = vmatprep.mubr.bf16.mxu0 0
        %1380 = vmatmul.mubr.bf16.gmra.mrb[0].mxu0 %v1211
        %v1381 = vpop.f32.mrb[0].mxu0
        %v1382 = vadd.f32 0.0, %v1381
        %v1383 = vpop.f32.mrb[0].mxu0
        %v1384 = vpop.f32.mrb[0].mxu0
        %v1385 = vadd.f32 0.0, %v1384
        %v1386 = vpop.f32.mrb[0].mxu0
        %1387 = vmatprep.mubr.bf16.mxu0 0
        %1388 = vmatmul.mubr.bf16.gmra.mrb[0].mxu0 %v1214
        %v1389 = vpop.f32.mrb[0].mxu0
        %v1390 = vadd.f32 0.0, %v1389
        %v1391 = vpop.f32.mrb[0].mxu0
        %v1392 = vpop.f32.mrb[0].mxu0
        %v1393 = vadd.f32 0.0, %v1392
        %v1394 = vpop.f32.mrb[0].mxu0
        %1395 = vdwg.mxu0
        %v1396 = vadd.f32 %v964, %v1254
        %v1397 = vadd.f32 %v967, %v1257
        %v1398 = vadd.f32 %v972, %v1262
        %v1399 = vadd.f32 %v975, %v1265
        %v1400 = vadd.f32 %v980, %v1270
        %v1401 = vadd.f32 %v983, %v1273
        %v1402 = vadd.f32 %v988, %v1278
        %v1403 = vadd.f32 %v991, %v1281
        %v1404 = vadd.f32 %v996, %v1286
        %v1405 = vadd.f32 %v999, %v1289
        %v1406 = vadd.f32 %v1004, %v1294
        %v1407 = vadd.f32 %v1007, %v1297
        %v1408 = vadd.f32 %v1012, %v1302
        %v1409 = vadd.f32 %v1015, %v1305
        %v1410 = vadd.f32 %v1020, %v1310
        %v1411 = vadd.f32 %v1023, %v1313
        %v1412 = vadd.f32 %v1028, %v1318
        %v1413 = vadd.f32 %v1031, %v1321
        %v1414 = vadd.f32 %v1036, %v1326
        %v1415 = vadd.f32 %v1039, %v1329
        %v1416 = vadd.f32 %v1044, %v1334
        %v1417 = vadd.f32 %v1047, %v1337
        %v1418 = vadd.f32 %v1052, %v1342
        %v1419 = vadd.f32 %v1055, %v1345
        %v1420 = vadd.f32 %v1060, %v1350
        %v1421 = vadd.f32 %v1063, %v1353
        %v1422 = vadd.f32 %v1068, %v1358
        %v1423 = vadd.f32 %v1071, %v1361
        %v1424 = vadd.f32 %v1076, %v1366
        %v1425 = vadd.f32 %v1079, %v1369
        %v1426 = vadd.f32 %v1084, %v1374
        %v1427 = vadd.f32 %v1087, %v1377
        %v1428 = vadd.f32 %v1092, %v1382
        %v1429 = vadd.f32 %v1095, %v1385
        %v1430 = vadd.f32 %v1100, %v1390
        %v1431 = vadd.f32 %v1103, %v1393
        %v1432 = vpack.c.bf16 %v485, %v484
        %s1433 = scalar_lea.vmem %s2, 6
        %v1434 = vld [vmem:[%s1433] sm:$0x3]
        %v1436 = vrot.slane %v1432, 1
        %v1437 = vsel %vm1126, %v1160, %v1436
        %v1439 = vsel %vm654, %v1437, 0
        %v1442 = vsel %vm654, %v1436, 0
        %v1445 = vsel %vm709, %v1434, 0
        %1447 = vmatprep.subr.bf16.mxu0 0
        %1448 = vmatpush1.bf16.msra.mxu0 %v1445
        %1449 = vmatprep.subr.bf16.mxu0 0
        %1450 = vmatpush1.bf16.msra.mxu0 0
        %1451 = vmatprep.subr.bf16.mxu0 0
        %1452 = vmatpush1.bf16.msra.mxu0 0
        %1453 = vmatprep.subr.bf16.mxu0 0
        %1454 = vmatpush1.bf16.msra.mxu0 0
        %1455 = vmatprep.subr.bf16.mxu0 0
        %1456 = vmatpush1.bf16.msra.mxu0 0
        %1457 = vmatprep.subr.bf16.mxu0 0
        %1458 = vmatpush1.bf16.msra.mxu0 0
        %1459 = vmatprep.subr.bf16.mxu0 0
        %1460 = vmatpush1.bf16.msra.mxu0 0
        %1461 = vmatprep.subr.bf16.mxu0 0
        %1462 = vmatpush1.bf16.msra.mxu0 0
        %1463 = vmatprep.subr.bf16.mxu0 0
        %1464 = vmatpush1.bf16.msra.mxu0 0
        %1465 = vmatprep.subr.bf16.mxu0 0
        %1466 = vmatpush1.bf16.msra.mxu0 0
        %1467 = vmatprep.subr.bf16.mxu0 0
        %1468 = vmatpush1.bf16.msra.mxu0 0
        %1469 = vmatprep.subr.bf16.mxu0 0
        %1470 = vmatpush1.bf16.msra.mxu0 0
        %1471 = vmatprep.subr.bf16.mxu0 0
        %1472 = vmatpush1.bf16.msra.mxu0 0
        %1473 = vmatprep.subr.bf16.mxu0 0
        %1474 = vmatpush1.bf16.msra.mxu0 0
        %1475 = vmatprep.subr.bf16.mxu0 0
        %1476 = vmatpush1.bf16.msra.mxu0 0
        %1477 = vmatprep.subr.bf16.mxu0 0
        %1478 = vmatpush1.bf16.msra.mxu0 0
        %1479 = vmatprep.mubr.bf16.mxu0 0
        %1480 = vmatmul.mubr.bf16.gmra.mrb[0].mxu0 %v1166
        %v1481 = vpop.f32.mrb[0].mxu0
        %v1482 = vadd.f32 0.0, %v1481
        %v1483 = vpop.f32.mrb[0].mxu0
        %v1484 = vpop.f32.mrb[0].mxu0
        %v1485 = vadd.f32 0.0, %v1484
        %v1486 = vpop.f32.mrb[0].mxu0
        %1487 = vmatprep.mubr.bf16.mxu0 0
        %1488 = vmatmul.mubr.bf16.gmra.mrb[0].mxu0 %v1169
        %v1489 = vpop.f32.mrb[0].mxu0
        %v1490 = vadd.f32 0.0, %v1489
        %v1491 = vpop.f32.mrb[0].mxu0
        %v1492 = vpop.f32.mrb[0].mxu0
        %v1493 = vadd.f32 0.0, %v1492
        %v1494 = vpop.f32.mrb[0].mxu0
        %1495 = vmatprep.mubr.bf16.mxu0 0
        %1496 = vmatmul.mubr.bf16.gmra.mrb[0].mxu0 %v1172
        %v1497 = vpop.f32.mrb[0].mxu0
        %v1498 = vadd.f32 0.0, %v1497
        %v1499 = vpop.f32.mrb[0].mxu0
        %v1500 = vpop.f32.mrb[0].mxu0
        %v1501 = vadd.f32 0.0, %v1500
        %v1502 = vpop.f32.mrb[0].mxu0
        %1503 = vmatprep.mubr.bf16.mxu0 0
        %1504 = vmatmul.mubr.bf16.gmra.mrb[0].mxu0 %v1175
        %v1505 = vpop.f32.mrb[0].mxu0
        %v1506 = vadd.f32 0.0, %v1505
        %v1507 = vpop.f32.mrb[0].mxu0
        %v1508 = vpop.f32.mrb[0].mxu0
        %v1509 = vadd.f32 0.0, %v1508
        %v1510 = vpop.f32.mrb[0].mxu0
        %1511 = vmatprep.mubr.bf16.mxu0 0
        %1512 = vmatmul.mubr.bf16.gmra.mrb[0].mxu0 %v1178
        %v1513 = vpop.f32.mrb[0].mxu0
        %v1514 = vadd.f32 0.0, %v1513
        %v1515 = vpop.f32.mrb[0].mxu0
        %v1516 = vpop.f32.mrb[0].mxu0
        %v1517 = vadd.f32 0.0, %v1516
        %v1518 = vpop.f32.mrb[0].mxu0
        %1519 = vmatprep.mubr.bf16.mxu0 0
        %1520 = vmatmul.mubr.bf16.gmra.mrb[0].mxu0 %v1181
        %v1521 = vpop.f32.mrb[0].mxu0
        %v1522 = vadd.f32 0.0, %v1521
        %v1523 = vpop.f32.mrb[0].mxu0
        %v1524 = vpop.f32.mrb[0].mxu0
        %v1525 = vadd.f32 0.0, %v1524
        %v1526 = vpop.f32.mrb[0].mxu0
        %1527 = vmatprep.mubr.bf16.mxu0 0
        %1528 = vmatmul.mubr.bf16.gmra.mrb[0].mxu0 %v1184
        %v1529 = vpop.f32.mrb[0].mxu0
        %v1530 = vadd.f32 0.0, %v1529
        %v1531 = vpop.f32.mrb[0].mxu0
        %v1532 = vpop.f32.mrb[0].mxu0
        %v1533 = vadd.f32 0.0, %v1532
        %v1534 = vpop.f32.mrb[0].mxu0
        %1535 = vmatprep.mubr.bf16.mxu0 0
        %1536 = vmatmul.mubr.bf16.gmra.mrb[0].mxu0 %v1187
        %v1537 = vpop.f32.mrb[0].mxu0
        %v1538 = vadd.f32 0.0, %v1537
        %v1539 = vpop.f32.mrb[0].mxu0
        %v1540 = vpop.f32.mrb[0].mxu0
        %v1541 = vadd.f32 0.0, %v1540
        %v1542 = vpop.f32.mrb[0].mxu0
        %1543 = vmatprep.mubr.bf16.mxu0 0
        %1544 = vmatmul.mubr.bf16.gmra.mrb[0].mxu0 %v1190
        %v1545 = vpop.f32.mrb[0].mxu0
        %v1546 = vadd.f32 0.0, %v1545
        %v1547 = vpop.f32.mrb[0].mxu0
        %v1548 = vpop.f32.mrb[0].mxu0
        %v1549 = vadd.f32 0.0, %v1548
        %v1550 = vpop.f32.mrb[0].mxu0
        %1551 = vmatprep.mubr.bf16.mxu0 0
        %1552 = vmatmul.mubr.bf16.gmra.mrb[0].mxu0 %v1193
        %v1553 = vpop.f32.mrb[0].mxu0
        %v1554 = vadd.f32 0.0, %v1553
        %v1555 = vpop.f32.mrb[0].mxu0
        %v1556 = vpop.f32.mrb[0].mxu0
        %v1557 = vadd.f32 0.0, %v1556
        %v1558 = vpop.f32.mrb[0].mxu0
        %1559 = vmatprep.mubr.bf16.mxu0 0
        %1560 = vmatmul.mubr.bf16.gmra.mrb[0].mxu0 %v1196
        %v1561 = vpop.f32.mrb[0].mxu0
        %v1562 = vadd.f32 0.0, %v1561
        %v1563 = vpop.f32.mrb[0].mxu0
        %v1564 = vpop.f32.mrb[0].mxu0
        %v1565 = vadd.f32 0.0, %v1564
        %v1566 = vpop.f32.mrb[0].mxu0
        %1567 = vmatprep.mubr.bf16.mxu0 0
        %1568 = vmatmul.mubr.bf16.gmra.mrb[0].mxu0 %v1199
        %v1569 = vpop.f32.mrb[0].mxu0
        %v1570 = vadd.f32 0.0, %v1569
        %v1571 = vpop.f32.mrb[0].mxu0
        %v1572 = vpop.f32.mrb[0].mxu0
        %v1573 = vadd.f32 0.0, %v1572
        %v1574 = vpop.f32.mrb[0].mxu0
        %1575 = vmatprep.mubr.bf16.mxu0 0
        %1576 = vmatmul.mubr.bf16.gmra.mrb[0].mxu0 %v1202
        %v1577 = vpop.f32.mrb[0].mxu0
        %v1578 = vadd.f32 0.0, %v1577
        %v1579 = vpop.f32.mrb[0].mxu0
        %v1580 = vpop.f32.mrb[0].mxu0
        %v1581 = vadd.f32 0.0, %v1580
        %v1582 = vpop.f32.mrb[0].mxu0
        %1583 = vmatprep.mubr.bf16.mxu0 0
        %1584 = vmatmul.mubr.bf16.gmra.mrb[0].mxu0 %v1205
        %v1585 = vpop.f32.mrb[0].mxu0
        %v1586 = vadd.f32 0.0, %v1585
        %v1587 = vpop.f32.mrb[0].mxu0
        %v1588 = vpop.f32.mrb[0].mxu0
        %v1589 = vadd.f32 0.0, %v1588
        %v1590 = vpop.f32.mrb[0].mxu0
        %1591 = vmatprep.mubr.bf16.mxu0 0
        %1592 = vmatmul.mubr.bf16.gmra.mrb[0].mxu0 %v1208
        %v1593 = vpop.f32.mrb[0].mxu0
        %v1594 = vadd.f32 0.0, %v1593
        %v1595 = vpop.f32.mrb[0].mxu0
        %v1596 = vpop.f32.mrb[0].mxu0
        %v1597 = vadd.f32 0.0, %v1596
        %v1598 = vpop.f32.mrb[0].mxu0
        %1599 = vmatprep.mubr.bf16.mxu0 0
        %1600 = vmatmul.mubr.bf16.gmra.mrb[0].mxu0 %v1211
        %v1601 = vpop.f32.mrb[0].mxu0
        %v1602 = vadd.f32 0.0, %v1601
        %v1603 = vpop.f32.mrb[0].mxu0
        %v1604 = vpop.f32.mrb[0].mxu0
        %v1605 = vadd.f32 0.0, %v1604
        %v1606 = vpop.f32.mrb[0].mxu0
        %1607 = vmatprep.mubr.bf16.mxu0 0
        %1608 = vmatmul.mubr.bf16.gmra.mrb[0].mxu0 %v1439
        %v1609 = vpop.f32.mrb[0].mxu0
        %v1610 = vadd.f32 0.0, %v1609
        %v1611 = vpop.f32.mrb[0].mxu0
        %v1612 = vpop.f32.mrb[0].mxu0
        %v1613 = vadd.f32 0.0, %v1612
        %v1614 = vpop.f32.mrb[0].mxu0
        %1615 = vmatprep.mubr.bf16.mxu0 0
        %1616 = vmatmul.mubr.bf16.gmra.mrb[0].mxu0 %v1442
        %v1617 = vpop.f32.mrb[0].mxu0
        %v1618 = vadd.f32 0.0, %v1617
        %v1619 = vpop.f32.mrb[0].mxu0
        %v1620 = vpop.f32.mrb[0].mxu0
        %v1621 = vadd.f32 0.0, %v1620
        %v1622 = vpop.f32.mrb[0].mxu0
        %1623 = vdwg.mxu0
        %v1624 = vadd.f32 %v1396, %v1482
        %v1625 = vadd.f32 %v1397, %v1485
        %v1626 = vadd.f32 %v1398, %v1490
        %v1627 = vadd.f32 %v1399, %v1493
        %v1628 = vadd.f32 %v1400, %v1498
        %v1629 = vadd.f32 %v1401, %v1501
        %v1630 = vadd.f32 %v1402, %v1506
        %v1631 = vadd.f32 %v1403, %v1509
        %v1632 = vadd.f32 %v1404, %v1514
        %v1633 = vadd.f32 %v1405, %v1517
        %v1634 = vadd.f32 %v1406, %v1522
        %v1635 = vadd.f32 %v1407, %v1525
        %v1636 = vadd.f32 %v1408, %v1530
        %v1637 = vadd.f32 %v1409, %v1533
        %v1638 = vadd.f32 %v1410, %v1538
        %v1639 = vadd.f32 %v1411, %v1541
        %v1640 = vadd.f32 %v1412, %v1546
        %v1641 = vadd.f32 %v1413, %v1549
        %v1642 = vadd.f32 %v1414, %v1554
        %v1643 = vadd.f32 %v1415, %v1557
        %v1644 = vadd.f32 %v1416, %v1562
        %v1645 = vadd.f32 %v1417, %v1565
        %v1646 = vadd.f32 %v1418, %v1570
        %v1647 = vadd.f32 %v1419, %v1573
        %v1648 = vadd.f32 %v1420, %v1578
        %v1649 = vadd.f32 %v1421, %v1581
        %v1650 = vadd.f32 %v1422, %v1586
        %v1651 = vadd.f32 %v1423, %v1589
        %v1652 = vadd.f32 %v1424, %v1594
        %v1653 = vadd.f32 %v1425, %v1597
        %v1654 = vadd.f32 %v1426, %v1602
        %v1655 = vadd.f32 %v1427, %v1605
        %v1656 = vadd.f32 %v1428, %v1610
        %v1657 = vadd.f32 %v1429, %v1613
        %v1658 = vadd.f32 %v1430, %v1618
        %v1659 = vadd.f32 %v1431, %v1621
        %v1660 = vpack.c.bf16 %v486, %v486
        %s1661 = scalar_lea.vmem %s2, 8
        %v1662 = vld [vmem:[%s1661] sm:$0x3]
        %vm1663 = vsmask.f32 6400
        %v1664 = vrot.slane %v523, 1
        %v1665 = vrot.slane %v519, 2
        %v1666 = vor.u32 %v1664, %v1665
        %v1667 = vrot.slane %v531, 1
        %v1668 = vrot.slane %v527, 2
        %v1669 = vor.u32 %v1667, %v1668
        %v1670 = vsel %vm1663, %v1666, %v1669
        %v1671 = vrot.slane %v539, 1
        %v1672 = vrot.slane %v535, 2
        %v1673 = vor.u32 %v1671, %v1672
        %v1674 = vsel %vm1663, %v1669, %v1673
        %v1675 = vrot.slane %v547, 1
        %v1676 = vrot.slane %v543, 2
        %v1677 = vor.u32 %v1675, %v1676
        %v1678 = vsel %vm1663, %v1673, %v1677
        %v1679 = vrot.slane %v555, 1
        %v1680 = vrot.slane %v551, 2
        %v1681 = vor.u32 %v1679, %v1680
        %v1682 = vsel %vm1663, %v1677, %v1681
        %v1683 = vrot.slane %v563, 1
        %v1684 = vrot.slane %v559, 2
        %v1685 = vor.u32 %v1683, %v1684
        %v1686 = vsel %vm1663, %v1681, %v1685
        %v1687 = vrot.slane %v571, 1
        %v1688 = vrot.slane %v567, 2
        %v1689 = vor.u32 %v1687, %v1688
        %v1690 = vsel %vm1663, %v1685, %v1689
        %v1691 = vrot.slane %v579, 1
        %v1692 = vrot.slane %v575, 2
        %v1693 = vor.u32 %v1691, %v1692
        %v1694 = vsel %vm1663, %v1689, %v1693
        %v1695 = vrot.slane %v587, 1
        %v1696 = vrot.slane %v583, 2
        %v1697 = vor.u32 %v1695, %v1696
        %v1698 = vsel %vm1663, %v1693, %v1697
        %v1699 = vrot.slane %v595, 1
        %v1700 = vrot.slane %v591, 2
        %v1701 = vor.u32 %v1699, %v1700
        %v1702 = vsel %vm1663, %v1697, %v1701
        %v1703 = vrot.slane %v603, 1
        %v1704 = vrot.slane %v599, 2
        %v1705 = vor.u32 %v1703, %v1704
        %v1706 = vsel %vm1663, %v1701, %v1705
        %v1707 = vrot.slane %v611, 1
        %v1708 = vrot.slane %v607, 2
        %v1709 = vor.u32 %v1707, %v1708
        %v1710 = vsel %vm1663, %v1705, %v1709
        %v1711 = vrot.slane %v619, 1
        %v1712 = vrot.slane %v615, 2
        %v1713 = vor.u32 %v1711, %v1712
        %v1714 = vsel %vm1663, %v1709, %v1713
        %v1715 = vrot.slane %v627, 1
        %v1716 = vrot.slane %v623, 2
        %v1717 = vor.u32 %v1715, %v1716
        %v1718 = vsel %vm1663, %v1713, %v1717
        %v1719 = vrot.slane %v635, 1
        %v1720 = vrot.slane %v631, 2
        %v1721 = vor.u32 %v1719, %v1720
        %v1722 = vsel %vm1663, %v1717, %v1721
        %v1723 = vrot.slane %v643, 1
        %v1724 = vrot.slane %v639, 2
        %v1725 = vor.u32 %v1723, %v1724
        %v1726 = vsel %vm1663, %v1721, %v1725
        %v1727 = vrot.slane %v651, 1
        %v1728 = vrot.slane %v647, 2
        %v1729 = vor.u32 %v1727, %v1728
        %v1730 = vsel %vm1663, %v1725, %v1729
        %v1732 = vshrl.u32 %v1432, 16
        %v1734 = vrot.slane %v1732, 1
        %v1735 = vshll.u32 %v1432, 16
        %v1737 = vrot.slane %v1735, 2
        %v1738 = vor.u32 %v1734, %v1737
        %v1739 = vsel %vm1663, %v1729, %v1738
        %v1741 = vshll.u32 %v1660, 16
        %v1743 = vrot.slane %v1741, 2
        %v1744 = vsel %vm1663, %v1738, %v1743
        %v1746 = vsel %vm654, %v1670, 0
        %v1749 = vsel %vm654, %v1674, 0
        %v1752 = vsel %vm654, %v1678, 0
        %v1755 = vsel %vm654, %v1682, 0
        %v1758 = vsel %vm654, %v1686, 0
        %v1761 = vsel %vm654, %v1690, 0
        %v1764 = vsel %vm654, %v1694, 0
        %v1767 = vsel %vm654, %v1698, 0
        %v1770 = vsel %vm654, %v1702, 0
        %v1773 = vsel %vm654, %v1706, 0
        %v1776 = vsel %vm654, %v1710, 0
        %v1779 = vsel %vm654, %v1714, 0
        %v1782 = vsel %vm654, %v1718, 0
        %v1785 = vsel %vm654, %v1722, 0
        %v1788 = vsel %vm654, %v1726, 0
        %v1791 = vsel %vm654, %v1730, 0
        %v1794 = vsel %vm654, %v1739, 0
        %v1797 = vsel %vm654, %v1744, 0
        %v1800 = vsel %vm709, %v1662, 0
        %1802 = vmatprep.subr.bf16.mxu0 0
        %1803 = vmatpush1.bf16.msra.mxu0 %v1800
        %1804 = vmatprep.subr.bf16.mxu0 0
        %1805 = vmatpush1.bf16.msra.mxu0 0
        %1806 = vmatprep.subr.bf16.mxu0 0
        %1807 = vmatpush1.bf16.msra.mxu0 0
        %1808 = vmatprep.subr.bf16.mxu0 0
        %1809 = vmatpush1.bf16.msra.mxu0 0
        %1810 = vmatprep.subr.bf16.mxu0 0
        %1811 = vmatpush1.bf16.msra.mxu0 0
        %1812 = vmatprep.subr.bf16.mxu0 0
        %1813 = vmatpush1.bf16.msra.mxu0 0
        %1814 = vmatprep.subr.bf16.mxu0 0
        %1815 = vmatpush1.bf16.msra.mxu0 0
        %1816 = vmatprep.subr.bf16.mxu0 0
        %1817 = vmatpush1.bf16.msra.mxu0 0
        %1818 = vmatprep.subr.bf16.mxu0 0
        %1819 = vmatpush1.bf16.msra.mxu0 0
        %1820 = vmatprep.subr.bf16.mxu0 0
        %1821 = vmatpush1.bf16.msra.mxu0 0
        %1822 = vmatprep.subr.bf16.mxu0 0
        %1823 = vmatpush1.bf16.msra.mxu0 0
        %1824 = vmatprep.subr.bf16.mxu0 0
        %1825 = vmatpush1.bf16.msra.mxu0 0
        %1826 = vmatprep.subr.bf16.mxu0 0
        %1827 = vmatpush1.bf16.msra.mxu0 0
        %1828 = vmatprep.subr.bf16.mxu0 0
        %1829 = vmatpush1.bf16.msra.mxu0 0
        %1830 = vmatprep.subr.bf16.mxu0 0
        %1831 = vmatpush1.bf16.msra.mxu0 0
        %1832 = vmatprep.subr.bf16.mxu0 0
        %1833 = vmatpush1.bf16.msra.mxu0 0
        %1834 = vmatprep.mubr.bf16.mxu0 0
        %1835 = vmatmul.mubr.bf16.gmra.mrb[0].mxu0 %v1746
        %v1836 = vpop.f32.mrb[0].mxu0
        %v1837 = vadd.f32 0.0, %v1836
        %v1838 = vpop.f32.mrb[0].mxu0
        %v1839 = vpop.f32.mrb[0].mxu0
        %v1840 = vadd.f32 0.0, %v1839
        %v1841 = vpop.f32.mrb[0].mxu0
        %1842 = vmatprep.mubr.bf16.mxu0 0
        %1843 = vmatmul.mubr.bf16.gmra.mrb[0].mxu0 %v1749
        %v1844 = vpop.f32.mrb[0].mxu0
        %v1845 = vadd.f32 0.0, %v1844
        %v1846 = vpop.f32.mrb[0].mxu0
        %v1847 = vpop.f32.mrb[0].mxu0
        %v1848 = vadd.f32 0.0, %v1847
        %v1849 = vpop.f32.mrb[0].mxu0
        %1850 = vmatprep.mubr.bf16.mxu0 0
        %1851 = vmatmul.mubr.bf16.gmra.mrb[0].mxu0 %v1752
        %v1852 = vpop.f32.mrb[0].mxu0
        %v1853 = vadd.f32 0.0, %v1852
        %v1854 = vpop.f32.mrb[0].mxu0
        %v1855 = vpop.f32.mrb[0].mxu0
        %v1856 = vadd.f32 0.0, %v1855
        %v1857 = vpop.f32.mrb[0].mxu0
        %1858 = vmatprep.mubr.bf16.mxu0 0
        %1859 = vmatmul.mubr.bf16.gmra.mrb[0].mxu0 %v1755
        %v1860 = vpop.f32.mrb[0].mxu0
        %v1861 = vadd.f32 0.0, %v1860
        %v1862 = vpop.f32.mrb[0].mxu0
        %v1863 = vpop.f32.mrb[0].mxu0
        %v1864 = vadd.f32 0.0, %v1863
        %v1865 = vpop.f32.mrb[0].mxu0
        %1866 = vmatprep.mubr.bf16.mxu0 0
        %1867 = vmatmul.mubr.bf16.gmra.mrb[0].mxu0 %v1758
        %v1868 = vpop.f32.mrb[0].mxu0
        %v1869 = vadd.f32 0.0, %v1868
        %v1870 = vpop.f32.mrb[0].mxu0
        %v1871 = vpop.f32.mrb[0].mxu0
        %v1872 = vadd.f32 0.0, %v1871
        %v1873 = vpop.f32.mrb[0].mxu0
        %1874 = vmatprep.mubr.bf16.mxu0 0
        %1875 = vmatmul.mubr.bf16.gmra.mrb[0].mxu0 %v1761
        %v1876 = vpop.f32.mrb[0].mxu0
        %v1877 = vadd.f32 0.0, %v1876
        %v1878 = vpop.f32.mrb[0].mxu0
        %v1879 = vpop.f32.mrb[0].mxu0
        %v1880 = vadd.f32 0.0, %v1879
        %v1881 = vpop.f32.mrb[0].mxu0
        %1882 = vmatprep.mubr.bf16.mxu0 0
        %1883 = vmatmul.mubr.bf16.gmra.mrb[0].mxu0 %v1764
        %v1884 = vpop.f32.mrb[0].mxu0
        %v1885 = vadd.f32 0.0, %v1884
        %v1886 = vpop.f32.mrb[0].mxu0
        %v1887 = vpop.f32.mrb[0].mxu0
        %v1888 = vadd.f32 0.0, %v1887
        %v1889 = vpop.f32.mrb[0].mxu0
        %1890 = vmatprep.mubr.bf16.mxu0 0
        %1891 = vmatmul.mubr.bf16.gmra.mrb[0].mxu0 %v1767
        %v1892 = vpop.f32.mrb[0].mxu0
        %v1893 = vadd.f32 0.0, %v1892
        %v1894 = vpop.f32.mrb[0].mxu0
        %v1895 = vpop.f32.mrb[0].mxu0
        %v1896 = vadd.f32 0.0, %v1895
        %v1897 = vpop.f32.mrb[0].mxu0
        %1898 = vmatprep.mubr.bf16.mxu0 0
        %1899 = vmatmul.mubr.bf16.gmra.mrb[0].mxu0 %v1770
        %v1900 = vpop.f32.mrb[0].mxu0
        %v1901 = vadd.f32 0.0, %v1900
        %v1902 = vpop.f32.mrb[0].mxu0
        %v1903 = vpop.f32.mrb[0].mxu0
        %v1904 = vadd.f32 0.0, %v1903
        %v1905 = vpop.f32.mrb[0].mxu0
        %1906 = vmatprep.mubr.bf16.mxu0 0
        %1907 = vmatmul.mubr.bf16.gmra.mrb[0].mxu0 %v1773
        %v1908 = vpop.f32.mrb[0].mxu0
        %v1909 = vadd.f32 0.0, %v1908
        %v1910 = vpop.f32.mrb[0].mxu0
        %v1911 = vpop.f32.mrb[0].mxu0
        %v1912 = vadd.f32 0.0, %v1911
        %v1913 = vpop.f32.mrb[0].mxu0
        %1914 = vmatprep.mubr.bf16.mxu0 0
        %1915 = vmatmul.mubr.bf16.gmra.mrb[0].mxu0 %v1776
        %v1916 = vpop.f32.mrb[0].mxu0
        %v1917 = vadd.f32 0.0, %v1916
        %v1918 = vpop.f32.mrb[0].mxu0
        %v1919 = vpop.f32.mrb[0].mxu0
        %v1920 = vadd.f32 0.0, %v1919
        %v1921 = vpop.f32.mrb[0].mxu0
        %1922 = vmatprep.mubr.bf16.mxu0 0
        %1923 = vmatmul.mubr.bf16.gmra.mrb[0].mxu0 %v1779
        %v1924 = vpop.f32.mrb[0].mxu0
        %v1925 = vadd.f32 0.0, %v1924
        %v1926 = vpop.f32.mrb[0].mxu0
        %v1927 = vpop.f32.mrb[0].mxu0
        %v1928 = vadd.f32 0.0, %v1927
        %v1929 = vpop.f32.mrb[0].mxu0
        %1930 = vmatprep.mubr.bf16.mxu0 0
        %1931 = vmatmul.mubr.bf16.gmra.mrb[0].mxu0 %v1782
        %v1932 = vpop.f32.mrb[0].mxu0
        %v1933 = vadd.f32 0.0, %v1932
        %v1934 = vpop.f32.mrb[0].mxu0
        %v1935 = vpop.f32.mrb[0].mxu0
        %v1936 = vadd.f32 0.0, %v1935
        %v1937 = vpop.f32.mrb[0].mxu0
        %1938 = vmatprep.mubr.bf16.mxu0 0
        %1939 = vmatmul.mubr.bf16.gmra.mrb[0].mxu0 %v1785
        %v1940 = vpop.f32.mrb[0].mxu0
        %v1941 = vadd.f32 0.0, %v1940
        %v1942 = vpop.f32.mrb[0].mxu0
        %v1943 = vpop.f32.mrb[0].mxu0
        %v1944 = vadd.f32 0.0, %v1943
        %v1945 = vpop.f32.mrb[0].mxu0
        %1946 = vmatprep.mubr.bf16.mxu0 0
        %1947 = vmatmul.mubr.bf16.gmra.mrb[0].mxu0 %v1788
        %v1948 = vpop.f32.mrb[0].mxu0
        %v1949 = vadd.f32 0.0, %v1948
        %v1950 = vpop.f32.mrb[0].mxu0
        %v1951 = vpop.f32.mrb[0].mxu0
        %v1952 = vadd.f32 0.0, %v1951
        %v1953 = vpop.f32.mrb[0].mxu0
        %1954 = vmatprep.mubr.bf16.mxu0 0
        %1955 = vmatmul.mubr.bf16.gmra.mrb[0].mxu0 %v1791
        %v1956 = vpop.f32.mrb[0].mxu0
        %v1957 = vadd.f32 0.0, %v1956
        %v1958 = vpop.f32.mrb[0].mxu0
        %v1959 = vpop.f32.mrb[0].mxu0
        %v1960 = vadd.f32 0.0, %v1959
        %v1961 = vpop.f32.mrb[0].mxu0
        %1962 = vmatprep.mubr.bf16.mxu0 0
        %1963 = vmatmul.mubr.bf16.gmra.mrb[0].mxu0 %v1794
        %v1964 = vpop.f32.mrb[0].mxu0
        %v1965 = vadd.f32 0.0, %v1964
        %v1966 = vpop.f32.mrb[0].mxu0
        %v1967 = vpop.f32.mrb[0].mxu0
        %v1968 = vadd.f32 0.0, %v1967
        %v1969 = vpop.f32.mrb[0].mxu0
        %1970 = vmatprep.mubr.bf16.mxu0 0
        %1971 = vmatmul.mubr.bf16.gmra.mrb[0].mxu0 %v1797
        %v1972 = vpop.f32.mrb[0].mxu0
        %v1973 = vadd.f32 0.0, %v1972
        %v1974 = vpop.f32.mrb[0].mxu0
        %v1975 = vpop.f32.mrb[0].mxu0
        %v1976 = vadd.f32 0.0, %v1975
        %v1977 = vpop.f32.mrb[0].mxu0
        %1978 = vdwg.mxu0
        %v1979 = vadd.f32 %v1624, %v1837
        %v1980 = vadd.f32 %v1625, %v1840
        %v1981 = vadd.f32 %v1626, %v1845
        %v1982 = vadd.f32 %v1627, %v1848
        %v1983 = vadd.f32 %v1628, %v1853
        %v1984 = vadd.f32 %v1629, %v1856
        %v1985 = vadd.f32 %v1630, %v1861
        %v1986 = vadd.f32 %v1631, %v1864
        %v1987 = vadd.f32 %v1632, %v1869
        %v1988 = vadd.f32 %v1633, %v1872
        %v1989 = vadd.f32 %v1634, %v1877
        %v1990 = vadd.f32 %v1635, %v1880
        %v1991 = vadd.f32 %v1636, %v1885
        %v1992 = vadd.f32 %v1637, %v1888
        %v1993 = vadd.f32 %v1638, %v1893
        %v1994 = vadd.f32 %v1639, %v1896
        %v1995 = vadd.f32 %v1640, %v1901
        %v1996 = vadd.f32 %v1641, %v1904
        %v1997 = vadd.f32 %v1642, %v1909
        %v1998 = vadd.f32 %v1643, %v1912
        %v1999 = vadd.f32 %v1644, %v1917
        %v2000 = vadd.f32 %v1645, %v1920
        %v2001 = vadd.f32 %v1646, %v1925
        %v2002 = vadd.f32 %v1647, %v1928
        %v2003 = vadd.f32 %v1648, %v1933
        %v2004 = vadd.f32 %v1649, %v1936
        %v2005 = vadd.f32 %v1650, %v1941
        %v2006 = vadd.f32 %v1651, %v1944
        %v2007 = vadd.f32 %v1652, %v1949
        %v2008 = vadd.f32 %v1653, %v1952
        %v2009 = vadd.f32 %v1654, %v1957
        %v2010 = vadd.f32 %v1655, %v1960
        %v2011 = vadd.f32 %v1656, %v1965
        %v2012 = vadd.f32 %v1657, %v1968
        %v2013 = vadd.f32 %v1658, %v1973
        %v2014 = vadd.f32 %v1659, %v1976
        %s2015 = scalar_lea.vmem %s2, 10
        %v2016 = vld [vmem:[%s2015] sm:$0x3]
        %vm2018 = vcmask 1045504
        %v2019 = vrot.slane %v490, 2
        %v2020 = vrot.slane %v491, 2
        %v2021 = vsel %vm2018, %v2019, %v2020
        %v2022 = vrot.slane %v492, 2
        %v2023 = vsel %vm2018, %v2020, %v2022
        %v2024 = vrot.slane %v493, 2
        %v2025 = vsel %vm2018, %v2022, %v2024
        %v2026 = vrot.slane %v494, 2
        %v2027 = vsel %vm2018, %v2024, %v2026
        %v2028 = vrot.slane %v495, 2
        %v2029 = vsel %vm2018, %v2026, %v2028
        %v2030 = vrot.slane %v496, 2
        %v2031 = vsel %vm2018, %v2028, %v2030
        %v2032 = vrot.slane %v497, 2
        %v2033 = vsel %vm2018, %v2030, %v2032
        %v2034 = vrot.slane %v498, 2
        %v2035 = vsel %vm2018, %v2032, %v2034
        %v2036 = vrot.slane %v499, 2
        %v2037 = vsel %vm2018, %v2034, %v2036
        %v2038 = vrot.slane %v500, 2
        %v2039 = vsel %vm2018, %v2036, %v2038
        %v2040 = vrot.slane %v501, 2
        %v2041 = vsel %vm2018, %v2038, %v2040
        %v2042 = vrot.slane %v502, 2
        %v2043 = vsel %vm2018, %v2040, %v2042
        %v2044 = vrot.slane %v503, 2
        %v2045 = vsel %vm2018, %v2042, %v2044
        %v2046 = vrot.slane %v504, 2
        %v2047 = vsel %vm2018, %v2044, %v2046
        %v2048 = vrot.slane %v505, 2
        %v2049 = vsel %vm2018, %v2046, %v2048
        %v2050 = vrot.slane %v506, 2
        %v2051 = vsel %vm2018, %v2048, %v2050
        %v2052 = vrot.slane %v1432, 2
        %v2053 = vsel %vm2018, %v2050, %v2052
        %v2054 = vrot.slane %v1660, 2
        %v2055 = vsel %vm2018, %v2052, %v2054
        %v2057 = vsel %vm654, %v2021, 0
        %v2060 = vsel %vm654, %v2023, 0
        %v2063 = vsel %vm654, %v2025, 0
        %v2066 = vsel %vm654, %v2027, 0
        %v2069 = vsel %vm654, %v2029, 0
        %v2072 = vsel %vm654, %v2031, 0
        %v2075 = vsel %vm654, %v2033, 0
        %v2078 = vsel %vm654, %v2035, 0
        %v2081 = vsel %vm654, %v2037, 0
        %v2084 = vsel %vm654, %v2039, 0
        %v2087 = vsel %vm654, %v2041, 0
        %v2090 = vsel %vm654, %v2043, 0
        %v2093 = vsel %vm654, %v2045, 0
        %v2096 = vsel %vm654, %v2047, 0
        %v2099 = vsel %vm654, %v2049, 0
        %v2102 = vsel %vm654, %v2051, 0
        %v2105 = vsel %vm654, %v2053, 0
        %v2108 = vsel %vm654, %v2055, 0
        %v2111 = vsel %vm709, %v2016, 0
        %2113 = vmatprep.subr.bf16.mxu0 0
        %2114 = vmatpush1.bf16.msra.mxu0 %v2111
        %2115 = vmatprep.subr.bf16.mxu0 0
        %2116 = vmatpush1.bf16.msra.mxu0 0
        %2117 = vmatprep.subr.bf16.mxu0 0
        %2118 = vmatpush1.bf16.msra.mxu0 0
        %2119 = vmatprep.subr.bf16.mxu0 0
        %2120 = vmatpush1.bf16.msra.mxu0 0
        %2121 = vmatprep.subr.bf16.mxu0 0
        %2122 = vmatpush1.bf16.msra.mxu0 0
        %2123 = vmatprep.subr.bf16.mxu0 0
        %2124 = vmatpush1.bf16.msra.mxu0 0
        %2125 = vmatprep.subr.bf16.mxu0 0
        %2126 = vmatpush1.bf16.msra.mxu0 0
        %2127 = vmatprep.subr.bf16.mxu0 0
        %2128 = vmatpush1.bf16.msra.mxu0 0
        %2129 = vmatprep.subr.bf16.mxu0 0
        %2130 = vmatpush1.bf16.msra.mxu0 0
        %2131 = vmatprep.subr.bf16.mxu0 0
        %2132 = vmatpush1.bf16.msra.mxu0 0
        %2133 = vmatprep.subr.bf16.mxu0 0
        %2134 = vmatpush1.bf16.msra.mxu0 0
        %2135 = vmatprep.subr.bf16.mxu0 0
        %2136 = vmatpush1.bf16.msra.mxu0 0
        %2137 = vmatprep.subr.bf16.mxu0 0
        %2138 = vmatpush1.bf16.msra.mxu0 0
        %2139 = vmatprep.subr.bf16.mxu0 0
        %2140 = vmatpush1.bf16.msra.mxu0 0
        %2141 = vmatprep.subr.bf16.mxu0 0
        %2142 = vmatpush1.bf16.msra.mxu0 0
        %2143 = vmatprep.subr.bf16.mxu0 0
        %2144 = vmatpush1.bf16.msra.mxu0 0
        %2145 = vmatprep.mubr.bf16.mxu0 0
        %2146 = vmatmul.mubr.bf16.gmra.mrb[0].mxu0 %v2057
        %v2147 = vpop.f32.mrb[0].mxu0
        %v2148 = vadd.f32 0.0, %v2147
        %v2149 = vpop.f32.mrb[0].mxu0
        %v2150 = vpop.f32.mrb[0].mxu0
        %v2151 = vadd.f32 0.0, %v2150
        %v2152 = vpop.f32.mrb[0].mxu0
        %2153 = vmatprep.mubr.bf16.mxu0 0
        %2154 = vmatmul.mubr.bf16.gmra.mrb[0].mxu0 %v2060
        %v2155 = vpop.f32.mrb[0].mxu0
        %v2156 = vadd.f32 0.0, %v2155
        %v2157 = vpop.f32.mrb[0].mxu0
        %v2158 = vpop.f32.mrb[0].mxu0
        %v2159 = vadd.f32 0.0, %v2158
        %v2160 = vpop.f32.mrb[0].mxu0
        %2161 = vmatprep.mubr.bf16.mxu0 0
        %2162 = vmatmul.mubr.bf16.gmra.mrb[0].mxu0 %v2063
        %v2163 = vpop.f32.mrb[0].mxu0
        %v2164 = vadd.f32 0.0, %v2163
        %v2165 = vpop.f32.mrb[0].mxu0
        %v2166 = vpop.f32.mrb[0].mxu0
        %v2167 = vadd.f32 0.0, %v2166
        %v2168 = vpop.f32.mrb[0].mxu0
        %2169 = vmatprep.mubr.bf16.mxu0 0
        %2170 = vmatmul.mubr.bf16.gmra.mrb[0].mxu0 %v2066
        %v2171 = vpop.f32.mrb[0].mxu0
        %v2172 = vadd.f32 0.0, %v2171
        %v2173 = vpop.f32.mrb[0].mxu0
        %v2174 = vpop.f32.mrb[0].mxu0
        %v2175 = vadd.f32 0.0, %v2174
        %v2176 = vpop.f32.mrb[0].mxu0
        %2177 = vmatprep.mubr.bf16.mxu0 0
        %2178 = vmatmul.mubr.bf16.gmra.mrb[0].mxu0 %v2069
        %v2179 = vpop.f32.mrb[0].mxu0
        %v2180 = vadd.f32 0.0, %v2179
        %v2181 = vpop.f32.mrb[0].mxu0
        %v2182 = vpop.f32.mrb[0].mxu0
        %v2183 = vadd.f32 0.0, %v2182
        %v2184 = vpop.f32.mrb[0].mxu0
        %2185 = vmatprep.mubr.bf16.mxu0 0
        %2186 = vmatmul.mubr.bf16.gmra.mrb[0].mxu0 %v2072
        %v2187 = vpop.f32.mrb[0].mxu0
        %v2188 = vadd.f32 0.0, %v2187
        %v2189 = vpop.f32.mrb[0].mxu0
        %v2190 = vpop.f32.mrb[0].mxu0
        %v2191 = vadd.f32 0.0, %v2190
        %v2192 = vpop.f32.mrb[0].mxu0
        %2193 = vmatprep.mubr.bf16.mxu0 0
        %2194 = vmatmul.mubr.bf16.gmra.mrb[0].mxu0 %v2075
        %v2195 = vpop.f32.mrb[0].mxu0
        %v2196 = vadd.f32 0.0, %v2195
        %v2197 = vpop.f32.mrb[0].mxu0
        %v2198 = vpop.f32.mrb[0].mxu0
        %v2199 = vadd.f32 0.0, %v2198
        %v2200 = vpop.f32.mrb[0].mxu0
        %2201 = vmatprep.mubr.bf16.mxu0 0
        %2202 = vmatmul.mubr.bf16.gmra.mrb[0].mxu0 %v2078
        %v2203 = vpop.f32.mrb[0].mxu0
        %v2204 = vadd.f32 0.0, %v2203
        %v2205 = vpop.f32.mrb[0].mxu0
        %v2206 = vpop.f32.mrb[0].mxu0
        %v2207 = vadd.f32 0.0, %v2206
        %v2208 = vpop.f32.mrb[0].mxu0
        %2209 = vmatprep.mubr.bf16.mxu0 0
        %2210 = vmatmul.mubr.bf16.gmra.mrb[0].mxu0 %v2081
        %v2211 = vpop.f32.mrb[0].mxu0
        %v2212 = vadd.f32 0.0, %v2211
        %v2213 = vpop.f32.mrb[0].mxu0
        %v2214 = vpop.f32.mrb[0].mxu0
        %v2215 = vadd.f32 0.0, %v2214
        %v2216 = vpop.f32.mrb[0].mxu0
        %2217 = vmatprep.mubr.bf16.mxu0 0
        %2218 = vmatmul.mubr.bf16.gmra.mrb[0].mxu0 %v2084
        %v2219 = vpop.f32.mrb[0].mxu0
        %v2220 = vadd.f32 0.0, %v2219
        %v2221 = vpop.f32.mrb[0].mxu0
        %v2222 = vpop.f32.mrb[0].mxu0
        %v2223 = vadd.f32 0.0, %v2222
        %v2224 = vpop.f32.mrb[0].mxu0
        %2225 = vmatprep.mubr.bf16.mxu0 0
        %2226 = vmatmul.mubr.bf16.gmra.mrb[0].mxu0 %v2087
        %v2227 = vpop.f32.mrb[0].mxu0
        %v2228 = vadd.f32 0.0, %v2227
        %v2229 = vpop.f32.mrb[0].mxu0
        %v2230 = vpop.f32.mrb[0].mxu0
        %v2231 = vadd.f32 0.0, %v2230
        %v2232 = vpop.f32.mrb[0].mxu0
        %2233 = vmatprep.mubr.bf16.mxu0 0
        %2234 = vmatmul.mubr.bf16.gmra.mrb[0].mxu0 %v2090
        %v2235 = vpop.f32.mrb[0].mxu0
        %v2236 = vadd.f32 0.0, %v2235
        %v2237 = vpop.f32.mrb[0].mxu0
        %v2238 = vpop.f32.mrb[0].mxu0
        %v2239 = vadd.f32 0.0, %v2238
        %v2240 = vpop.f32.mrb[0].mxu0
        %2241 = vmatprep.mubr.bf16.mxu0 0
        %2242 = vmatmul.mubr.bf16.gmra.mrb[0].mxu0 %v2093
        %v2243 = vpop.f32.mrb[0].mxu0
        %v2244 = vadd.f32 0.0, %v2243
        %v2245 = vpop.f32.mrb[0].mxu0
        %v2246 = vpop.f32.mrb[0].mxu0
        %v2247 = vadd.f32 0.0, %v2246
        %v2248 = vpop.f32.mrb[0].mxu0
        %2249 = vmatprep.mubr.bf16.mxu0 0
        %2250 = vmatmul.mubr.bf16.gmra.mrb[0].mxu0 %v2096
        %v2251 = vpop.f32.mrb[0].mxu0
        %v2252 = vadd.f32 0.0, %v2251
        %v2253 = vpop.f32.mrb[0].mxu0
        %v2254 = vpop.f32.mrb[0].mxu0
        %v2255 = vadd.f32 0.0, %v2254
        %v2256 = vpop.f32.mrb[0].mxu0
        %2257 = vmatprep.mubr.bf16.mxu0 0
        %2258 = vmatmul.mubr.bf16.gmra.mrb[0].mxu0 %v2099
        %v2259 = vpop.f32.mrb[0].mxu0
        %v2260 = vadd.f32 0.0, %v2259
        %v2261 = vpop.f32.mrb[0].mxu0
        %v2262 = vpop.f32.mrb[0].mxu0
        %v2263 = vadd.f32 0.0, %v2262
        %v2264 = vpop.f32.mrb[0].mxu0
        %2265 = vmatprep.mubr.bf16.mxu0 0
        %2266 = vmatmul.mubr.bf16.gmra.mrb[0].mxu0 %v2102
        %v2267 = vpop.f32.mrb[0].mxu0
        %v2268 = vadd.f32 0.0, %v2267
        %v2269 = vpop.f32.mrb[0].mxu0
        %v2270 = vpop.f32.mrb[0].mxu0
        %v2271 = vadd.f32 0.0, %v2270
        %v2272 = vpop.f32.mrb[0].mxu0
        %2273 = vmatprep.mubr.bf16.mxu0 0
        %2274 = vmatmul.mubr.bf16.gmra.mrb[0].mxu0 %v2105
        %v2275 = vpop.f32.mrb[0].mxu0
        %v2276 = vadd.f32 0.0, %v2275
        %v2277 = vpop.f32.mrb[0].mxu0
        %v2278 = vpop.f32.mrb[0].mxu0
        %v2279 = vadd.f32 0.0, %v2278
        %v2280 = vpop.f32.mrb[0].mxu0
        %2281 = vmatprep.mubr.bf16.mxu0 0
        %2282 = vmatmul.mubr.bf16.gmra.mrb[0].mxu0 %v2108
        %v2283 = vpop.f32.mrb[0].mxu0
        %v2284 = vadd.f32 0.0, %v2283
        %v2285 = vpop.f32.mrb[0].mxu0
        %v2286 = vpop.f32.mrb[0].mxu0
        %v2287 = vadd.f32 0.0, %v2286
        %v2288 = vpop.f32.mrb[0].mxu0
        %2289 = vdwg.mxu0
        %v2290 = vadd.f32 %v1979, %v2148
        %v2291 = vadd.f32 %v1980, %v2151
        %v2292 = vadd.f32 %v1981, %v2156
        %v2293 = vadd.f32 %v1982, %v2159
        %v2294 = vadd.f32 %v1983, %v2164
        %v2295 = vadd.f32 %v1984, %v2167
        %v2296 = vadd.f32 %v1985, %v2172
        %v2297 = vadd.f32 %v1986, %v2175
        %v2298 = vadd.f32 %v1987, %v2180
        %v2299 = vadd.f32 %v1988, %v2183
        %v2300 = vadd.f32 %v1989, %v2188
        %v2301 = vadd.f32 %v1990, %v2191
        %v2302 = vadd.f32 %v1991, %v2196
        %v2303 = vadd.f32 %v1992, %v2199
        %v2304 = vadd.f32 %v1993, %v2204
        %v2305 = vadd.f32 %v1994, %v2207
        %v2306 = vadd.f32 %v1995, %v2212
        %v2307 = vadd.f32 %v1996, %v2215
        %v2308 = vadd.f32 %v1997, %v2220
        %v2309 = vadd.f32 %v1998, %v2223
        %v2310 = vadd.f32 %v1999, %v2228
        %v2311 = vadd.f32 %v2000, %v2231
        %v2312 = vadd.f32 %v2001, %v2236
        %v2313 = vadd.f32 %v2002, %v2239
        %v2314 = vadd.f32 %v2003, %v2244
        %v2315 = vadd.f32 %v2004, %v2247
        %v2316 = vadd.f32 %v2005, %v2252
        %v2317 = vadd.f32 %v2006, %v2255
        %v2318 = vadd.f32 %v2007, %v2260
        %v2319 = vadd.f32 %v2008, %v2263
        %v2320 = vadd.f32 %v2009, %v2268
        %v2321 = vadd.f32 %v2010, %v2271
        %v2322 = vadd.f32 %v2011, %v2276
        %v2323 = vadd.f32 %v2012, %v2279
        %v2324 = vadd.f32 %v2013, %v2284
        %v2325 = vadd.f32 %v2014, %v2287
        %v2326 = vpack.c.bf16 %v487, %v486
        %v2327 = vpack.c.bf16 %v488, %v488
        %s2328 = scalar_lea.vmem %s2, 12
        %v2329 = vld [vmem:[%s2328] sm:$0x3]
        %v2332 = vrot.slane %v2326, 2
        %v2333 = vsel %vm2018, %v2052, %v2332
        %v2334 = vrot.slane %v2327, 2
        %v2335 = vsel %vm2018, %v2332, %v2334
        %v2337 = vsel %vm654, %v2333, 0
        %v2340 = vsel %vm654, %v2335, 0
        %v2343 = vsel %vm709, %v2329, 0
        %2345 = vmatprep.subr.bf16.mxu0 0
        %2346 = vmatpush1.bf16.msra.mxu0 %v2343
        %2347 = vmatprep.subr.bf16.mxu0 0
        %2348 = vmatpush1.bf16.msra.mxu0 0
        %2349 = vmatprep.subr.bf16.mxu0 0
        %2350 = vmatpush1.bf16.msra.mxu0 0
        %2351 = vmatprep.subr.bf16.mxu0 0
        %2352 = vmatpush1.bf16.msra.mxu0 0
        %2353 = vmatprep.subr.bf16.mxu0 0
        %2354 = vmatpush1.bf16.msra.mxu0 0
        %2355 = vmatprep.subr.bf16.mxu0 0
        %2356 = vmatpush1.bf16.msra.mxu0 0
        %2357 = vmatprep.subr.bf16.mxu0 0
        %2358 = vmatpush1.bf16.msra.mxu0 0
        %2359 = vmatprep.subr.bf16.mxu0 0
        %2360 = vmatpush1.bf16.msra.mxu0 0
        %2361 = vmatprep.subr.bf16.mxu0 0
        %2362 = vmatpush1.bf16.msra.mxu0 0
        %2363 = vmatprep.subr.bf16.mxu0 0
        %2364 = vmatpush1.bf16.msra.mxu0 0
        %2365 = vmatprep.subr.bf16.mxu0 0
        %2366 = vmatpush1.bf16.msra.mxu0 0
        %2367 = vmatprep.subr.bf16.mxu0 0
        %2368 = vmatpush1.bf16.msra.mxu0 0
        %2369 = vmatprep.subr.bf16.mxu0 0
        %2370 = vmatpush1.bf16.msra.mxu0 0
        %2371 = vmatprep.subr.bf16.mxu0 0
        %2372 = vmatpush1.bf16.msra.mxu0 0
        %2373 = vmatprep.subr.bf16.mxu0 0
        %2374 = vmatpush1.bf16.msra.mxu0 0
        %2375 = vmatprep.subr.bf16.mxu0 0
        %2376 = vmatpush1.bf16.msra.mxu0 0
        %2377 = vmatprep.mubr.bf16.mxu0 0
        %2378 = vmatmul.mubr.bf16.gmra.mrb[0].mxu0 %v2060
        %v2379 = vpop.f32.mrb[0].mxu0
        %v2380 = vadd.f32 0.0, %v2379
        %v2381 = vpop.f32.mrb[0].mxu0
        %v2382 = vpop.f32.mrb[0].mxu0
        %v2383 = vadd.f32 0.0, %v2382
        %v2384 = vpop.f32.mrb[0].mxu0
        %2385 = vmatprep.mubr.bf16.mxu0 0
        %2386 = vmatmul.mubr.bf16.gmra.mrb[0].mxu0 %v2063
        %v2387 = vpop.f32.mrb[0].mxu0
        %v2388 = vadd.f32 0.0, %v2387
        %v2389 = vpop.f32.mrb[0].mxu0
        %v2390 = vpop.f32.mrb[0].mxu0
        %v2391 = vadd.f32 0.0, %v2390
        %v2392 = vpop.f32.mrb[0].mxu0
        %2393 = vmatprep.mubr.bf16.mxu0 0
        %2394 = vmatmul.mubr.bf16.gmra.mrb[0].mxu0 %v2066
        %v2395 = vpop.f32.mrb[0].mxu0
        %v2396 = vadd.f32 0.0, %v2395
        %v2397 = vpop.f32.mrb[0].mxu0
        %v2398 = vpop.f32.mrb[0].mxu0
        %v2399 = vadd.f32 0.0, %v2398
        %v2400 = vpop.f32.mrb[0].mxu0
        %2401 = vmatprep.mubr.bf16.mxu0 0
        %2402 = vmatmul.mubr.bf16.gmra.mrb[0].mxu0 %v2069
        %v2403 = vpop.f32.mrb[0].mxu0
        %v2404 = vadd.f32 0.0, %v2403
        %v2405 = vpop.f32.mrb[0].mxu0
        %v2406 = vpop.f32.mrb[0].mxu0
        %v2407 = vadd.f32 0.0, %v2406
        %v2408 = vpop.f32.mrb[0].mxu0
        %2409 = vmatprep.mubr.bf16.mxu0 0
        %2410 = vmatmul.mubr.bf16.gmra.mrb[0].mxu0 %v2072
        %v2411 = vpop.f32.mrb[0].mxu0
        %v2412 = vadd.f32 0.0, %v2411
        %v2413 = vpop.f32.mrb[0].mxu0
        %v2414 = vpop.f32.mrb[0].mxu0
        %v2415 = vadd.f32 0.0, %v2414
        %v2416 = vpop.f32.mrb[0].mxu0
        %2417 = vmatprep.mubr.bf16.mxu0 0
        %2418 = vmatmul.mubr.bf16.gmra.mrb[0].mxu0 %v2075
        %v2419 = vpop.f32.mrb[0].mxu0
        %v2420 = vadd.f32 0.0, %v2419
        %v2421 = vpop.f32.mrb[0].mxu0
        %v2422 = vpop.f32.mrb[0].mxu0
        %v2423 = vadd.f32 0.0, %v2422
        %v2424 = vpop.f32.mrb[0].mxu0
        %2425 = vmatprep.mubr.bf16.mxu0 0
        %2426 = vmatmul.mubr.bf16.gmra.mrb[0].mxu0 %v2078
        %v2427 = vpop.f32.mrb[0].mxu0
        %v2428 = vadd.f32 0.0, %v2427
        %v2429 = vpop.f32.mrb[0].mxu0
        %v2430 = vpop.f32.mrb[0].mxu0
        %v2431 = vadd.f32 0.0, %v2430
        %v2432 = vpop.f32.mrb[0].mxu0
        %2433 = vmatprep.mubr.bf16.mxu0 0
        %2434 = vmatmul.mubr.bf16.gmra.mrb[0].mxu0 %v2081
        %v2435 = vpop.f32.mrb[0].mxu0
        %v2436 = vadd.f32 0.0, %v2435
        %v2437 = vpop.f32.mrb[0].mxu0
        %v2438 = vpop.f32.mrb[0].mxu0
        %v2439 = vadd.f32 0.0, %v2438
        %v2440 = vpop.f32.mrb[0].mxu0
        %2441 = vmatprep.mubr.bf16.mxu0 0
        %2442 = vmatmul.mubr.bf16.gmra.mrb[0].mxu0 %v2084
        %v2443 = vpop.f32.mrb[0].mxu0
        %v2444 = vadd.f32 0.0, %v2443
        %v2445 = vpop.f32.mrb[0].mxu0
        %v2446 = vpop.f32.mrb[0].mxu0
        %v2447 = vadd.f32 0.0, %v2446
        %v2448 = vpop.f32.mrb[0].mxu0
        %2449 = vmatprep.mubr.bf16.mxu0 0
        %2450 = vmatmul.mubr.bf16.gmra.mrb[0].mxu0 %v2087
        %v2451 = vpop.f32.mrb[0].mxu0
        %v2452 = vadd.f32 0.0, %v2451
        %v2453 = vpop.f32.mrb[0].mxu0
        %v2454 = vpop.f32.mrb[0].mxu0
        %v2455 = vadd.f32 0.0, %v2454
        %v2456 = vpop.f32.mrb[0].mxu0
        %2457 = vmatprep.mubr.bf16.mxu0 0
        %2458 = vmatmul.mubr.bf16.gmra.mrb[0].mxu0 %v2090
        %v2459 = vpop.f32.mrb[0].mxu0
        %v2460 = vadd.f32 0.0, %v2459
        %v2461 = vpop.f32.mrb[0].mxu0
        %v2462 = vpop.f32.mrb[0].mxu0
        %v2463 = vadd.f32 0.0, %v2462
        %v2464 = vpop.f32.mrb[0].mxu0
        %2465 = vmatprep.mubr.bf16.mxu0 0
        %2466 = vmatmul.mubr.bf16.gmra.mrb[0].mxu0 %v2093
        %v2467 = vpop.f32.mrb[0].mxu0
        %v2468 = vadd.f32 0.0, %v2467
        %v2469 = vpop.f32.mrb[0].mxu0
        %v2470 = vpop.f32.mrb[0].mxu0
        %v2471 = vadd.f32 0.0, %v2470
        %v2472 = vpop.f32.mrb[0].mxu0
        %2473 = vmatprep.mubr.bf16.mxu0 0
        %2474 = vmatmul.mubr.bf16.gmra.mrb[0].mxu0 %v2096
        %v2475 = vpop.f32.mrb[0].mxu0
        %v2476 = vadd.f32 0.0, %v2475
        %v2477 = vpop.f32.mrb[0].mxu0
        %v2478 = vpop.f32.mrb[0].mxu0
        %v2479 = vadd.f32 0.0, %v2478
        %v2480 = vpop.f32.mrb[0].mxu0
        %2481 = vmatprep.mubr.bf16.mxu0 0
        %2482 = vmatmul.mubr.bf16.gmra.mrb[0].mxu0 %v2099
        %v2483 = vpop.f32.mrb[0].mxu0
        %v2484 = vadd.f32 0.0, %v2483
        %v2485 = vpop.f32.mrb[0].mxu0
        %v2486 = vpop.f32.mrb[0].mxu0
        %v2487 = vadd.f32 0.0, %v2486
        %v2488 = vpop.f32.mrb[0].mxu0
        %2489 = vmatprep.mubr.bf16.mxu0 0
        %2490 = vmatmul.mubr.bf16.gmra.mrb[0].mxu0 %v2102
        %v2491 = vpop.f32.mrb[0].mxu0
        %v2492 = vadd.f32 0.0, %v2491
        %v2493 = vpop.f32.mrb[0].mxu0
        %v2494 = vpop.f32.mrb[0].mxu0
        %v2495 = vadd.f32 0.0, %v2494
        %v2496 = vpop.f32.mrb[0].mxu0
        %2497 = vmatprep.mubr.bf16.mxu0 0
        %2498 = vmatmul.mubr.bf16.gmra.mrb[0].mxu0 %v2105
        %v2499 = vpop.f32.mrb[0].mxu0
        %v2500 = vadd.f32 0.0, %v2499
        %v2501 = vpop.f32.mrb[0].mxu0
        %v2502 = vpop.f32.mrb[0].mxu0
        %v2503 = vadd.f32 0.0, %v2502
        %v2504 = vpop.f32.mrb[0].mxu0
        %2505 = vmatprep.mubr.bf16.mxu0 0
        %2506 = vmatmul.mubr.bf16.gmra.mrb[0].mxu0 %v2337
        %v2507 = vpop.f32.mrb[0].mxu0
        %v2508 = vadd.f32 0.0, %v2507
        %v2509 = vpop.f32.mrb[0].mxu0
        %v2510 = vpop.f32.mrb[0].mxu0
        %v2511 = vadd.f32 0.0, %v2510
        %v2512 = vpop.f32.mrb[0].mxu0
        %2513 = vmatprep.mubr.bf16.mxu0 0
        %2514 = vmatmul.mubr.bf16.gmra.mrb[0].mxu0 %v2340
        %v2515 = vpop.f32.mrb[0].mxu0
        %v2516 = vadd.f32 0.0, %v2515
        %v2517 = vpop.f32.mrb[0].mxu0
        %v2518 = vpop.f32.mrb[0].mxu0
        %v2519 = vadd.f32 0.0, %v2518
        %v2520 = vpop.f32.mrb[0].mxu0
        %2521 = vdwg.mxu0
        %v2522 = vadd.f32 %v2290, %v2380
        %v2523 = vadd.f32 %v2291, %v2383
        %v2524 = vadd.f32 %v2292, %v2388
        %v2525 = vadd.f32 %v2293, %v2391
        %v2526 = vadd.f32 %v2294, %v2396
        %v2527 = vadd.f32 %v2295, %v2399
        %v2528 = vadd.f32 %v2296, %v2404
        %v2529 = vadd.f32 %v2297, %v2407
        %v2530 = vadd.f32 %v2298, %v2412
        %v2531 = vadd.f32 %v2299, %v2415
        %v2532 = vadd.f32 %v2300, %v2420
        %v2533 = vadd.f32 %v2301, %v2423
        %v2534 = vadd.f32 %v2302, %v2428
        %v2535 = vadd.f32 %v2303, %v2431
        %v2536 = vadd.f32 %v2304, %v2436
        %v2537 = vadd.f32 %v2305, %v2439
        %v2538 = vadd.f32 %v2306, %v2444
        %v2539 = vadd.f32 %v2307, %v2447
        %v2540 = vadd.f32 %v2308, %v2452
        %v2541 = vadd.f32 %v2309, %v2455
        %v2542 = vadd.f32 %v2310, %v2460
        %v2543 = vadd.f32 %v2311, %v2463
        %v2544 = vadd.f32 %v2312, %v2468
        %v2545 = vadd.f32 %v2313, %v2471
        %v2546 = vadd.f32 %v2314, %v2476
        %v2547 = vadd.f32 %v2315, %v2479
        %v2548 = vadd.f32 %v2316, %v2484
        %v2549 = vadd.f32 %v2317, %v2487
        %v2550 = vadd.f32 %v2318, %v2492
        %v2551 = vadd.f32 %v2319, %v2495
        %v2552 = vadd.f32 %v2320, %v2500
        %v2553 = vadd.f32 %v2321, %v2503
        %v2554 = vadd.f32 %v2322, %v2508
        %v2555 = vadd.f32 %v2323, %v2511
        %v2556 = vadd.f32 %v2324, %v2516
        %v2557 = vadd.f32 %v2325, %v2519
        %s2558 = scalar_lea.vmem %s2, 14
        %v2559 = vld [vmem:[%s2558] sm:$0x3]
        %vm2560 = vsmask.f32 5376
        %v2561 = vrot.slane %v531, 2
        %v2562 = vrot.slane %v527, 3
        %v2563 = vor.u32 %v2561, %v2562
        %v2564 = vrot.slane %v539, 2
        %v2565 = vrot.slane %v535, 3
        %v2566 = vor.u32 %v2564, %v2565
        %v2567 = vsel %vm2560, %v2563, %v2566
        %v2568 = vrot.slane %v547, 2
        %v2569 = vrot.slane %v543, 3
        %v2570 = vor.u32 %v2568, %v2569
        %v2571 = vsel %vm2560, %v2566, %v2570
        %v2572 = vrot.slane %v555, 2
        %v2573 = vrot.slane %v551, 3
        %v2574 = vor.u32 %v2572, %v2573
        %v2575 = vsel %vm2560, %v2570, %v2574
        %v2576 = vrot.slane %v563, 2
        %v2577 = vrot.slane %v559, 3
        %v2578 = vor.u32 %v2576, %v2577
        %v2579 = vsel %vm2560, %v2574, %v2578
        %v2580 = vrot.slane %v571, 2
        %v2581 = vrot.slane %v567, 3
        %v2582 = vor.u32 %v2580, %v2581
        %v2583 = vsel %vm2560, %v2578, %v2582
        %v2584 = vrot.slane %v579, 2
        %v2585 = vrot.slane %v575, 3
        %v2586 = vor.u32 %v2584, %v2585
        %v2587 = vsel %vm2560, %v2582, %v2586
        %v2588 = vrot.slane %v587, 2
        %v2589 = vrot.slane %v583, 3
        %v2590 = vor.u32 %v2588, %v2589
        %v2591 = vsel %vm2560, %v2586, %v2590
        %v2592 = vrot.slane %v595, 2
        %v2593 = vrot.slane %v591, 3
        %v2594 = vor.u32 %v2592, %v2593
        %v2595 = vsel %vm2560, %v2590, %v2594
        %v2596 = vrot.slane %v603, 2
        %v2597 = vrot.slane %v599, 3
        %v2598 = vor.u32 %v2596, %v2597
        %v2599 = vsel %vm2560, %v2594, %v2598
        %v2600 = vrot.slane %v611, 2
        %v2601 = vrot.slane %v607, 3
        %v2602 = vor.u32 %v2600, %v2601
        %v2603 = vsel %vm2560, %v2598, %v2602
        %v2604 = vrot.slane %v619, 2
        %v2605 = vrot.slane %v615, 3
        %v2606 = vor.u32 %v2604, %v2605
        %v2607 = vsel %vm2560, %v2602, %v2606
        %v2608 = vrot.slane %v627, 2
        %v2609 = vrot.slane %v623, 3
        %v2610 = vor.u32 %v2608, %v2609
        %v2611 = vsel %vm2560, %v2606, %v2610
        %v2612 = vrot.slane %v635, 2
        %v2613 = vrot.slane %v631, 3
        %v2614 = vor.u32 %v2612, %v2613
        %v2615 = vsel %vm2560, %v2610, %v2614
        %v2616 = vrot.slane %v643, 2
        %v2617 = vrot.slane %v639, 3
        %v2618 = vor.u32 %v2616, %v2617
        %v2619 = vsel %vm2560, %v2614, %v2618
        %v2620 = vrot.slane %v651, 2
        %v2621 = vrot.slane %v647, 3
        %v2622 = vor.u32 %v2620, %v2621
        %v2623 = vsel %vm2560, %v2618, %v2622
        %v2624 = vrot.slane %v1732, 2
        %v2625 = vrot.slane %v1735, 3
        %v2626 = vor.u32 %v2624, %v2625
        %v2627 = vsel %vm2560, %v2622, %v2626
        %v2629 = vshrl.u32 %v2326, 16
        %v2631 = vrot.slane %v2629, 2
        %v2632 = vshll.u32 %v2326, 16
        %v2634 = vrot.slane %v2632, 3
        %v2635 = vor.u32 %v2631, %v2634
        %v2636 = vsel %vm2560, %v2626, %v2635
        %v2638 = vshrl.u32 %v2327, 16
        %v2640 = vrot.slane %v2638, 2
        %v2641 = vshll.u32 %v2327, 16
        %v2643 = vrot.slane %v2641, 3
        %v2644 = vor.u32 %v2640, %v2643
        %v2645 = vsel %vm2560, %v2635, %v2644
        %v2647 = vsel %vm654, %v2567, 0
        %v2650 = vsel %vm654, %v2571, 0
        %v2653 = vsel %vm654, %v2575, 0
        %v2656 = vsel %vm654, %v2579, 0
        %v2659 = vsel %vm654, %v2583, 0
        %v2662 = vsel %vm654, %v2587, 0
        %v2665 = vsel %vm654, %v2591, 0
        %v2668 = vsel %vm654, %v2595, 0
        %v2671 = vsel %vm654, %v2599, 0
        %v2674 = vsel %vm654, %v2603, 0
        %v2677 = vsel %vm654, %v2607, 0
        %v2680 = vsel %vm654, %v2611, 0
        %v2683 = vsel %vm654, %v2615, 0
        %v2686 = vsel %vm654, %v2619, 0
        %v2689 = vsel %vm654, %v2623, 0
        %v2692 = vsel %vm654, %v2627, 0
        %v2695 = vsel %vm654, %v2636, 0
        %v2698 = vsel %vm654, %v2645, 0
        %v2701 = vsel %vm709, %v2559, 0
        %2703 = vmatprep.subr.bf16.mxu0 0
        %2704 = vmatpush1.bf16.msra.mxu0 %v2701
        %2705 = vmatprep.subr.bf16.mxu0 0
        %2706 = vmatpush1.bf16.msra.mxu0 0
        %2707 = vmatprep.subr.bf16.mxu0 0
        %2708 = vmatpush1.bf16.msra.mxu0 0
        %2709 = vmatprep.subr.bf16.mxu0 0
        %2710 = vmatpush1.bf16.msra.mxu0 0
        %2711 = vmatprep.subr.bf16.mxu0 0
        %2712 = vmatpush1.bf16.msra.mxu0 0
        %2713 = vmatprep.subr.bf16.mxu0 0
        %2714 = vmatpush1.bf16.msra.mxu0 0
        %2715 = vmatprep.subr.bf16.mxu0 0
        %2716 = vmatpush1.bf16.msra.mxu0 0
        %2717 = vmatprep.subr.bf16.mxu0 0
        %2718 = vmatpush1.bf16.msra.mxu0 0
        %2719 = vmatprep.subr.bf16.mxu0 0
        %2720 = vmatpush1.bf16.msra.mxu0 0
        %2721 = vmatprep.subr.bf16.mxu0 0
        %2722 = vmatpush1.bf16.msra.mxu0 0
        %2723 = vmatprep.subr.bf16.mxu0 0
        %2724 = vmatpush1.bf16.msra.mxu0 0
        %2725 = vmatprep.subr.bf16.mxu0 0
        %2726 = vmatpush1.bf16.msra.mxu0 0
        %2727 = vmatprep.subr.bf16.mxu0 0
        %2728 = vmatpush1.bf16.msra.mxu0 0
        %2729 = vmatprep.subr.bf16.mxu0 0
        %2730 = vmatpush1.bf16.msra.mxu0 0
        %2731 = vmatprep.subr.bf16.mxu0 0
        %2732 = vmatpush1.bf16.msra.mxu0 0
        %2733 = vmatprep.subr.bf16.mxu0 0
        %2734 = vmatpush1.bf16.msra.mxu0 0
        %2735 = vmatprep.mubr.bf16.mxu0 0
        %2736 = vmatmul.mubr.bf16.gmra.mrb[0].mxu0 %v2647
        %v2737 = vpop.f32.mrb[0].mxu0
        %v2738 = vadd.f32 0.0, %v2737
        %v2739 = vpop.f32.mrb[0].mxu0
        %v2740 = vpop.f32.mrb[0].mxu0
        %v2741 = vadd.f32 0.0, %v2740
        %v2742 = vpop.f32.mrb[0].mxu0
        %2743 = vmatprep.mubr.bf16.mxu0 0
        %2744 = vmatmul.mubr.bf16.gmra.mrb[0].mxu0 %v2650
        %v2745 = vpop.f32.mrb[0].mxu0
        %v2746 = vadd.f32 0.0, %v2745
        %v2747 = vpop.f32.mrb[0].mxu0
        %v2748 = vpop.f32.mrb[0].mxu0
        %v2749 = vadd.f32 0.0, %v2748
        %v2750 = vpop.f32.mrb[0].mxu0
        %2751 = vmatprep.mubr.bf16.mxu0 0
        %2752 = vmatmul.mubr.bf16.gmra.mrb[0].mxu0 %v2653
        %v2753 = vpop.f32.mrb[0].mxu0
        %v2754 = vadd.f32 0.0, %v2753
        %v2755 = vpop.f32.mrb[0].mxu0
        %v2756 = vpop.f32.mrb[0].mxu0
        %v2757 = vadd.f32 0.0, %v2756
        %v2758 = vpop.f32.mrb[0].mxu0
        %2759 = vmatprep.mubr.bf16.mxu0 0
        %2760 = vmatmul.mubr.bf16.gmra.mrb[0].mxu0 %v2656
        %v2761 = vpop.f32.mrb[0].mxu0
        %v2762 = vadd.f32 0.0, %v2761
        %v2763 = vpop.f32.mrb[0].mxu0
        %v2764 = vpop.f32.mrb[0].mxu0
        %v2765 = vadd.f32 0.0, %v2764
        %v2766 = vpop.f32.mrb[0].mxu0
        %2767 = vmatprep.mubr.bf16.mxu0 0
        %2768 = vmatmul.mubr.bf16.gmra.mrb[0].mxu0 %v2659
        %v2769 = vpop.f32.mrb[0].mxu0
        %v2770 = vadd.f32 0.0, %v2769
        %v2771 = vpop.f32.mrb[0].mxu0
        %v2772 = vpop.f32.mrb[0].mxu0
        %v2773 = vadd.f32 0.0, %v2772
        %v2774 = vpop.f32.mrb[0].mxu0
        %2775 = vmatprep.mubr.bf16.mxu0 0
        %2776 = vmatmul.mubr.bf16.gmra.mrb[0].mxu0 %v2662
        %v2777 = vpop.f32.mrb[0].mxu0
        %v2778 = vadd.f32 0.0, %v2777
        %v2779 = vpop.f32.mrb[0].mxu0
        %v2780 = vpop.f32.mrb[0].mxu0
        %v2781 = vadd.f32 0.0, %v2780
        %v2782 = vpop.f32.mrb[0].mxu0
        %2783 = vmatprep.mubr.bf16.mxu0 0
        %2784 = vmatmul.mubr.bf16.gmra.mrb[0].mxu0 %v2665
        %v2785 = vpop.f32.mrb[0].mxu0
        %v2786 = vadd.f32 0.0, %v2785
        %v2787 = vpop.f32.mrb[0].mxu0
        %v2788 = vpop.f32.mrb[0].mxu0
        %v2789 = vadd.f32 0.0, %v2788
        %v2790 = vpop.f32.mrb[0].mxu0
        %2791 = vmatprep.mubr.bf16.mxu0 0
        %2792 = vmatmul.mubr.bf16.gmra.mrb[0].mxu0 %v2668
        %v2793 = vpop.f32.mrb[0].mxu0
        %v2794 = vadd.f32 0.0, %v2793
        %v2795 = vpop.f32.mrb[0].mxu0
        %v2796 = vpop.f32.mrb[0].mxu0
        %v2797 = vadd.f32 0.0, %v2796
        %v2798 = vpop.f32.mrb[0].mxu0
        %2799 = vmatprep.mubr.bf16.mxu0 0
        %2800 = vmatmul.mubr.bf16.gmra.mrb[0].mxu0 %v2671
        %v2801 = vpop.f32.mrb[0].mxu0
        %v2802 = vadd.f32 0.0, %v2801
        %v2803 = vpop.f32.mrb[0].mxu0
        %v2804 = vpop.f32.mrb[0].mxu0
        %v2805 = vadd.f32 0.0, %v2804
        %v2806 = vpop.f32.mrb[0].mxu0
        %2807 = vmatprep.mubr.bf16.mxu0 0
        %2808 = vmatmul.mubr.bf16.gmra.mrb[0].mxu0 %v2674
        %v2809 = vpop.f32.mrb[0].mxu0
        %v2810 = vadd.f32 0.0, %v2809
        %v2811 = vpop.f32.mrb[0].mxu0
        %v2812 = vpop.f32.mrb[0].mxu0
        %v2813 = vadd.f32 0.0, %v2812
        %v2814 = vpop.f32.mrb[0].mxu0
        %2815 = vmatprep.mubr.bf16.mxu0 0
        %2816 = vmatmul.mubr.bf16.gmra.mrb[0].mxu0 %v2677
        %v2817 = vpop.f32.mrb[0].mxu0
        %v2818 = vadd.f32 0.0, %v2817
        %v2819 = vpop.f32.mrb[0].mxu0
        %v2820 = vpop.f32.mrb[0].mxu0
        %v2821 = vadd.f32 0.0, %v2820
        %v2822 = vpop.f32.mrb[0].mxu0
        %2823 = vmatprep.mubr.bf16.mxu0 0
        %2824 = vmatmul.mubr.bf16.gmra.mrb[0].mxu0 %v2680
        %v2825 = vpop.f32.mrb[0].mxu0
        %v2826 = vadd.f32 0.0, %v2825
        %v2827 = vpop.f32.mrb[0].mxu0
        %v2828 = vpop.f32.mrb[0].mxu0
        %v2829 = vadd.f32 0.0, %v2828
        %v2830 = vpop.f32.mrb[0].mxu0
        %2831 = vmatprep.mubr.bf16.mxu0 0
        %2832 = vmatmul.mubr.bf16.gmra.mrb[0].mxu0 %v2683
        %v2833 = vpop.f32.mrb[0].mxu0
        %v2834 = vadd.f32 0.0, %v2833
        %v2835 = vpop.f32.mrb[0].mxu0
        %v2836 = vpop.f32.mrb[0].mxu0
        %v2837 = vadd.f32 0.0, %v2836
        %v2838 = vpop.f32.mrb[0].mxu0
        %2839 = vmatprep.mubr.bf16.mxu0 0
        %2840 = vmatmul.mubr.bf16.gmra.mrb[0].mxu0 %v2686
        %v2841 = vpop.f32.mrb[0].mxu0
        %v2842 = vadd.f32 0.0, %v2841
        %v2843 = vpop.f32.mrb[0].mxu0
        %v2844 = vpop.f32.mrb[0].mxu0
        %v2845 = vadd.f32 0.0, %v2844
        %v2846 = vpop.f32.mrb[0].mxu0
        %2847 = vmatprep.mubr.bf16.mxu0 0
        %2848 = vmatmul.mubr.bf16.gmra.mrb[0].mxu0 %v2689
        %v2849 = vpop.f32.mrb[0].mxu0
        %v2850 = vadd.f32 0.0, %v2849
        %v2851 = vpop.f32.mrb[0].mxu0
        %v2852 = vpop.f32.mrb[0].mxu0
        %v2853 = vadd.f32 0.0, %v2852
        %v2854 = vpop.f32.mrb[0].mxu0
        %2855 = vmatprep.mubr.bf16.mxu0 0
        %2856 = vmatmul.mubr.bf16.gmra.mrb[0].mxu0 %v2692
        %v2857 = vpop.f32.mrb[0].mxu0
        %v2858 = vadd.f32 0.0, %v2857
        %v2859 = vpop.f32.mrb[0].mxu0
        %v2860 = vpop.f32.mrb[0].mxu0
        %v2861 = vadd.f32 0.0, %v2860
        %v2862 = vpop.f32.mrb[0].mxu0
        %2863 = vmatprep.mubr.bf16.mxu0 0
        %2864 = vmatmul.mubr.bf16.gmra.mrb[0].mxu0 %v2695
        %v2865 = vpop.f32.mrb[0].mxu0
        %v2866 = vadd.f32 0.0, %v2865
        %v2867 = vpop.f32.mrb[0].mxu0
        %v2868 = vpop.f32.mrb[0].mxu0
        %v2869 = vadd.f32 0.0, %v2868
        %v2870 = vpop.f32.mrb[0].mxu0
        %2871 = vmatprep.mubr.bf16.mxu0 0
        %2872 = vmatmul.mubr.bf16.gmra.mrb[0].mxu0 %v2698
        %v2873 = vpop.f32.mrb[0].mxu0
        %v2874 = vadd.f32 0.0, %v2873
        %v2875 = vpop.f32.mrb[0].mxu0
        %v2876 = vpop.f32.mrb[0].mxu0
        %v2877 = vadd.f32 0.0, %v2876
        %v2878 = vpop.f32.mrb[0].mxu0
        %2879 = vdwg.mxu0
        %v2880 = vadd.f32 %v2522, %v2738
        %v2881 = vadd.f32 %v2523, %v2741
        %v2882 = vadd.f32 %v2524, %v2746
        %v2883 = vadd.f32 %v2525, %v2749
        %v2884 = vadd.f32 %v2526, %v2754
        %v2885 = vadd.f32 %v2527, %v2757
        %v2886 = vadd.f32 %v2528, %v2762
        %v2887 = vadd.f32 %v2529, %v2765
        %v2888 = vadd.f32 %v2530, %v2770
        %v2889 = vadd.f32 %v2531, %v2773
        %v2890 = vadd.f32 %v2532, %v2778
        %v2891 = vadd.f32 %v2533, %v2781
        %v2892 = vadd.f32 %v2534, %v2786
        %v2893 = vadd.f32 %v2535, %v2789
        %v2894 = vadd.f32 %v2536, %v2794
        %v2895 = vadd.f32 %v2537, %v2797
        %v2896 = vadd.f32 %v2538, %v2802
        %v2897 = vadd.f32 %v2539, %v2805
        %v2898 = vadd.f32 %v2540, %v2810
        %v2899 = vadd.f32 %v2541, %v2813
        %v2900 = vadd.f32 %v2542, %v2818
        %v2901 = vadd.f32 %v2543, %v2821
        %v2902 = vadd.f32 %v2544, %v2826
        %v2903 = vadd.f32 %v2545, %v2829
        %v2904 = vadd.f32 %v2546, %v2834
        %v2905 = vadd.f32 %v2547, %v2837
        %v2906 = vadd.f32 %v2548, %v2842
        %v2907 = vadd.f32 %v2549, %v2845
        %v2908 = vadd.f32 %v2550, %v2850
        %v2909 = vadd.f32 %v2551, %v2853
        %v2910 = vadd.f32 %v2552, %v2858
        %v2911 = vadd.f32 %v2553, %v2861
        %v2912 = vadd.f32 %v2554, %v2866
        %v2913 = vadd.f32 %v2555, %v2869
        %v2914 = vadd.f32 %v2556, %v2874
        %v2915 = vadd.f32 %v2557, %v2877
        %s2916 = scalar_lea.vmem %s2, 16
        %v2917 = vld [vmem:[%s2916] sm:$0x3]
        %vm2918 = vcmask 1044480
        %v2919 = vrot.slane %v491, 3
        %v2920 = vrot.slane %v492, 3
        %v2921 = vsel %vm2918, %v2919, %v2920
        %v2922 = vrot.slane %v493, 3
        %v2923 = vsel %vm2918, %v2920, %v2922
        %v2924 = vrot.slane %v494, 3
        %v2925 = vsel %vm2918, %v2922, %v2924
        %v2926 = vrot.slane %v495, 3
        %v2927 = vsel %vm2918, %v2924, %v2926
        %v2928 = vrot.slane %v496, 3
        %v2929 = vsel %vm2918, %v2926, %v2928
        %v2930 = vrot.slane %v497, 3
        %v2931 = vsel %vm2918, %v2928, %v2930
        %v2932 = vrot.slane %v498, 3
        %v2933 = vsel %vm2918, %v2930, %v2932
        %v2934 = vrot.slane %v499, 3
        %v2935 = vsel %vm2918, %v2932, %v2934
        %v2936 = vrot.slane %v500, 3
        %v2937 = vsel %vm2918, %v2934, %v2936
        %v2938 = vrot.slane %v501, 3
        %v2939 = vsel %vm2918, %v2936, %v2938
        %v2940 = vrot.slane %v502, 3
        %v2941 = vsel %vm2918, %v2938, %v2940
        %v2942 = vrot.slane %v503, 3
        %v2943 = vsel %vm2918, %v2940, %v2942
        %v2944 = vrot.slane %v504, 3
        %v2945 = vsel %vm2918, %v2942, %v2944
        %v2946 = vrot.slane %v505, 3
        %v2947 = vsel %vm2918, %v2944, %v2946
        %v2948 = vrot.slane %v506, 3
        %v2949 = vsel %vm2918, %v2946, %v2948
        %v2950 = vrot.slane %v1432, 3
        %v2951 = vsel %vm2918, %v2948, %v2950
        %v2952 = vrot.slane %v2326, 3
        %v2953 = vsel %vm2918, %v2950, %v2952
        %v2954 = vrot.slane %v2327, 3
        %v2955 = vsel %vm2918, %v2952, %v2954
        %v2957 = vsel %vm654, %v2921, 0
        %v2960 = vsel %vm654, %v2923, 0
        %v2963 = vsel %vm654, %v2925, 0
        %v2966 = vsel %vm654, %v2927, 0
        %v2969 = vsel %vm654, %v2929, 0
        %v2972 = vsel %vm654, %v2931, 0
        %v2975 = vsel %vm654, %v2933, 0
        %v2978 = vsel %vm654, %v2935, 0
        %v2981 = vsel %vm654, %v2937, 0
        %v2984 = vsel %vm654, %v2939, 0
        %v2987 = vsel %vm654, %v2941, 0
        %v2990 = vsel %vm654, %v2943, 0
        %v2993 = vsel %vm654, %v2945, 0
        %v2996 = vsel %vm654, %v2947, 0
        %v2999 = vsel %vm654, %v2949, 0
        %v3002 = vsel %vm654, %v2951, 0
        %v3005 = vsel %vm654, %v2953, 0
        %v3008 = vsel %vm654, %v2955, 0
        %v3011 = vsel %vm709, %v2917, 0
        %3013 = vmatprep.subr.bf16.mxu0 0
        %3014 = vmatpush1.bf16.msra.mxu0 %v3011
        %3015 = vmatprep.subr.bf16.mxu0 0
        %3016 = vmatpush1.bf16.msra.mxu0 0
        %3017 = vmatprep.subr.bf16.mxu0 0
        %3018 = vmatpush1.bf16.msra.mxu0 0
        %3019 = vmatprep.subr.bf16.mxu0 0
        %3020 = vmatpush1.bf16.msra.mxu0 0
        %3021 = vmatprep.subr.bf16.mxu0 0
        %3022 = vmatpush1.bf16.msra.mxu0 0
        %3023 = vmatprep.subr.bf16.mxu0 0
        %3024 = vmatpush1.bf16.msra.mxu0 0
        %3025 = vmatprep.subr.bf16.mxu0 0
        %3026 = vmatpush1.bf16.msra.mxu0 0
        %3027 = vmatprep.subr.bf16.mxu0 0
        %3028 = vmatpush1.bf16.msra.mxu0 0
        %3029 = vmatprep.subr.bf16.mxu0 0
        %3030 = vmatpush1.bf16.msra.mxu0 0
        %3031 = vmatprep.subr.bf16.mxu0 0
        %3032 = vmatpush1.bf16.msra.mxu0 0
        %3033 = vmatprep.subr.bf16.mxu0 0
        %3034 = vmatpush1.bf16.msra.mxu0 0
        %3035 = vmatprep.subr.bf16.mxu0 0
        %3036 = vmatpush1.bf16.msra.mxu0 0
        %3037 = vmatprep.subr.bf16.mxu0 0
        %3038 = vmatpush1.bf16.msra.mxu0 0
        %3039 = vmatprep.subr.bf16.mxu0 0
        %3040 = vmatpush1.bf16.msra.mxu0 0
        %3041 = vmatprep.subr.bf16.mxu0 0
        %3042 = vmatpush1.bf16.msra.mxu0 0
        %3043 = vmatprep.subr.bf16.mxu0 0
        %3044 = vmatpush1.bf16.msra.mxu0 0
        %3045 = vmatprep.mubr.bf16.mxu0 0
        %3046 = vmatmul.mubr.bf16.gmra.mrb[0].mxu0 %v2957
        %v3047 = vpop.f32.mrb[0].mxu0
        %v3048 = vadd.f32 0.0, %v3047
        %v3049 = vpop.f32.mrb[0].mxu0
        %v3050 = vpop.f32.mrb[0].mxu0
        %v3051 = vadd.f32 0.0, %v3050
        %v3052 = vpop.f32.mrb[0].mxu0
        %3053 = vmatprep.mubr.bf16.mxu0 0
        %3054 = vmatmul.mubr.bf16.gmra.mrb[0].mxu0 %v2960
        %v3055 = vpop.f32.mrb[0].mxu0
        %v3056 = vadd.f32 0.0, %v3055
        %v3057 = vpop.f32.mrb[0].mxu0
        %v3058 = vpop.f32.mrb[0].mxu0
        %v3059 = vadd.f32 0.0, %v3058
        %v3060 = vpop.f32.mrb[0].mxu0
        %3061 = vmatprep.mubr.bf16.mxu0 0
        %3062 = vmatmul.mubr.bf16.gmra.mrb[0].mxu0 %v2963
        %v3063 = vpop.f32.mrb[0].mxu0
        %v3064 = vadd.f32 0.0, %v3063
        %v3065 = vpop.f32.mrb[0].mxu0
        %v3066 = vpop.f32.mrb[0].mxu0
        %v3067 = vadd.f32 0.0, %v3066
        %v3068 = vpop.f32.mrb[0].mxu0
        %3069 = vmatprep.mubr.bf16.mxu0 0
        %3070 = vmatmul.mubr.bf16.gmra.mrb[0].mxu0 %v2966
        %v3071 = vpop.f32.mrb[0].mxu0
        %v3072 = vadd.f32 0.0, %v3071
        %v3073 = vpop.f32.mrb[0].mxu0
        %v3074 = vpop.f32.mrb[0].mxu0
        %v3075 = vadd.f32 0.0, %v3074
        %v3076 = vpop.f32.mrb[0].mxu0
        %3077 = vmatprep.mubr.bf16.mxu0 0
        %3078 = vmatmul.mubr.bf16.gmra.mrb[0].mxu0 %v2969
        %v3079 = vpop.f32.mrb[0].mxu0
        %v3080 = vadd.f32 0.0, %v3079
        %v3081 = vpop.f32.mrb[0].mxu0
        %v3082 = vpop.f32.mrb[0].mxu0
        %v3083 = vadd.f32 0.0, %v3082
        %v3084 = vpop.f32.mrb[0].mxu0
        %3085 = vmatprep.mubr.bf16.mxu0 0
        %3086 = vmatmul.mubr.bf16.gmra.mrb[0].mxu0 %v2972
        %v3087 = vpop.f32.mrb[0].mxu0
        %v3088 = vadd.f32 0.0, %v3087
        %v3089 = vpop.f32.mrb[0].mxu0
        %v3090 = vpop.f32.mrb[0].mxu0
        %v3091 = vadd.f32 0.0, %v3090
        %v3092 = vpop.f32.mrb[0].mxu0
        %3093 = vmatprep.mubr.bf16.mxu0 0
        %3094 = vmatmul.mubr.bf16.gmra.mrb[0].mxu0 %v2975
        %v3095 = vpop.f32.mrb[0].mxu0
        %v3096 = vadd.f32 0.0, %v3095
        %v3097 = vpop.f32.mrb[0].mxu0
        %v3098 = vpop.f32.mrb[0].mxu0
        %v3099 = vadd.f32 0.0, %v3098
        %v3100 = vpop.f32.mrb[0].mxu0
        %3101 = vmatprep.mubr.bf16.mxu0 0
        %3102 = vmatmul.mubr.bf16.gmra.mrb[0].mxu0 %v2978
        %v3103 = vpop.f32.mrb[0].mxu0
        %v3104 = vadd.f32 0.0, %v3103
        %v3105 = vpop.f32.mrb[0].mxu0
        %v3106 = vpop.f32.mrb[0].mxu0
        %v3107 = vadd.f32 0.0, %v3106
        %v3108 = vpop.f32.mrb[0].mxu0
        %3109 = vmatprep.mubr.bf16.mxu0 0
        %3110 = vmatmul.mubr.bf16.gmra.mrb[0].mxu0 %v2981
        %v3111 = vpop.f32.mrb[0].mxu0
        %v3112 = vadd.f32 0.0, %v3111
        %v3113 = vpop.f32.mrb[0].mxu0
        %v3114 = vpop.f32.mrb[0].mxu0
        %v3115 = vadd.f32 0.0, %v3114
        %v3116 = vpop.f32.mrb[0].mxu0
        %3117 = vmatprep.mubr.bf16.mxu0 0
        %3118 = vmatmul.mubr.bf16.gmra.mrb[0].mxu0 %v2984
        %v3119 = vpop.f32.mrb[0].mxu0
        %v3120 = vadd.f32 0.0, %v3119
        %v3121 = vpop.f32.mrb[0].mxu0
        %v3122 = vpop.f32.mrb[0].mxu0
        %v3123 = vadd.f32 0.0, %v3122
        %v3124 = vpop.f32.mrb[0].mxu0
        %3125 = vmatprep.mubr.bf16.mxu0 0
        %3126 = vmatmul.mubr.bf16.gmra.mrb[0].mxu0 %v2987
        %v3127 = vpop.f32.mrb[0].mxu0
        %v3128 = vadd.f32 0.0, %v3127
        %v3129 = vpop.f32.mrb[0].mxu0
        %v3130 = vpop.f32.mrb[0].mxu0
        %v3131 = vadd.f32 0.0, %v3130
        %v3132 = vpop.f32.mrb[0].mxu0
        %3133 = vmatprep.mubr.bf16.mxu0 0
        %3134 = vmatmul.mubr.bf16.gmra.mrb[0].mxu0 %v2990
        %v3135 = vpop.f32.mrb[0].mxu0
        %v3136 = vadd.f32 0.0, %v3135
        %v3137 = vpop.f32.mrb[0].mxu0
        %v3138 = vpop.f32.mrb[0].mxu0
        %v3139 = vadd.f32 0.0, %v3138
        %v3140 = vpop.f32.mrb[0].mxu0
        %3141 = vmatprep.mubr.bf16.mxu0 0
        %3142 = vmatmul.mubr.bf16.gmra.mrb[0].mxu0 %v2993
        %v3143 = vpop.f32.mrb[0].mxu0
        %v3144 = vadd.f32 0.0, %v3143
        %v3145 = vpop.f32.mrb[0].mxu0
        %v3146 = vpop.f32.mrb[0].mxu0
        %v3147 = vadd.f32 0.0, %v3146
        %v3148 = vpop.f32.mrb[0].mxu0
        %3149 = vmatprep.mubr.bf16.mxu0 0
        %3150 = vmatmul.mubr.bf16.gmra.mrb[0].mxu0 %v2996
        %v3151 = vpop.f32.mrb[0].mxu0
        %v3152 = vadd.f32 0.0, %v3151
        %v3153 = vpop.f32.mrb[0].mxu0
        %v3154 = vpop.f32.mrb[0].mxu0
        %v3155 = vadd.f32 0.0, %v3154
        %v3156 = vpop.f32.mrb[0].mxu0
        %3157 = vmatprep.mubr.bf16.mxu0 0
        %3158 = vmatmul.mubr.bf16.gmra.mrb[0].mxu0 %v2999
        %v3159 = vpop.f32.mrb[0].mxu0
        %v3160 = vadd.f32 0.0, %v3159
        %v3161 = vpop.f32.mrb[0].mxu0
        %v3162 = vpop.f32.mrb[0].mxu0
        %v3163 = vadd.f32 0.0, %v3162
        %v3164 = vpop.f32.mrb[0].mxu0
        %3165 = vmatprep.mubr.bf16.mxu0 0
        %3166 = vmatmul.mubr.bf16.gmra.mrb[0].mxu0 %v3002
        %v3167 = vpop.f32.mrb[0].mxu0
        %v3168 = vadd.f32 0.0, %v3167
        %v3169 = vpop.f32.mrb[0].mxu0
        %v3170 = vpop.f32.mrb[0].mxu0
        %v3171 = vadd.f32 0.0, %v3170
        %v3172 = vpop.f32.mrb[0].mxu0
        %3173 = vmatprep.mubr.bf16.mxu0 0
        %3174 = vmatmul.mubr.bf16.gmra.mrb[0].mxu0 %v3005
        %v3175 = vpop.f32.mrb[0].mxu0
        %v3176 = vadd.f32 0.0, %v3175
        %v3177 = vpop.f32.mrb[0].mxu0
        %v3178 = vpop.f32.mrb[0].mxu0
        %v3179 = vadd.f32 0.0, %v3178
        %v3180 = vpop.f32.mrb[0].mxu0
        %3181 = vmatprep.mubr.bf16.mxu0 0
        %3182 = vmatmul.mubr.bf16.gmra.mrb[0].mxu0 %v3008
        %v3183 = vpop.f32.mrb[0].mxu0
        %v3184 = vadd.f32 0.0, %v3183
        %v3185 = vpop.f32.mrb[0].mxu0
        %v3186 = vpop.f32.mrb[0].mxu0
        %v3187 = vadd.f32 0.0, %v3186
        %v3188 = vpop.f32.mrb[0].mxu0
        %3189 = vdwg.mxu0
        %v3190 = vadd.f32 %v2880, %v3048
        %v3191 = vadd.f32 %v2881, %v3051
        %v3192 = vadd.f32 %v2882, %v3056
        %v3193 = vadd.f32 %v2883, %v3059
        %v3194 = vadd.f32 %v2884, %v3064
        %v3195 = vadd.f32 %v2885, %v3067
        %v3196 = vadd.f32 %v2886, %v3072
        %v3197 = vadd.f32 %v2887, %v3075
        %v3198 = vadd.f32 %v2888, %v3080
        %v3199 = vadd.f32 %v2889, %v3083
        %v3200 = vadd.f32 %v2890, %v3088
        %v3201 = vadd.f32 %v2891, %v3091
        %v3202 = vadd.f32 %v2892, %v3096
        %v3203 = vadd.f32 %v2893, %v3099
        %v3204 = vadd.f32 %v2894, %v3104
        %v3205 = vadd.f32 %v2895, %v3107
        %v3206 = vadd.f32 %v2896, %v3112
        %v3207 = vadd.f32 %v2897, %v3115
        %v3208 = vadd.f32 %v2898, %v3120
        %v3209 = vadd.f32 %v2899, %v3123
        %v3210 = vadd.f32 %v2900, %v3128
        %v3211 = vadd.f32 %v2901, %v3131
        %v3212 = vadd.f32 %v2902, %v3136
        %v3213 = vadd.f32 %v2903, %v3139
        %v3214 = vadd.f32 %v2904, %v3144
        %v3215 = vadd.f32 %v2905, %v3147
        %v3216 = vadd.f32 %v2906, %v3152
        %v3217 = vadd.f32 %v2907, %v3155
        %v3218 = vadd.f32 %v2908, %v3160
        %v3219 = vadd.f32 %v2909, %v3163
        %v3220 = vadd.f32 %v2910, %v3168
        %v3221 = vadd.f32 %v2911, %v3171
        %v3222 = vadd.f32 %v2912, %v3176
        %v3223 = vadd.f32 %v2913, %v3179
        %v3224 = vadd.f32 %v2914, %v3184
        %v3225 = vadd.f32 %v2915, %v3187
        %v3226 = vld [vmem:[%s3] sm:$0x1]
        %v3228 = vlaneseq
        %v3229 = vshrl.u32 %v3228, 7
        %v3230 = vsub.s32 0, %v3229
        %v3231 = vrot.slane %v3226, %v3230
        %v3233 = vadd.f32 %v3190, %v3231
        %v3234 = vadd.f32 %v3191, %v3231
        %v3235 = vadd.f32 %v3192, %v3231
        %v3236 = vadd.f32 %v3193, %v3231
        %v3237 = vadd.f32 %v3194, %v3231
        %v3238 = vadd.f32 %v3195, %v3231
        %v3239 = vadd.f32 %v3196, %v3231
        %v3240 = vadd.f32 %v3197, %v3231
        %v3241 = vadd.f32 %v3198, %v3231
        %v3242 = vadd.f32 %v3199, %v3231
        %v3243 = vadd.f32 %v3200, %v3231
        %v3244 = vadd.f32 %v3201, %v3231
        %v3245 = vadd.f32 %v3202, %v3231
        %v3246 = vadd.f32 %v3203, %v3231
        %v3247 = vadd.f32 %v3204, %v3231
        %v3248 = vadd.f32 %v3205, %v3231
        %v3249 = vadd.f32 %v3206, %v3231
        %v3250 = vadd.f32 %v3207, %v3231
        %v3251 = vadd.f32 %v3208, %v3231
        %v3252 = vadd.f32 %v3209, %v3231
        %v3253 = vadd.f32 %v3210, %v3231
        %v3254 = vadd.f32 %v3211, %v3231
        %v3255 = vadd.f32 %v3212, %v3231
        %v3256 = vadd.f32 %v3213, %v3231
        %v3257 = vadd.f32 %v3214, %v3231
        %v3258 = vadd.f32 %v3215, %v3231
        %v3259 = vadd.f32 %v3216, %v3231
        %v3260 = vadd.f32 %v3217, %v3231
        %v3261 = vadd.f32 %v3218, %v3231
        %v3262 = vadd.f32 %v3219, %v3231
        %v3263 = vadd.f32 %v3220, %v3231
        %v3264 = vadd.f32 %v3221, %v3231
        %v3265 = vadd.f32 %v3222, %v3231
        %v3266 = vadd.f32 %v3223, %v3231
        %v3267 = vadd.f32 %v3224, %v3231
        %v3268 = vadd.f32 %v3225, %v3231
        %v3269 = vmax.f32 %v3233, 0.0
        %v3270 = vmax.f32 %v3234, 0.0
        %v3271 = vmax.f32 %v3235, 0.0
        %v3272 = vmax.f32 %v3236, 0.0
        %v3273 = vmax.f32 %v3237, 0.0
        %v3274 = vmax.f32 %v3238, 0.0
        %v3275 = vmax.f32 %v3239, 0.0
        %v3276 = vmax.f32 %v3240, 0.0
        %v3277 = vmax.f32 %v3241, 0.0
        %v3278 = vmax.f32 %v3242, 0.0
        %v3279 = vmax.f32 %v3243, 0.0
        %v3280 = vmax.f32 %v3244, 0.0
        %v3281 = vmax.f32 %v3245, 0.0
        %v3282 = vmax.f32 %v3246, 0.0
        %v3283 = vmax.f32 %v3247, 0.0
        %v3284 = vmax.f32 %v3248, 0.0
        %v3285 = vmax.f32 %v3249, 0.0
        %v3286 = vmax.f32 %v3250, 0.0
        %v3287 = vmax.f32 %v3251, 0.0
        %v3288 = vmax.f32 %v3252, 0.0
        %v3289 = vmax.f32 %v3253, 0.0
        %v3290 = vmax.f32 %v3254, 0.0
        %v3291 = vmax.f32 %v3255, 0.0
        %v3292 = vmax.f32 %v3256, 0.0
        %v3293 = vmax.f32 %v3257, 0.0
        %v3294 = vmax.f32 %v3258, 0.0
        %v3295 = vmax.f32 %v3259, 0.0
        %v3296 = vmax.f32 %v3260, 0.0
        %v3297 = vmax.f32 %v3261, 0.0
        %v3298 = vmax.f32 %v3262, 0.0
        %v3299 = vmax.f32 %v3263, 0.0
        %v3300 = vmax.f32 %v3264, 0.0
        %v3301 = vmax.f32 %v3265, 0.0
        %v3302 = vmax.f32 %v3266, 0.0
        %v3303 = vmax.f32 %v3267, 0.0
        %v3304 = vmax.f32 %v3268, 0.0
        %v3305 = vld [vmem:[%s1] sm:$0xff]
        %v3306 = vld [vmem:[%s1 + $0x8] sm:$0xff]
        %v3307 = vld [vmem:[%s1 + $0x10] sm:$0xff]
        %v3308 = vld [vmem:[%s1 + $0x18] sm:$0xff]
        %v3309 = vld [vmem:[%s1 + $0x20] sm:$0xff]
        %v3310 = vld [vmem:[%s1 + $0x28] sm:$0xff]
        %v3311 = vld [vmem:[%s1 + $0x30] sm:$0xff]
        %v3312 = vld [vmem:[%s1 + $0x38] sm:$0xff]
        %v3313 = vld [vmem:[%s1 + $0x40] sm:$0xff]
        %v3314 = vld [vmem:[%s1 + $0x48] sm:$0xff]
        %v3315 = vld [vmem:[%s1 + $0x50] sm:$0xff]
        %v3316 = vld [vmem:[%s1 + $0x58] sm:$0xff]
        %v3317 = vld [vmem:[%s1 + $0x60] sm:$0xff]
        %v3318 = vld [vmem:[%s1 + $0x68] sm:$0xff]
        %v3319 = vld [vmem:[%s1 + $0x70] sm:$0xff]
        %v3320 = vld [vmem:[%s1 + $0x78] sm:$0xff]
        %v3321 = vld [vmem:[%s1 + $0x80] sm:$0xff]
        %v3322 = vld [vmem:[%s1 + $0x88] sm:$0xff]
        %v3323 = vld [vmem:[%s1 + $0x90] sm:$0xff]
        %v3324 = vld [vmem:[%s1 + $0x98] sm:$0xff]
        %v3325 = vld [vmem:[%s1 + $0xa0] sm:$0xff]
        %v3326 = vld [vmem:[%s1 + $0xa8] sm:$0xff]
        %v3327 = vld [vmem:[%s1 + $0xb0] sm:$0xff]
        %v3328 = vld [vmem:[%s1 + $0xb8] sm:$0xff]
        %v3329 = vld [vmem:[%s1 + $0xc0] sm:$0xff]
        %v3330 = vld [vmem:[%s1 + $0xc8] sm:$0xff]
        %v3331 = vld [vmem:[%s1 + $0xd0] sm:$0xff]
        %v3332 = vld [vmem:[%s1 + $0xd8] sm:$0xff]
        %v3333 = vld [vmem:[%s1 + $0xe0] sm:$0xff]
        %v3334 = vld [vmem:[%s1 + $0xe8] sm:$0xff]
        %v3335 = vld [vmem:[%s1 + $0xf0] sm:$0xff]
        %v3336 = vld [vmem:[%s1 + $0xf8] sm:$0xff]
        %v3337 = vld [vmem:[%s1 + $0x100] sm:$0xff]
        %v3338 = vld [vmem:[%s1 + $0x108] sm:$0xff]
        %v3339 = vld [vmem:[%s1 + $0x110] sm:$0xff]
        %v3340 = vld [vmem:[%s1 + $0x118] sm:$0x3f]
        %3342 = vset.pattern.permute.xlu0 0
        %3343 = vperm.xlu0 %3342, %v3305
        %v3344 = vpop.permute.xlu0 %3343
        %3347 = vset.pattern.permute.xlu0 0
        %3348 = vperm.xlu0 %3347, %v3306
        %v3349 = vpop.permute.xlu0 %3348
        %3352 = vset.pattern.permute.xlu0 0
        %3353 = vperm.xlu0 %3352, %v3307
        %v3354 = vpop.permute.xlu0 %3353
        %3357 = vset.pattern.permute.xlu0 0
        %3358 = vperm.xlu0 %3357, %v3308
        %v3359 = vpop.permute.xlu0 %3358
        %3362 = vset.pattern.permute.xlu0 0
        %3363 = vperm.xlu0 %3362, %v3309
        %v3364 = vpop.permute.xlu0 %3363
        %3367 = vset.pattern.permute.xlu0 0
        %3368 = vperm.xlu0 %3367, %v3310
        %v3369 = vpop.permute.xlu0 %3368
        %3372 = vset.pattern.permute.xlu0 0
        %3373 = vperm.xlu0 %3372, %v3311
        %v3374 = vpop.permute.xlu0 %3373
        %3377 = vset.pattern.permute.xlu0 0
        %3378 = vperm.xlu0 %3377, %v3312
        %v3379 = vpop.permute.xlu0 %3378
        %3382 = vset.pattern.permute.xlu0 0
        %3383 = vperm.xlu0 %3382, %v3313
        %v3384 = vpop.permute.xlu0 %3383
        %3387 = vset.pattern.permute.xlu0 0
        %3388 = vperm.xlu0 %3387, %v3314
        %v3389 = vpop.permute.xlu0 %3388
        %3392 = vset.pattern.permute.xlu0 0
        %3393 = vperm.xlu0 %3392, %v3315
        %v3394 = vpop.permute.xlu0 %3393
        %3397 = vset.pattern.permute.xlu0 0
        %3398 = vperm.xlu0 %3397, %v3316
        %v3399 = vpop.permute.xlu0 %3398
        %3402 = vset.pattern.permute.xlu0 0
        %3403 = vperm.xlu0 %3402, %v3317
        %v3404 = vpop.permute.xlu0 %3403
        %3407 = vset.pattern.permute.xlu0 0
        %3408 = vperm.xlu0 %3407, %v3318
        %v3409 = vpop.permute.xlu0 %3408
        %3412 = vset.pattern.permute.xlu0 0
        %3413 = vperm.xlu0 %3412, %v3319
        %v3414 = vpop.permute.xlu0 %3413
        %3417 = vset.pattern.permute.xlu0 0
        %3418 = vperm.xlu0 %3417, %v3320
        %v3419 = vpop.permute.xlu0 %3418
        %3422 = vset.pattern.permute.xlu0 0
        %3423 = vperm.xlu0 %3422, %v3321
        %v3424 = vpop.permute.xlu0 %3423
        %3427 = vset.pattern.permute.xlu0 0
        %3428 = vperm.xlu0 %3427, %v3322
        %v3429 = vpop.permute.xlu0 %3428
        %3432 = vset.pattern.permute.xlu0 0
        %3433 = vperm.xlu0 %3432, %v3323
        %v3434 = vpop.permute.xlu0 %3433
        %3437 = vset.pattern.permute.xlu0 0
        %3438 = vperm.xlu0 %3437, %v3324
        %v3439 = vpop.permute.xlu0 %3438
        %3442 = vset.pattern.permute.xlu0 0
        %3443 = vperm.xlu0 %3442, %v3325
        %v3444 = vpop.permute.xlu0 %3443
        %3447 = vset.pattern.permute.xlu0 0
        %3448 = vperm.xlu0 %3447, %v3326
        %v3449 = vpop.permute.xlu0 %3448
        %3452 = vset.pattern.permute.xlu0 0
        %3453 = vperm.xlu0 %3452, %v3327
        %v3454 = vpop.permute.xlu0 %3453
        %3457 = vset.pattern.permute.xlu0 0
        %3458 = vperm.xlu0 %3457, %v3328
        %v3459 = vpop.permute.xlu0 %3458
        %3462 = vset.pattern.permute.xlu0 0
        %3463 = vperm.xlu0 %3462, %v3329
        %v3464 = vpop.permute.xlu0 %3463
        %3467 = vset.pattern.permute.xlu0 0
        %3468 = vperm.xlu0 %3467, %v3330
        %v3469 = vpop.permute.xlu0 %3468
        %3472 = vset.pattern.permute.xlu0 0
        %3473 = vperm.xlu0 %3472, %v3331
        %v3474 = vpop.permute.xlu0 %3473
        %3477 = vset.pattern.permute.xlu0 0
        %3478 = vperm.xlu0 %3477, %v3332
        %v3479 = vpop.permute.xlu0 %3478
        %3482 = vset.pattern.permute.xlu0 0
        %3483 = vperm.xlu0 %3482, %v3333
        %v3484 = vpop.permute.xlu0 %3483
        %3487 = vset.pattern.permute.xlu0 0
        %3488 = vperm.xlu0 %3487, %v3334
        %v3489 = vpop.permute.xlu0 %3488
        %3492 = vset.pattern.permute.xlu0 0
        %3493 = vperm.xlu0 %3492, %v3335
        %v3494 = vpop.permute.xlu0 %3493
        %3497 = vset.pattern.permute.xlu0 0
        %3498 = vperm.xlu0 %3497, %v3336
        %v3499 = vpop.permute.xlu0 %3498
        %3502 = vset.pattern.permute.xlu0 0
        %3503 = vperm.xlu0 %3502, %v3337
        %v3504 = vpop.permute.xlu0 %3503
        %3507 = vset.pattern.permute.xlu0 0
        %3508 = vperm.xlu0 %3507, %v3338
        %v3509 = vpop.permute.xlu0 %3508
        %3512 = vset.pattern.permute.xlu0 0
        %3513 = vperm.xlu0 %3512, %v3339
        %v3514 = vpop.permute.xlu0 %3513
        %3517 = vset.pattern.permute.xlu0 0
        %3518 = vperm.xlu0 %3517, %v3340
        %v3519 = vpop.permute.xlu0 %3518
        %v3521 = vmul.f32 %v3269, %v3344
        %v3522 = vmul.f32 %v3270, %v3349
        %v3523 = vmul.f32 %v3271, %v3354
        %v3524 = vmul.f32 %v3272, %v3359
        %v3525 = vmul.f32 %v3273, %v3364
        %v3526 = vmul.f32 %v3274, %v3369
        %v3527 = vmul.f32 %v3275, %v3374
        %v3528 = vmul.f32 %v3276, %v3379
        %v3529 = vmul.f32 %v3277, %v3384
        %v3530 = vmul.f32 %v3278, %v3389
        %v3531 = vmul.f32 %v3279, %v3394
        %v3532 = vmul.f32 %v3280, %v3399
        %v3533 = vmul.f32 %v3281, %v3404
        %v3534 = vmul.f32 %v3282, %v3409
        %v3535 = vmul.f32 %v3283, %v3414
        %v3536 = vmul.f32 %v3284, %v3419
        %v3537 = vmul.f32 %v3285, %v3424
        %v3538 = vmul.f32 %v3286, %v3429
        %v3539 = vmul.f32 %v3287, %v3434
        %v3540 = vmul.f32 %v3288, %v3439
        %v3541 = vmul.f32 %v3289, %v3444
        %v3542 = vmul.f32 %v3290, %v3449
        %v3543 = vmul.f32 %v3291, %v3454
        %v3544 = vmul.f32 %v3292, %v3459
        %v3545 = vmul.f32 %v3293, %v3464
        %v3546 = vmul.f32 %v3294, %v3469
        %v3547 = vmul.f32 %v3295, %v3474
        %v3548 = vmul.f32 %v3296, %v3479
        %v3549 = vmul.f32 %v3297, %v3484
        %v3550 = vmul.f32 %v3298, %v3489
        %v3551 = vmul.f32 %v3299, %v3494
        %v3552 = vmul.f32 %v3300, %v3499
        %v3553 = vmul.f32 %v3301, %v3504
        %v3554 = vmul.f32 %v3302, %v3509
        %v3555 = vmul.f32 %v3303, %v3514
        %v3556 = vmul.f32 %v3304, %v3519
        %v3557 = vadd.f32 %v3521, %v3522
        %v3558 = vadd.f32 %v3557, %v3523
        %v3559 = vadd.f32 %v3558, %v3524
        %v3560 = vadd.f32 %v3559, %v3525
        %v3561 = vadd.f32 %v3560, %v3526
        %v3562 = vadd.f32 %v3561, %v3527
        %v3563 = vadd.f32 %v3562, %v3528
        %v3564 = vadd.f32 %v3563, %v3529
        %v3565 = vadd.f32 %v3564, %v3530
        %v3566 = vadd.f32 %v3565, %v3531
        %v3567 = vadd.f32 %v3566, %v3532
        %v3568 = vadd.f32 %v3567, %v3533
        %v3569 = vadd.f32 %v3568, %v3534
        %v3570 = vadd.f32 %v3569, %v3535
        %v3571 = vadd.f32 %v3570, %v3536
        %v3572 = vadd.f32 %v3571, %v3537
        %v3573 = vadd.f32 %v3572, %v3538
        %v3574 = vadd.f32 %v3573, %v3539
        %v3575 = vadd.f32 %v3574, %v3540
        %v3576 = vadd.f32 %v3575, %v3541
        %v3577 = vadd.f32 %v3576, %v3542
        %v3578 = vadd.f32 %v3577, %v3543
        %v3579 = vadd.f32 %v3578, %v3544
        %v3580 = vadd.f32 %v3579, %v3545
        %v3581 = vadd.f32 %v3580, %v3546
        %v3582 = vadd.f32 %v3581, %v3547
        %v3583 = vadd.f32 %v3582, %v3548
        %v3584 = vadd.f32 %v3583, %v3549
        %v3585 = vadd.f32 %v3584, %v3550
        %v3586 = vadd.f32 %v3585, %v3551
        %v3587 = vadd.f32 %v3586, %v3552
        %v3588 = vadd.f32 %v3587, %v3553
        %v3589 = vadd.f32 %v3588, %v3554
        %v3590 = vadd.f32 %v3589, %v3555
        %vm3591 = vcmask 1045504
        %v3592 = vsel %vm3591, %v3556, 0.0
        %v3593 = vadd.f32 %v3590, %v3592
        %v3594 = vrot.slane %v3593, 4
        %v3595 = vadd.f32 %v3593, %v3594
        %v3596 = vrot.slane %v3595, 2
        %v3597 = vadd.f32 %v3595, %v3596
        %v3598 = vrot.slane %v3597, 1
        %v3599 = vadd.f32 %v3597, %v3598
        %s3600 = scalar_lea.vmem [#allocation3], %s28
        %3601 = vst [vmem:[%s3600] sm:$0x1] %v3599
        %v3602 = vld [vmem:[%s4] sm:$0xff]
        %v3603 = vld [vmem:[%s4 + $0x8] sm:$0xff]
        %v3604 = vld [vmem:[%s4 + $0x10] sm:$0xff]
        %v3605 = vld [vmem:[%s4 + $0x18] sm:$0xff]
        %v3606 = vld [vmem:[%s4 + $0x20] sm:$0xff]
        %v3607 = vld [vmem:[%s4 + $0x28] sm:$0xff]
        %v3608 = vld [vmem:[%s4 + $0x30] sm:$0xff]
        %v3609 = vld [vmem:[%s4 + $0x38] sm:$0xff]
        %v3610 = vld [vmem:[%s4 + $0x40] sm:$0xff]
        %v3611 = vld [vmem:[%s4 + $0x48] sm:$0xff]
        %v3612 = vld [vmem:[%s4 + $0x50] sm:$0xff]
        %v3613 = vld [vmem:[%s4 + $0x58] sm:$0xff]
        %v3614 = vld [vmem:[%s4 + $0x60] sm:$0xff]
        %v3615 = vld [vmem:[%s4 + $0x68] sm:$0xff]
        %v3616 = vld [vmem:[%s4 + $0x70] sm:$0xff]
        %v3617 = vld [vmem:[%s4 + $0x78] sm:$0xff]
        %v3618 = vld [vmem:[%s5] sm:$0x1]
        %3619 = vmatprep.subr.mxu0 0.0
        %3620 = vmatpush1.msra.mxu0 %v3602
        %3621 = vmatprep.subr.mxu0 0.0
        %3622 = vmatpush1.msra.mxu0 %v3603
        %3623 = vmatprep.subr.mxu0 0.0
        %3624 = vmatpush1.msra.mxu0 %v3604
        %3625 = vmatprep.subr.mxu0 0.0
        %3626 = vmatpush1.msra.mxu0 %v3605
        %3627 = vmatprep.subr.mxu0 0.0
        %3628 = vmatpush1.msra.mxu0 %v3606
        %3629 = vmatprep.subr.mxu0 0.0
        %3630 = vmatpush1.msra.mxu0 %v3607
        %3631 = vmatprep.subr.mxu0 0.0
        %3632 = vmatpush1.msra.mxu0 %v3608
        %3633 = vmatprep.subr.mxu0 0.0
        %3634 = vmatpush1.msra.mxu0 %v3609
        %3635 = vmatprep.subr.mxu0 0.0
        %3636 = vmatpush1.msra.mxu0 %v3610
        %3637 = vmatprep.subr.mxu0 0.0
        %3638 = vmatpush1.msra.mxu0 %v3611
        %3639 = vmatprep.subr.mxu0 0.0
        %3640 = vmatpush1.msra.mxu0 %v3612
        %3641 = vmatprep.subr.mxu0 0.0
        %3642 = vmatpush1.msra.mxu0 %v3613
        %3643 = vmatprep.subr.mxu0 0.0
        %3644 = vmatpush1.msra.mxu0 %v3614
        %3645 = vmatprep.subr.mxu0 0.0
        %3646 = vmatpush1.msra.mxu0 %v3615
        %3647 = vmatprep.subr.mxu0 0.0
        %3648 = vmatpush1.msra.mxu0 %v3616
        %3649 = vmatprep.subr.mxu0 0.0
        %3650 = vmatpush1.msra.mxu0 %v3617
        %3651 = vmatprep.subr.mxu0 0.0
        %3652 = vmatpush1.msra.mxu0 0.0
        %3653 = vmatprep.subr.mxu0 0.0
        %3654 = vmatpush1.msra.mxu0 0.0
        %3655 = vmatprep.subr.mxu0 0.0
        %3656 = vmatpush1.msra.mxu0 0.0
        %3657 = vmatprep.subr.mxu0 0.0
        %3658 = vmatpush1.msra.mxu0 0.0
        %3659 = vmatprep.subr.mxu0 0.0
        %3660 = vmatpush1.msra.mxu0 0.0
        %3661 = vmatprep.subr.mxu0 0.0
        %3662 = vmatpush1.msra.mxu0 0.0
        %3663 = vmatprep.subr.mxu0 0.0
        %3664 = vmatpush1.msra.mxu0 0.0
        %3665 = vmatprep.subr.mxu0 0.0
        %3666 = vmatpush1.msra.mxu0 0.0
        %3667 = vmatprep.subr.mxu0 0.0
        %3668 = vmatpush1.msra.mxu0 0.0
        %3669 = vmatprep.subr.mxu0 0.0
        %3670 = vmatpush1.msra.mxu0 0.0
        %3671 = vmatprep.subr.mxu0 0.0
        %3672 = vmatpush1.msra.mxu0 0.0
        %3673 = vmatprep.subr.mxu0 0.0
        %3674 = vmatpush1.msra.mxu0 0.0
        %3675 = vmatprep.subr.mxu0 0.0
        %3676 = vmatpush1.msra.mxu0 0.0
        %3677 = vmatprep.subr.mxu0 0.0
        %3678 = vmatpush1.msra.mxu0 0.0
        %3679 = vmatprep.subr.mxu0 0.0
        %3680 = vmatpush1.msra.mxu0 0.0
        %3681 = vmatprep.subr.mxu0 0.0
        %3682 = vmatpush1.msra.mxu0 0.0
        %3683 = vmatprep.mubr.f32.mxu0 0.0
        %3684 = vmatmul.mubr.f32.gmra.mrb[0].mxu0 %v3599
        %v3685 = vpop.f32.mrb[0].mxu0
        %v3686 = vadd.f32 %v3618, %v3685
        %v3687 = vpop.f32.mrb[0].mxu0
        %3688 = vdwg.mxu0
        %v3689 = vmul.f32 %v3686, %v3686
        %vm3690 = vcmask 1040384
        %v3691 = vsel %vm3690, %v3689, 0.0
        %3692 = vadd.xlane.f32.xlu0 %v3691
        %v3693 = vpop.xlane.xlu0 %3692
        %v3694 = vadd.f32 %v3693, 1e-12
        %v3695 = vrsqrt.pop %v3694
        %v3696 = vmul.f32 %v3686, %v3695
        %s3697 = scalar_lea.vmem [#allocation5], %s28
        %3698 = vst [vmem:[%s3697] sm:$0x1] %v3696
        %p3699 = scmp.eq.s32.totalorder %s28, 0
        // Predicated region
        $region65: #{lsg_forward.1} parent=63 // pred_check
          %p3700 = pneg %p3699
        $region66: #{lsg_forward.1} parent=63 // pred_check_branch
          %3702 = sbr.rel (%p3700) target = $region68
        $region67: #{lsg_forward.1} parent=63 // pred_region
          %v3703 = vld [vmem:[%s6] sm:$0xff]
          %3704 = vst [vmem:[#allocation2] sm:$0xff] %v3703
        $region68: #{lsg_forward.1} parent=63 // pred_fallthru
          _
        %s3705 = sadd.s32 %s28, 8
        %s3706 = scalar_lea.vmem [#allocation2], %s3705
        %3707 = vst [vmem:[%s3706] sm:$0x1] %v3696
        %p3708 = scmp.eq.s32.totalorder %s28, 1
        // Predicated region
        $region69: #{lsg_forward.1} parent=63 // pred_check
          %p3709 = pneg %p3708
        $region70: #{lsg_forward.1} parent=63 // pred_check_branch
          %3711 = sbr.rel (%p3709) target = $region72
        $region71: #{lsg_forward.1} parent=63 // pred_region
          %v3712 = vld [vmem:[#allocation2] sm:$0xff]
          %v3713 = vld [vmem:[#allocation2 + $0x8] sm:$0x3]
          %v3714 = vmul.f32 %v3712, %v3712
          %v3715 = vmul.f32 %v3713, %v3713
          %3716 = vadd.xlane.f32.xlu0 %v3714
          %v3717 = vpop.xlane.xlu0 %3716
          %v3718 = vsel %vm709, %v3715, 0.0
          %3719 = vadd.xlane.f32.xlu0 %v3718
          %v3720 = vpop.xlane.xlu0 %3719
          %v3721 = vadd.f32 %v3717, 1e-12
          %v3722 = vadd.f32 %v3720, 1e-12
          %v3723 = vrsqrt.pop %v3721
          %v3724 = vrsqrt.pop %v3722
          %v3725 = vmul.f32 %v3712, %v3723
          %v3726 = vmul.f32 %v3713, %v3724
          %3727 = vmatprep.subr.mxu0 0.0
          %3728 = vmatpush1.xpose.msra.mxu0 %v3725
          %3729 = vmatprep.subr.mxu0 0.0
          %3730 = vmatpush1.xpose.msra.mxu0 %v3726
          %3731 = vmatprep.subr.mxu0 0.0
          %3732 = vmatpush1.xpose.msra.mxu0 0.0
          %3733 = vmatprep.subr.mxu0 0.0
          %3734 = vmatpush1.xpose.msra.mxu0 0.0
          %3735 = vmatprep.subr.mxu0 0.0
          %3736 = vmatpush1.xpose.msra.mxu0 0.0
          %3737 = vmatprep.subr.mxu0 0.0
          %3738 = vmatpush1.xpose.msra.mxu0 0.0
          %3739 = vmatprep.subr.mxu0 0.0
          %3740 = vmatpush1.xpose.msra.mxu0 0.0
          %3741 = vmatprep.subr.mxu0 0.0
          %3742 = vmatpush1.xpose.msra.mxu0 0.0
          %3743 = vmatprep.subr.mxu0 0.0
          %3744 = vmatpush1.xpose.msra.mxu0 0.0
          %3745 = vmatprep.subr.mxu0 0.0
          %3746 = vmatpush1.xpose.msra.mxu0 0.0
          %3747 = vmatprep.subr.mxu0 0.0
          %3748 = vmatpush1.xpose.msra.mxu0 0.0
          %3749 = vmatprep.subr.mxu0 0.0
          %3750 = vmatpush1.xpose.msra.mxu0 0.0
          %3751 = vmatprep.subr.mxu0 0.0
          %3752 = vmatpush1.xpose.msra.mxu0 0.0
          %3753 = vmatprep.subr.mxu0 0.0
          %3754 = vmatpush1.xpose.msra.mxu0 0.0
          %3755 = vmatprep.subr.mxu0 0.0
          %3756 = vmatpush1.xpose.msra.mxu0 0.0
          %3757 = vmatprep.subr.mxu0 0.0
          %3758 = vmatpush1.xpose.msra.mxu0 0.0
          %3759 = vmatprep.subr.mxu0 0.0
          %3760 = vmatpush1.xpose.msra.mxu0 0.0
          %3761 = vmatprep.subr.mxu0 0.0
          %3762 = vmatpush1.xpose.msra.mxu0 0.0
          %3763 = vmatprep.subr.mxu0 0.0
          %3764 = vmatpush1.xpose.msra.mxu0 0.0
          %3765 = vmatprep.subr.mxu0 0.0
          %3766 = vmatpush1.xpose.msra.mxu0 0.0
          %3767 = vmatprep.subr.mxu0 0.0
          %3768 = vmatpush1.xpose.msra.mxu0 0.0
          %3769 = vmatprep.subr.mxu0 0.0
          %3770 = vmatpush1.xpose.msra.mxu0 0.0
          %3771 = vmatprep.subr.mxu0 0.0
          %3772 = vmatpush1.xpose.msra.mxu0 0.0
          %3773 = vmatprep.subr.mxu0 0.0
          %3774 = vmatpush1.xpose.msra.mxu0 0.0
          %3775 = vmatprep.subr.mxu0 0.0
          %3776 = vmatpush1.xpose.msra.mxu0 0.0
          %3777 = vmatprep.subr.mxu0 0.0
          %3778 = vmatpush1.xpose.msra.mxu0 0.0
          %3779 = vmatprep.subr.mxu0 0.0
          %3780 = vmatpush1.xpose.msra.mxu0 0.0
          %3781 = vmatprep.subr.mxu0 0.0
          %3782 = vmatpush1.xpose.msra.mxu0 0.0
          %3783 = vmatprep.subr.mxu0 0.0
          %3784 = vmatpush1.xpose.msra.mxu0 0.0
          %3785 = vmatprep.subr.mxu0 0.0
          %3786 = vmatpush1.xpose.msra.mxu0 0.0
          %3787 = vmatprep.subr.mxu0 0.0
          %3788 = vmatpush1.xpose.msra.mxu0 0.0
          %3789 = vmatprep.subr.mxu0 0.0
          %3790 = vmatpush1.xpose.msra.mxu0 0.0
          %3791 = vmatprep.mubr.f32.mxu0 0.0
          %3792 = vmatmul.mubr.f32.gmra.mrb[0].mxu0 %v3725
          %v3793 = vpop.f32.mrb[0].mxu0
          %v3794 = vadd.f32 0.0, %v3793
          %v3795 = vpop.f32.mrb[0].mxu0
          %3796 = vmatprep.mubr.f32.mxu0 0.0
          %3797 = vmatmul.mubr.f32.gmra.mrb[0].mxu0 %v3726
          %v3798 = vpop.f32.mrb[0].mxu0
          %v3799 = vadd.f32 0.0, %v3798
          %v3800 = vpop.f32.mrb[0].mxu0
          %3801 = vdwg.mxu0
          %v3802 = vld [vmem:[%s7] sm:$0xff]
          %v3803 = vld [vmem:[%s7 + $0x8] sm:$0x3]
          %v3804 = vmul.f32 %v3794, %v3802
          %v3805 = vmul.f32 %v3799, %v3803
          %v3806 = vlaneseq
          %v3807 = vshrl.u32 %v3806, 7
          %v3808 = vadd.s32 %v3807, 8
          %v3809 = vlaneseq
          %v3810 = vand.u32 %v3809, 127
          %vm3811 = vcmp.ne.s32.totalorder %v3807, %v3810
          %vm3812 = vcmp.ne.s32.totalorder %v3808, %v3810
          %vm3813 = vcmask 80896
          %v3814 = vsel %vm3813, %v3804, inf
          %3815 = vmin.xlane.f32.xlu0 %v3814
          %v3816 = vpop.xlane.xlu0 %3815
          %vm3817 = vcmask 74752
          %v3818 = vsel %vm3817, %v3805, inf
          %3819 = vmin.xlane.f32.xlu0 %v3818
          %v3820 = vpop.xlane.xlu0 %3819
          %v3821 = vsel %vm709, %v3820, inf
          %v3822 = vmin.f32 %v3816, %v3821
          %v3823 = vrot.slane %v3822, 4
          %v3824 = vmin.f32 %v3822, %v3823
          %v3825 = vrot.slane %v3824, 2
          %v3826 = vmin.f32 %v3824, %v3825
          %v3827 = vrot.slane %v3826, 1
          %v3828 = vmin.f32 %v3826, %v3827
          %v3829 = vsub.f32 %v3828, 1.0
          %v3830 = vsel %vm3813, %v3804, -inf
          %3831 = vmax.xlane.f32.xlu0 %v3830
          %v3832 = vpop.xlane.xlu0 %3831
          %v3833 = vsel %vm3817, %v3805, -inf
          %3834 = vmax.xlane.f32.xlu0 %v3833
          %v3835 = vpop.xlane.xlu0 %3834
          %v3836 = vsel %vm709, %v3835, -inf
          %v3837 = vmax.f32 %v3832, %v3836
          %v3838 = vrot.slane %v3837, 4
          %v3839 = vmax.f32 %v3837, %v3838
          %v3840 = vrot.slane %v3839, 2
          %v3841 = vmax.f32 %v3839, %v3840
          %v3842 = vrot.slane %v3841, 1
          %v3843 = vmax.f32 %v3841, %v3842
          %v3844 = vsel %vm3811, %v3804, %v3829
          %v3845 = vsel %vm3812, %v3805, %v3829
          %v3846 = vadd.f32 %v3829, %v3843
          %v3847 = vmul.f32 %v3846, 0.5
          %vm3848 = vcmp.gt.f32.partialorder %v3844, %v3847
          %vm3849 = vcmp.gt.f32.partialorder %v3845, %v3847
          %v3850 = vsel %vm3848, 1, 0
          %v3851 = vsel %vm3849, 1, 0
          %v3852 = vcvt.s32.f32 %v3850
          %v3853 = vcvt.s32.f32 %v3851
          %v3854 = vsel %vm3813, %v3852, 0.0
          %3855 = vadd.xlane.f32.xlu0 %v3854
          %v3856 = vpop.xlane.xlu0 %3855
          %v3857 = vsel %vm3817, %v3853, 0.0
          %3858 = vadd.xlane.f32.xlu0 %v3857
          %v3859 = vpop.xlane.xlu0 %3858
          %v3860 = vsel %vm709, %v3859, 0.0
          %v3861 = vadd.f32 %v3856, %v3860
          %v3862 = vrot.slane %v3861, 4
          %v3863 = vadd.f32 %v3861, %v3862
          %v3864 = vrot.slane %v3863, 2
          %v3865 = vadd.f32 %v3863, %v3864
          %v3866 = vrot.slane %v3865, 1
          %v3867 = vadd.f32 %v3865, %v3866
          %vm3868 = vcmp.ge.f32.partialorder %v3867, 22.0
          %v3869 = vsel %vm3868, %v3847, %v3829
          %v3870 = vsel %vm3868, %v3843, %v3847
          %v3871 = vadd.f32 %v3869, %v3870
          %v3872 = vmul.f32 %v3871, 0.5
          %vm3873 = vcmp.gt.f32.partialorder %v3844, %v3872
          %vm3874 = vcmp.gt.f32.partialorder %v3845, %v3872
          %v3875 = vsel %vm3873, 1, 0
          %v3876 = vsel %vm3874, 1, 0
          %v3877 = vcvt.s32.f32 %v3875
          %v3878 = vcvt.s32.f32 %v3876
          %v3879 = vsel %vm3813, %v3877, 0.0
          %3880 = vadd.xlane.f32.xlu0 %v3879
          %v3881 = vpop.xlane.xlu0 %3880
          %v3882 = vsel %vm3817, %v3878, 0.0
          %3883 = vadd.xlane.f32.xlu0 %v3882
          %v3884 = vpop.xlane.xlu0 %3883
          %v3885 = vsel %vm709, %v3884, 0.0
          %v3886 = vadd.f32 %v3881, %v3885
          %v3887 = vrot.slane %v3886, 4
          %v3888 = vadd.f32 %v3886, %v3887
          %v3889 = vrot.slane %v3888, 2
          %v3890 = vadd.f32 %v3888, %v3889
          %v3891 = vrot.slane %v3890, 1
          %v3892 = vadd.f32 %v3890, %v3891
          %vm3893 = vcmp.ge.f32.partialorder %v3892, 22.0
          %v3894 = vsel %vm3893, %v3872, %v3869
          %v3895 = vsel %vm3893, %v3870, %v3872
          %v3896 = vadd.f32 %v3894, %v3895
          %v3897 = vmul.f32 %v3896, 0.5
          %vm3898 = vcmp.gt.f32.partialorder %v3844, %v3897
          %vm3899 = vcmp.gt.f32.partialorder %v3845, %v3897
          %v3900 = vsel %vm3898, 1, 0
          %v3901 = vsel %vm3899, 1, 0
          %v3902 = vcvt.s32.f32 %v3900
          %v3903 = vcvt.s32.f32 %v3901
          %v3904 = vsel %vm3813, %v3902, 0.0
          %3905 = vadd.xlane.f32.xlu0 %v3904
          %v3906 = vpop.xlane.xlu0 %3905
          %v3907 = vsel %vm3817, %v3903, 0.0
          %3908 = vadd.xlane.f32.xlu0 %v3907
          %v3909 = vpop.xlane.xlu0 %3908
          %v3910 = vsel %vm709, %v3909, 0.0
          %v3911 = vadd.f32 %v3906, %v3910
          %v3912 = vrot.slane %v3911, 4
          %v3913 = vadd.f32 %v3911, %v3912
          %v3914 = vrot.slane %v3913, 2
          %v3915 = vadd.f32 %v3913, %v3914
          %v3916 = vrot.slane %v3915, 1
          %v3917 = vadd.f32 %v3915, %v3916
          %vm3918 = vcmp.ge.f32.partialorder %v3917, 22.0
          %v3919 = vsel %vm3918, %v3897, %v3894
          %v3920 = vsel %vm3918, %v3895, %v3897
          %v3921 = vadd.f32 %v3919, %v3920
          %v3922 = vmul.f32 %v3921, 0.5
          %vm3923 = vcmp.gt.f32.partialorder %v3844, %v3922
          %vm3924 = vcmp.gt.f32.partialorder %v3845, %v3922
          %v3925 = vsel %vm3923, 1, 0
          %v3926 = vsel %vm3924, 1, 0
          %v3927 = vcvt.s32.f32 %v3925
          %v3928 = vcvt.s32.f32 %v3926
          %v3929 = vsel %vm3813, %v3927, 0.0
          %3930 = vadd.xlane.f32.xlu0 %v3929
          %v3931 = vpop.xlane.xlu0 %3930
          %v3932 = vsel %vm3817, %v3928, 0.0
          %3933 = vadd.xlane.f32.xlu0 %v3932
          %v3934 = vpop.xlane.xlu0 %3933
          %v3935 = vsel %vm709, %v3934, 0.0
          %v3936 = vadd.f32 %v3931, %v3935
          %v3937 = vrot.slane %v3936, 4
          %v3938 = vadd.f32 %v3936, %v3937
          %v3939 = vrot.slane %v3938, 2
          %v3940 = vadd.f32 %v3938, %v3939
          %v3941 = vrot.slane %v3940, 1
          %v3942 = vadd.f32 %v3940, %v3941
          %vm3943 = vcmp.ge.f32.partialorder %v3942, 22.0
          %v3944 = vsel %vm3943, %v3922, %v3919
          %v3945 = vsel %vm3943, %v3920, %v3922
          %v3946 = vadd.f32 %v3944, %v3945
          %v3947 = vmul.f32 %v3946, 0.5
          %vm3948 = vcmp.gt.f32.partialorder %v3844, %v3947
          %vm3949 = vcmp.gt.f32.partialorder %v3845, %v3947
          %v3950 = vsel %vm3948, 1, 0
          %v3951 = vsel %vm3949, 1, 0
          %v3952 = vcvt.s32.f32 %v3950
          %v3953 = vcvt.s32.f32 %v3951
          %v3954 = vsel %vm3813, %v3952, 0.0
          %3955 = vadd.xlane.f32.xlu0 %v3954
          %v3956 = vpop.xlane.xlu0 %3955
          %v3957 = vsel %vm3817, %v3953, 0.0
          %3958 = vadd.xlane.f32.xlu0 %v3957
          %v3959 = vpop.xlane.xlu0 %3958
          %v3960 = vsel %vm709, %v3959, 0.0
          %v3961 = vadd.f32 %v3956, %v3960
          %v3962 = vrot.slane %v3961, 4
          %v3963 = vadd.f32 %v3961, %v3962
          %v3964 = vrot.slane %v3963, 2
          %v3965 = vadd.f32 %v3963, %v3964
          %v3966 = vrot.slane %v3965, 1
          %v3967 = vadd.f32 %v3965, %v3966
          %vm3968 = vcmp.ge.f32.partialorder %v3967, 22.0
          %v3969 = vsel %vm3968, %v3947, %v3944
          %v3970 = vsel %vm3968, %v3945, %v3947
          %v3971 = vadd.f32 %v3969, %v3970
          %v3972 = vmul.f32 %v3971, 0.5
          %vm3973 = vcmp.gt.f32.partialorder %v3844, %v3972
          %vm3974 = vcmp.gt.f32.partialorder %v3845, %v3972
          %v3975 = vsel %vm3973, 1, 0
          %v3976 = vsel %vm3974, 1, 0
          %v3977 = vcvt.s32.f32 %v3975
          %v3978 = vcvt.s32.f32 %v3976
          %v3979 = vsel %vm3813, %v3977, 0.0
          %3980 = vadd.xlane.f32.xlu0 %v3979
          %v3981 = vpop.xlane.xlu0 %3980
          %v3982 = vsel %vm3817, %v3978, 0.0
          %3983 = vadd.xlane.f32.xlu0 %v3982
          %v3984 = vpop.xlane.xlu0 %3983
          %v3985 = vsel %vm709, %v3984, 0.0
          %v3986 = vadd.f32 %v3981, %v3985
          %v3987 = vrot.slane %v3986, 4
          %v3988 = vadd.f32 %v3986, %v3987
          %v3989 = vrot.slane %v3988, 2
          %v3990 = vadd.f32 %v3988, %v3989
          %v3991 = vrot.slane %v3990, 1
          %v3992 = vadd.f32 %v3990, %v3991
          %vm3993 = vcmp.ge.f32.partialorder %v3992, 22.0
          %v3994 = vsel %vm3993, %v3972, %v3969
          %v3995 = vsel %vm3993, %v3970, %v3972
          %v3996 = vadd.f32 %v3994, %v3995
          %v3997 = vmul.f32 %v3996, 0.5
          %vm3998 = vcmp.gt.f32.partialorder %v3844, %v3997
          %vm3999 = vcmp.gt.f32.partialorder %v3845, %v3997
          %v4000 = vsel %vm3998, 1, 0
          %v4001 = vsel %vm3999, 1, 0
          %v4002 = vcvt.s32.f32 %v4000
          %v4003 = vcvt.s32.f32 %v4001
          %v4004 = vsel %vm3813, %v4002, 0.0
          %4005 = vadd.xlane.f32.xlu0 %v4004
          %v4006 = vpop.xlane.xlu0 %4005
          %v4007 = vsel %vm3817, %v4003, 0.0
          %4008 = vadd.xlane.f32.xlu0 %v4007
          %v4009 = vpop.xlane.xlu0 %4008
          %v4010 = vsel %vm709, %v4009, 0.0
          %v4011 = vadd.f32 %v4006, %v4010
          %v4012 = vrot.slane %v4011, 4
          %v4013 = vadd.f32 %v4011, %v4012
          %v4014 = vrot.slane %v4013, 2
          %v4015 = vadd.f32 %v4013, %v4014
          %v4016 = vrot.slane %v4015, 1
          %v4017 = vadd.f32 %v4015, %v4016
          %vm4018 = vcmp.ge.f32.partialorder %v4017, 22.0
          %v4019 = vsel %vm4018, %v3997, %v3994
          %v4020 = vsel %vm4018, %v3995, %v3997
          %v4021 = vadd.f32 %v4019, %v4020
          %v4022 = vmul.f32 %v4021, 0.5
          %vm4023 = vcmp.gt.f32.partialorder %v3844, %v4022
          %vm4024 = vcmp.gt.f32.partialorder %v3845, %v4022
          %v4025 = vsel %vm4023, 1, 0
          %v4026 = vsel %vm4024, 1, 0
          %v4027 = vcvt.s32.f32 %v4025
          %v4028 = vcvt.s32.f32 %v4026
          %v4029 = vsel %vm3813, %v4027, 0.0
          %4030 = vadd.xlane.f32.xlu0 %v4029
          %v4031 = vpop.xlane.xlu0 %4030
          %v4032 = vsel %vm3817, %v4028, 0.0
          %4033 = vadd.xlane.f32.xlu0 %v4032
          %v4034 = vpop.xlane.xlu0 %4033
          %v4035 = vsel %vm709, %v4034, 0.0
          %v4036 = vadd.f32 %v4031, %v4035
          %v4037 = vrot.slane %v4036, 4
          %v4038 = vadd.f32 %v4036, %v4037
          %v4039 = vrot.slane %v4038, 2
          %v4040 = vadd.f32 %v4038, %v4039
          %v4041 = vrot.slane %v4040, 1
          %v4042 = vadd.f32 %v4040, %v4041
          %vm4043 = vcmp.ge.f32.partialorder %v4042, 22.0
          %v4044 = vsel %vm4043, %v4022, %v4019
          %v4045 = vsel %vm4043, %v4020, %v4022
          %v4046 = vadd.f32 %v4044, %v4045
          %v4047 = vmul.f32 %v4046, 0.5
          %vm4048 = vcmp.gt.f32.partialorder %v3844, %v4047
          %vm4049 = vcmp.gt.f32.partialorder %v3845, %v4047
          %v4050 = vsel %vm4048, 1, 0
          %v4051 = vsel %vm4049, 1, 0
          %v4052 = vcvt.s32.f32 %v4050
          %v4053 = vcvt.s32.f32 %v4051
          %v4054 = vsel %vm3813, %v4052, 0.0
          %4055 = vadd.xlane.f32.xlu0 %v4054
          %v4056 = vpop.xlane.xlu0 %4055
          %v4057 = vsel %vm3817, %v4053, 0.0
          %4058 = vadd.xlane.f32.xlu0 %v4057
          %v4059 = vpop.xlane.xlu0 %4058
          %v4060 = vsel %vm709, %v4059, 0.0
          %v4061 = vadd.f32 %v4056, %v4060
          %v4062 = vrot.slane %v4061, 4
          %v4063 = vadd.f32 %v4061, %v4062
          %v4064 = vrot.slane %v4063, 2
          %v4065 = vadd.f32 %v4063, %v4064
          %v4066 = vrot.slane %v4065, 1
          %v4067 = vadd.f32 %v4065, %v4066
          %vm4068 = vcmp.ge.f32.partialorder %v4067, 22.0
          %v4069 = vsel %vm4068, %v4047, %v4044
          %v4070 = vsel %vm4068, %v4045, %v4047
          %v4071 = vadd.f32 %v4069, %v4070
          %v4072 = vmul.f32 %v4071, 0.5
          %vm4073 = vcmp.gt.f32.partialorder %v3844, %v4072
          %vm4074 = vcmp.gt.f32.partialorder %v3845, %v4072
          %v4075 = vsel %vm4073, 1, 0
          %v4076 = vsel %vm4074, 1, 0
          %v4077 = vcvt.s32.f32 %v4075
          %v4078 = vcvt.s32.f32 %v4076
          %v4079 = vsel %vm3813, %v4077, 0.0
          %4080 = vadd.xlane.f32.xlu0 %v4079
          %v4081 = vpop.xlane.xlu0 %4080
          %v4082 = vsel %vm3817, %v4078, 0.0
          %4083 = vadd.xlane.f32.xlu0 %v4082
          %v4084 = vpop.xlane.xlu0 %4083
          %v4085 = vsel %vm709, %v4084, 0.0
          %v4086 = vadd.f32 %v4081, %v4085
          %v4087 = vrot.slane %v4086, 4
          %v4088 = vadd.f32 %v4086, %v4087
          %v4089 = vrot.slane %v4088, 2
          %v4090 = vadd.f32 %v4088, %v4089
          %v4091 = vrot.slane %v4090, 1
          %v4092 = vadd.f32 %v4090, %v4091
          %vm4093 = vcmp.ge.f32.partialorder %v4092, 22.0
          %v4094 = vsel %vm4093, %v4072, %v4069
          %v4095 = vsel %vm4093, %v4070, %v4072
          %v4096 = vadd.f32 %v4094, %v4095
          %v4097 = vmul.f32 %v4096, 0.5
          %vm4098 = vcmp.gt.f32.partialorder %v3844, %v4097
          %vm4099 = vcmp.gt.f32.partialorder %v3845, %v4097
          %v4100 = vsel %vm4098, 1, 0
          %v4101 = vsel %vm4099, 1, 0
          %v4102 = vcvt.s32.f32 %v4100
          %v4103 = vcvt.s32.f32 %v4101
          %v4104 = vsel %vm3813, %v4102, 0.0
          %4105 = vadd.xlane.f32.xlu0 %v4104
          %v4106 = vpop.xlane.xlu0 %4105
          %v4107 = vsel %vm3817, %v4103, 0.0
          %4108 = vadd.xlane.f32.xlu0 %v4107
          %v4109 = vpop.xlane.xlu0 %4108
          %v4110 = vsel %vm709, %v4109, 0.0
          %v4111 = vadd.f32 %v4106, %v4110
          %v4112 = vrot.slane %v4111, 4
          %v4113 = vadd.f32 %v4111, %v4112
          %v4114 = vrot.slane %v4113, 2
          %v4115 = vadd.f32 %v4113, %v4114
          %v4116 = vrot.slane %v4115, 1
          %v4117 = vadd.f32 %v4115, %v4116
          %vm4118 = vcmp.ge.f32.partialorder %v4117, 22.0
          %v4119 = vsel %vm4118, %v4097, %v4094
          %v4120 = vsel %vm4118, %v4095, %v4097
          %v4121 = vadd.f32 %v4119, %v4120
          %v4122 = vmul.f32 %v4121, 0.5
          %vm4123 = vcmp.gt.f32.partialorder %v3844, %v4122
          %vm4124 = vcmp.gt.f32.partialorder %v3845, %v4122
          %v4125 = vsel %vm4123, 1, 0
          %v4126 = vsel %vm4124, 1, 0
          %v4127 = vcvt.s32.f32 %v4125
          %v4128 = vcvt.s32.f32 %v4126
          %v4129 = vsel %vm3813, %v4127, 0.0
          %4130 = vadd.xlane.f32.xlu0 %v4129
          %v4131 = vpop.xlane.xlu0 %4130
          %v4132 = vsel %vm3817, %v4128, 0.0
          %4133 = vadd.xlane.f32.xlu0 %v4132
          %v4134 = vpop.xlane.xlu0 %4133
          %v4135 = vsel %vm709, %v4134, 0.0
          %v4136 = vadd.f32 %v4131, %v4135
          %v4137 = vrot.slane %v4136, 4
          %v4138 = vadd.f32 %v4136, %v4137
          %v4139 = vrot.slane %v4138, 2
          %v4140 = vadd.f32 %v4138, %v4139
          %v4141 = vrot.slane %v4140, 1
          %v4142 = vadd.f32 %v4140, %v4141
          %vm4143 = vcmp.ge.f32.partialorder %v4142, 22.0
          %v4144 = vsel %vm4143, %v4122, %v4119
          %v4145 = vsel %vm4143, %v4120, %v4122
          %v4146 = vadd.f32 %v4144, %v4145
          %v4147 = vmul.f32 %v4146, 0.5
          %vm4148 = vcmp.gt.f32.partialorder %v3844, %v4147
          %vm4149 = vcmp.gt.f32.partialorder %v3845, %v4147
          %v4150 = vsel %vm4148, 1, 0
          %v4151 = vsel %vm4149, 1, 0
          %v4152 = vcvt.s32.f32 %v4150
          %v4153 = vcvt.s32.f32 %v4151
          %v4154 = vsel %vm3813, %v4152, 0.0
          %4155 = vadd.xlane.f32.xlu0 %v4154
          %v4156 = vpop.xlane.xlu0 %4155
          %v4157 = vsel %vm3817, %v4153, 0.0
          %4158 = vadd.xlane.f32.xlu0 %v4157
          %v4159 = vpop.xlane.xlu0 %4158
          %v4160 = vsel %vm709, %v4159, 0.0
          %v4161 = vadd.f32 %v4156, %v4160
          %v4162 = vrot.slane %v4161, 4
          %v4163 = vadd.f32 %v4161, %v4162
          %v4164 = vrot.slane %v4163, 2
          %v4165 = vadd.f32 %v4163, %v4164
          %v4166 = vrot.slane %v4165, 1
          %v4167 = vadd.f32 %v4165, %v4166
          %vm4168 = vcmp.ge.f32.partialorder %v4167, 22.0
          %v4169 = vsel %vm4168, %v4147, %v4144
          %v4170 = vsel %vm4168, %v4145, %v4147
          %v4171 = vadd.f32 %v4169, %v4170
          %v4172 = vmul.f32 %v4171, 0.5
          %vm4173 = vcmp.gt.f32.partialorder %v3844, %v4172
          %vm4174 = vcmp.gt.f32.partialorder %v3845, %v4172
          %v4175 = vsel %vm4173, 1, 0
          %v4176 = vsel %vm4174, 1, 0
          %v4177 = vcvt.s32.f32 %v4175
          %v4178 = vcvt.s32.f32 %v4176
          %v4179 = vsel %vm3813, %v4177, 0.0
          %4180 = vadd.xlane.f32.xlu0 %v4179
          %v4181 = vpop.xlane.xlu0 %4180
          %v4182 = vsel %vm3817, %v4178, 0.0
          %4183 = vadd.xlane.f32.xlu0 %v4182
          %v4184 = vpop.xlane.xlu0 %4183
          %v4185 = vsel %vm709, %v4184, 0.0
          %v4186 = vadd.f32 %v4181, %v4185
          %v4187 = vrot.slane %v4186, 4
          %v4188 = vadd.f32 %v4186, %v4187
          %v4189 = vrot.slane %v4188, 2
          %v4190 = vadd.f32 %v4188, %v4189
          %v4191 = vrot.slane %v4190, 1
          %v4192 = vadd.f32 %v4190, %v4191
          %vm4193 = vcmp.ge.f32.partialorder %v4192, 22.0
          %v4194 = vsel %vm4193, %v4172, %v4169
          %v4195 = vsel %vm4193, %v4170, %v4172
          %v4196 = vadd.f32 %v4194, %v4195
          %v4197 = vmul.f32 %v4196, 0.5
          %vm4198 = vcmp.gt.f32.partialorder %v3844, %v4197
          %vm4199 = vcmp.gt.f32.partialorder %v3845, %v4197
          %v4200 = vsel %vm4198, 1, 0
          %v4201 = vsel %vm4199, 1, 0
          %v4202 = vcvt.s32.f32 %v4200
          %v4203 = vcvt.s32.f32 %v4201
          %v4204 = vsel %vm3813, %v4202, 0.0
          %4205 = vadd.xlane.f32.xlu0 %v4204
          %v4206 = vpop.xlane.xlu0 %4205
          %v4207 = vsel %vm3817, %v4203, 0.0
          %4208 = vadd.xlane.f32.xlu0 %v4207
          %v4209 = vpop.xlane.xlu0 %4208
          %v4210 = vsel %vm709, %v4209, 0.0
          %v4211 = vadd.f32 %v4206, %v4210
          %v4212 = vrot.slane %v4211, 4
          %v4213 = vadd.f32 %v4211, %v4212
          %v4214 = vrot.slane %v4213, 2
          %v4215 = vadd.f32 %v4213, %v4214
          %v4216 = vrot.slane %v4215, 1
          %v4217 = vadd.f32 %v4215, %v4216
          %vm4218 = vcmp.ge.f32.partialorder %v4217, 22.0
          %v4219 = vsel %vm4218, %v4197, %v4194
          %v4220 = vsel %vm4218, %v4195, %v4197
          %v4221 = vadd.f32 %v4219, %v4220
          %v4222 = vmul.f32 %v4221, 0.5
          %vm4223 = vcmp.gt.f32.partialorder %v3844, %v4222
          %vm4224 = vcmp.gt.f32.partialorder %v3845, %v4222
          %v4225 = vsel %vm4223, 1, 0
          %v4226 = vsel %vm4224, 1, 0
          %v4227 = vcvt.s32.f32 %v4225
          %v4228 = vcvt.s32.f32 %v4226
          %v4229 = vsel %vm3813, %v4227, 0.0
          %4230 = vadd.xlane.f32.xlu0 %v4229
          %v4231 = vpop.xlane.xlu0 %4230
          %v4232 = vsel %vm3817, %v4228, 0.0
          %4233 = vadd.xlane.f32.xlu0 %v4232
          %v4234 = vpop.xlane.xlu0 %4233
          %v4235 = vsel %vm709, %v4234, 0.0
          %v4236 = vadd.f32 %v4231, %v4235
          %v4237 = vrot.slane %v4236, 4
          %v4238 = vadd.f32 %v4236, %v4237
          %v4239 = vrot.slane %v4238, 2
          %v4240 = vadd.f32 %v4238, %v4239
          %v4241 = vrot.slane %v4240, 1
          %v4242 = vadd.f32 %v4240, %v4241
          %vm4243 = vcmp.ge.f32.partialorder %v4242, 22.0
          %v4244 = vsel %vm4243, %v4222, %v4219
          %v4245 = vsel %vm4243, %v4220, %v4222
          %v4246 = vadd.f32 %v4244, %v4245
          %v4247 = vmul.f32 %v4246, 0.5
          %vm4248 = vcmp.gt.f32.partialorder %v3844, %v4247
          %vm4249 = vcmp.gt.f32.partialorder %v3845, %v4247
          %v4250 = vsel %vm4248, 1, 0
          %v4251 = vsel %vm4249, 1, 0
          %v4252 = vcvt.s32.f32 %v4250
          %v4253 = vcvt.s32.f32 %v4251
          %v4254 = vsel %vm3813, %v4252, 0.0
          %4255 = vadd.xlane.f32.xlu0 %v4254
          %v4256 = vpop.xlane.xlu0 %4255
          %v4257 = vsel %vm3817, %v4253, 0.0
          %4258 = vadd.xlane.f32.xlu0 %v4257
          %v4259 = vpop.xlane.xlu0 %4258
          %v4260 = vsel %vm709, %v4259, 0.0
          %v4261 = vadd.f32 %v4256, %v4260
          %v4262 = vrot.slane %v4261, 4
          %v4263 = vadd.f32 %v4261, %v4262
          %v4264 = vrot.slane %v4263, 2
          %v4265 = vadd.f32 %v4263, %v4264
          %v4266 = vrot.slane %v4265, 1
          %v4267 = vadd.f32 %v4265, %v4266
          %vm4268 = vcmp.ge.f32.partialorder %v4267, 22.0
          %v4269 = vsel %vm4268, %v4247, %v4244
          %v4270 = vsel %vm4268, %v4245, %v4247
          %v4271 = vadd.f32 %v4269, %v4270
          %v4272 = vmul.f32 %v4271, 0.5
          %vm4273 = vcmp.gt.f32.partialorder %v3844, %v4272
          %vm4274 = vcmp.gt.f32.partialorder %v3845, %v4272
          %v4275 = vsel %vm4273, 1, 0
          %v4276 = vsel %vm4274, 1, 0
          %v4277 = vcvt.s32.f32 %v4275
          %v4278 = vcvt.s32.f32 %v4276
          %v4279 = vsel %vm3813, %v4277, 0.0
          %4280 = vadd.xlane.f32.xlu0 %v4279
          %v4281 = vpop.xlane.xlu0 %4280
          %v4282 = vsel %vm3817, %v4278, 0.0
          %4283 = vadd.xlane.f32.xlu0 %v4282
          %v4284 = vpop.xlane.xlu0 %4283
          %v4285 = vsel %vm709, %v4284, 0.0
          %v4286 = vadd.f32 %v4281, %v4285
          %v4287 = vrot.slane %v4286, 4
          %v4288 = vadd.f32 %v4286, %v4287
          %v4289 = vrot.slane %v4288, 2
          %v4290 = vadd.f32 %v4288, %v4289
          %v4291 = vrot.slane %v4290, 1
          %v4292 = vadd.f32 %v4290, %v4291
          %vm4293 = vcmp.ge.f32.partialorder %v4292, 22.0
          %v4294 = vsel %vm4293, %v4272, %v4269
          %v4295 = vsel %vm4293, %v4270, %v4272
          %v4296 = vadd.f32 %v4294, %v4295
          %v4297 = vmul.f32 %v4296, 0.5
          %vm4298 = vcmp.gt.f32.partialorder %v3844, %v4297
          %vm4299 = vcmp.gt.f32.partialorder %v3845, %v4297
          %v4300 = vsel %vm4298, 1, 0
          %v4301 = vsel %vm4299, 1, 0
          %v4302 = vcvt.s32.f32 %v4300
          %v4303 = vcvt.s32.f32 %v4301
          %v4304 = vsel %vm3813, %v4302, 0.0
          %4305 = vadd.xlane.f32.xlu0 %v4304
          %v4306 = vpop.xlane.xlu0 %4305
          %v4307 = vsel %vm3817, %v4303, 0.0
          %4308 = vadd.xlane.f32.xlu0 %v4307
          %v4309 = vpop.xlane.xlu0 %4308
          %v4310 = vsel %vm709, %v4309, 0.0
          %v4311 = vadd.f32 %v4306, %v4310
          %v4312 = vrot.slane %v4311, 4
          %v4313 = vadd.f32 %v4311, %v4312
          %v4314 = vrot.slane %v4313, 2
          %v4315 = vadd.f32 %v4313, %v4314
          %v4316 = vrot.slane %v4315, 1
          %v4317 = vadd.f32 %v4315, %v4316
          %vm4318 = vcmp.ge.f32.partialorder %v4317, 22.0
          %v4319 = vsel %vm4318, %v4297, %v4294
          %v4320 = vsel %vm4318, %v4295, %v4297
          %v4321 = vadd.f32 %v4319, %v4320
          %v4322 = vmul.f32 %v4321, 0.5
          %vm4323 = vcmp.gt.f32.partialorder %v3844, %v4322
          %vm4324 = vcmp.gt.f32.partialorder %v3845, %v4322
          %v4325 = vsel %vm4323, 1, 0
          %v4326 = vsel %vm4324, 1, 0
          %v4327 = vcvt.s32.f32 %v4325
          %v4328 = vcvt.s32.f32 %v4326
          %v4329 = vsel %vm3813, %v4327, 0.0
          %4330 = vadd.xlane.f32.xlu0 %v4329
          %v4331 = vpop.xlane.xlu0 %4330
          %v4332 = vsel %vm3817, %v4328, 0.0
          %4333 = vadd.xlane.f32.xlu0 %v4332
          %v4334 = vpop.xlane.xlu0 %4333
          %v4335 = vsel %vm709, %v4334, 0.0
          %v4336 = vadd.f32 %v4331, %v4335
          %v4337 = vrot.slane %v4336, 4
          %v4338 = vadd.f32 %v4336, %v4337
          %v4339 = vrot.slane %v4338, 2
          %v4340 = vadd.f32 %v4338, %v4339
          %v4341 = vrot.slane %v4340, 1
          %v4342 = vadd.f32 %v4340, %v4341
          %vm4343 = vcmp.ge.f32.partialorder %v4342, 22.0
          %v4344 = vsel %vm4343, %v4322, %v4319
          %v4345 = vsel %vm4343, %v4320, %v4322
          %v4346 = vadd.f32 %v4344, %v4345
          %v4347 = vmul.f32 %v4346, 0.5
          %vm4348 = vcmp.gt.f32.partialorder %v3844, %v4347
          %vm4349 = vcmp.gt.f32.partialorder %v3845, %v4347
          %v4350 = vsel %vm4348, 1, 0
          %v4351 = vsel %vm4349, 1, 0
          %v4352 = vcvt.s32.f32 %v4350
          %v4353 = vcvt.s32.f32 %v4351
          %v4354 = vsel %vm3813, %v4352, 0.0
          %4355 = vadd.xlane.f32.xlu0 %v4354
          %v4356 = vpop.xlane.xlu0 %4355
          %v4357 = vsel %vm3817, %v4353, 0.0
          %4358 = vadd.xlane.f32.xlu0 %v4357
          %v4359 = vpop.xlane.xlu0 %4358
          %v4360 = vsel %vm709, %v4359, 0.0
          %v4361 = vadd.f32 %v4356, %v4360
          %v4362 = vrot.slane %v4361, 4
          %v4363 = vadd.f32 %v4361, %v4362
          %v4364 = vrot.slane %v4363, 2
          %v4365 = vadd.f32 %v4363, %v4364
          %v4366 = vrot.slane %v4365, 1
          %v4367 = vadd.f32 %v4365, %v4366
          %vm4368 = vcmp.ge.f32.partialorder %v4367, 22.0
          %v4369 = vsel %vm4368, %v4347, %v4344
          %v4370 = vsel %vm4368, %v4345, %v4347
          %v4371 = vadd.f32 %v4369, %v4370
          %v4372 = vmul.f32 %v4371, 0.5
          %vm4373 = vcmp.gt.f32.partialorder %v3844, %v4372
          %vm4374 = vcmp.gt.f32.partialorder %v3845, %v4372
          %v4375 = vsel %vm4373, 1, 0
          %v4376 = vsel %vm4374, 1, 0
          %v4377 = vcvt.s32.f32 %v4375
          %v4378 = vcvt.s32.f32 %v4376
          %v4379 = vsel %vm3813, %v4377, 0.0
          %4380 = vadd.xlane.f32.xlu0 %v4379
          %v4381 = vpop.xlane.xlu0 %4380
          %v4382 = vsel %vm3817, %v4378, 0.0
          %4383 = vadd.xlane.f32.xlu0 %v4382
          %v4384 = vpop.xlane.xlu0 %4383
          %v4385 = vsel %vm709, %v4384, 0.0
          %v4386 = vadd.f32 %v4381, %v4385
          %v4387 = vrot.slane %v4386, 4
          %v4388 = vadd.f32 %v4386, %v4387
          %v4389 = vrot.slane %v4388, 2
          %v4390 = vadd.f32 %v4388, %v4389
          %v4391 = vrot.slane %v4390, 1
          %v4392 = vadd.f32 %v4390, %v4391
          %vm4393 = vcmp.ge.f32.partialorder %v4392, 22.0
          %v4394 = vsel %vm4393, %v4372, %v4369
          %vm4395 = vcmp.gt.f32.partialorder %v3844, %v4394
          %vm4396 = vcmp.gt.f32.partialorder %v3845, %v4394
          %v4397 = vld [vmem:[%s8] sm:$0xff]
          %v4398 = vld [vmem:[%s8 + $0x8] sm:$0x3]
          %vm4399 = vcmp.gt.f32.partialorder %v4397, 0.5
          %vm4400 = vcmp.gt.f32.partialorder %v4398, 0.5
          %vm4401 = vmor %vm4395, %vm4399
          %vm4402 = vmor %vm4396, %vm4400
          %v4403 = vsel %vm4401, %v3804, 0.0
          %v4404 = vsel %vm4402, %v3805, 0.0
          %v4405 = vsel %vm3811, %v4403, 1.0
          %v4406 = vsel %vm3812, %v4404, 1.0
          %v4407 = vsel %vm3813, %v4405, 0.0
          %4408 = vadd.xlane.f32.xlu0 %v4407
          %v4409 = vpop.xlane.xlu0 %4408
          %v4410 = vsel %vm3817, %v4406, 0.0
          %4411 = vadd.xlane.f32.xlu0 %v4410
          %v4412 = vpop.xlane.xlu0 %4411
          %v4413 = vadd.f32 %v4409, 1e-12
          %v4414 = vadd.f32 %v4412, 1e-12
          %v4415 = vrsqrt.pop %v4413
          %v4416 = vrsqrt.pop %v4414
          %v4417 = vadd.f32 %v4407, %v4410
          %v4418 = vrot.slane %v4417, 4
          %v4419 = vadd.f32 %v4417, %v4418
          %v4420 = vrot.slane %v4419, 2
          %v4421 = vadd.f32 %v4419, %v4420
          %v4422 = vrot.slane %v4421, 1
          %v4423 = vadd.f32 %v4421, %v4422
          %v4424 = vadd.f32 %v4423, 1e-12
          %v4425 = vrsqrt.pop %v4424
          %v4426 = vmul.f32 %v4415, %v4405
          %v4427 = vmul.f32 %v4416, %v4406
          %v4428 = vmul.f32 %v4426, %v4425
          %v4429 = vmul.f32 %v4427, %v4425
          %v4430 = vld [vmem:[%s9] sm:$0xff]
          %v4431 = vld [vmem:[%s9 + $0x8] sm:$0xff]
          %v4432 = vld [vmem:[%s9 + $0x10] sm:$0xff]
          %v4433 = vld [vmem:[%s9 + $0x18] sm:$0xff]
          %v4434 = vld [vmem:[%s9 + $0x20] sm:$0xff]
          %v4435 = vld [vmem:[%s9 + $0x28] sm:$0xff]
          %v4436 = vld [vmem:[%s9 + $0x30] sm:$0xff]
          %v4437 = vld [vmem:[%s9 + $0x38] sm:$0xff]
          %v4438 = vld [vmem:[%s9 + $0x40] sm:$0xff]
          %v4439 = vld [vmem:[%s9 + $0x48] sm:$0xff]
          %v4440 = vld [vmem:[%s9 + $0x50] sm:$0xff]
          %v4441 = vld [vmem:[%s9 + $0x58] sm:$0xff]
          %v4442 = vld [vmem:[%s9 + $0x60] sm:$0xff]
          %v4443 = vld [vmem:[%s9 + $0x68] sm:$0xff]
          %v4444 = vld [vmem:[%s9 + $0x70] sm:$0xff]
          %v4445 = vld [vmem:[%s9 + $0x78] sm:$0xff]
          %4446 = vmatprep.subr.mxu0 0.0
          %4447 = vmatpush1.msra.mxu0 %v4430
          %4448 = vmatprep.subr.mxu0 0.0
          %4449 = vmatpush1.msra.mxu0 %v4431
          %4450 = vmatprep.subr.mxu0 0.0
          %4451 = vmatpush1.msra.mxu0 %v4432
          %4452 = vmatprep.subr.mxu0 0.0
          %4453 = vmatpush1.msra.mxu0 %v4433
          %4454 = vmatprep.subr.mxu0 0.0
          %4455 = vmatpush1.msra.mxu0 %v4434
          %4456 = vmatprep.subr.mxu0 0.0
          %4457 = vmatpush1.msra.mxu0 %v4435
          %4458 = vmatprep.subr.mxu0 0.0
          %4459 = vmatpush1.msra.mxu0 %v4436
          %4460 = vmatprep.subr.mxu0 0.0
          %4461 = vmatpush1.msra.mxu0 %v4437
          %4462 = vmatprep.subr.mxu0 0.0
          %4463 = vmatpush1.msra.mxu0 %v4438
          %4464 = vmatprep.subr.mxu0 0.0
          %4465 = vmatpush1.msra.mxu0 %v4439
          %4466 = vmatprep.subr.mxu0 0.0
          %4467 = vmatpush1.msra.mxu0 %v4440
          %4468 = vmatprep.subr.mxu0 0.0
          %4469 = vmatpush1.msra.mxu0 %v4441
          %4470 = vmatprep.subr.mxu0 0.0
          %4471 = vmatpush1.msra.mxu0 %v4442
          %4472 = vmatprep.subr.mxu0 0.0
          %4473 = vmatpush1.msra.mxu0 %v4443
          %4474 = vmatprep.subr.mxu0 0.0
          %4475 = vmatpush1.msra.mxu0 %v4444
          %4476 = vmatprep.subr.mxu0 0.0
          %4477 = vmatpush1.msra.mxu0 %v4445
          %4478 = vmatprep.subr.mxu0 0.0
          %4479 = vmatpush1.msra.mxu0 0.0
          %4480 = vmatprep.subr.mxu0 0.0
          %4481 = vmatpush1.msra.mxu0 0.0
          %4482 = vmatprep.subr.mxu0 0.0
          %4483 = vmatpush1.msra.mxu0 0.0
          %4484 = vmatprep.subr.mxu0 0.0
          %4485 = vmatpush1.msra.mxu0 0.0
          %4486 = vmatprep.subr.mxu0 0.0
          %4487 = vmatpush1.msra.mxu0 0.0
          %4488 = vmatprep.subr.mxu0 0.0
          %4489 = vmatpush1.msra.mxu0 0.0
          %4490 = vmatprep.subr.mxu0 0.0
          %4491 = vmatpush1.msra.mxu0 0.0
          %4492 = vmatprep.subr.mxu0 0.0
          %4493 = vmatpush1.msra.mxu0 0.0
          %4494 = vmatprep.subr.mxu0 0.0
          %4495 = vmatpush1.msra.mxu0 0.0
          %4496 = vmatprep.subr.mxu0 0.0
          %4497 = vmatpush1.msra.mxu0 0.0
          %4498 = vmatprep.subr.mxu0 0.0
          %4499 = vmatpush1.msra.mxu0 0.0
          %4500 = vmatprep.subr.mxu0 0.0
          %4501 = vmatpush1.msra.mxu0 0.0
          %4502 = vmatprep.subr.mxu0 0.0
          %4503 = vmatpush1.msra.mxu0 0.0
          %4504 = vmatprep.subr.mxu0 0.0
          %4505 = vmatpush1.msra.mxu0 0.0
          %4506 = vmatprep.subr.mxu0 0.0
          %4507 = vmatpush1.msra.mxu0 0.0
          %4508 = vmatprep.subr.mxu0 0.0
          %4509 = vmatpush1.msra.mxu0 0.0
          %4510 = vmatprep.mubr.f32.mxu0 0.0
          %4511 = vmatmul.mubr.f32.gmra.mrb[0].mxu0 %v3725
          %v4512 = vpop.f32.mrb[0].mxu0
          %v4513 = vadd.f32 0.0, %v4512
          %v4514 = vpop.f32.mrb[0].mxu0
          %4515 = vmatprep.mubr.f32.mxu0 0.0
          %4516 = vmatmul.mubr.f32.gmra.mrb[0].mxu0 %v3726
          %v4517 = vpop.f32.mrb[0].mxu0
          %v4518 = vadd.f32 0.0, %v4517
          %v4519 = vpop.f32.mrb[0].mxu0
          %4520 = vdwg.mxu0
          %v4522 = vsel %vm3813, %v4428, 0
          %v4525 = vsel %vm3813, %v4429, 0
          %v4528 = vsel %vm709, %v4518, 0
          %4530 = vmatprep.subr.mxu0 0.0
          %4531 = vmatpush1.msra.mxu0 %v4513
          %4532 = vmatprep.subr.mxu0 0.0
          %4533 = vmatpush1.msra.mxu0 %v4528
          %4534 = vmatprep.subr.mxu0 0.0
          %4535 = vmatpush1.msra.mxu0 0.0
          %4536 = vmatprep.subr.mxu0 0.0
          %4537 = vmatpush1.msra.mxu0 0.0
          %4538 = vmatprep.subr.mxu0 0.0
          %4539 = vmatpush1.msra.mxu0 0.0
          %4540 = vmatprep.subr.mxu0 0.0
          %4541 = vmatpush1.msra.mxu0 0.0
          %4542 = vmatprep.subr.mxu0 0.0
          %4543 = vmatpush1.msra.mxu0 0.0
          %4544 = vmatprep.subr.mxu0 0.0
          %4545 = vmatpush1.msra.mxu0 0.0
          %4546 = vmatprep.subr.mxu0 0.0
          %4547 = vmatpush1.msra.mxu0 0.0
          %4548 = vmatprep.subr.mxu0 0.0
          %4549 = vmatpush1.msra.mxu0 0.0
          %4550 = vmatprep.subr.mxu0 0.0
          %4551 = vmatpush1.msra.mxu0 0.0
          %4552 = vmatprep.subr.mxu0 0.0
          %4553 = vmatpush1.msra.mxu0 0.0
          %4554 = vmatprep.subr.mxu0 0.0
          %4555 = vmatpush1.msra.mxu0 0.0
          %4556 = vmatprep.subr.mxu0 0.0
          %4557 = vmatpush1.msra.mxu0 0.0
          %4558 = vmatprep.subr.mxu0 0.0
          %4559 = vmatpush1.msra.mxu0 0.0
          %4560 = vmatprep.subr.mxu0 0.0
          %4561 = vmatpush1.msra.mxu0 0.0
          %4562 = vmatprep.subr.mxu0 0.0
          %4563 = vmatpush1.msra.mxu0 0.0
          %4564 = vmatprep.subr.mxu0 0.0
          %4565 = vmatpush1.msra.mxu0 0.0
          %4566 = vmatprep.subr.mxu0 0.0
          %4567 = vmatpush1.msra.mxu0 0.0
          %4568 = vmatprep.subr.mxu0 0.0
          %4569 = vmatpush1.msra.mxu0 0.0
          %4570 = vmatprep.subr.mxu0 0.0
          %4571 = vmatpush1.msra.mxu0 0.0
          %4572 = vmatprep.subr.mxu0 0.0
          %4573 = vmatpush1.msra.mxu0 0.0
          %4574 = vmatprep.subr.mxu0 0.0
          %4575 = vmatpush1.msra.mxu0 0.0
          %4576 = vmatprep.subr.mxu0 0.0
          %4577 = vmatpush1.msra.mxu0 0.0
          %4578 = vmatprep.subr.mxu0 0.0
          %4579 = vmatpush1.msra.mxu0 0.0
          %4580 = vmatprep.subr.mxu0 0.0
          %4581 = vmatpush1.msra.mxu0 0.0
          %4582 = vmatprep.subr.mxu0 0.0
          %4583 = vmatpush1.msra.mxu0 0.0
          %4584 = vmatprep.subr.mxu0 0.0
          %4585 = vmatpush1.msra.mxu0 0.0
          %4586 = vmatprep.subr.mxu0 0.0
          %4587 = vmatpush1.msra.mxu0 0.0
          %4588 = vmatprep.subr.mxu0 0.0
          %4589 = vmatpush1.msra.mxu0 0.0
          %4590 = vmatprep.subr.mxu0 0.0
          %4591 = vmatpush1.msra.mxu0 0.0
          %4592 = vmatprep.subr.mxu0 0.0
          %4593 = vmatpush1.msra.mxu0 0.0
          %4594 = vmatprep.mubr.f32.mxu0 0.0
          %4595 = vmatmul.mubr.f32.gmra.mrb[0].mxu0 %v4522
          %v4596 = vpop.f32.mrb[0].mxu0
          %v4597 = vadd.f32 0.0, %v4596
          %v4598 = vpop.f32.mrb[0].mxu0
          %4599 = vmatprep.mubr.f32.mxu0 0.0
          %4600 = vmatmul.mubr.f32.gmra.mrb[0].mxu0 %v4525
          %v4601 = vpop.f32.mrb[0].mxu0
          %v4602 = vadd.f32 0.0, %v4601
          %v4603 = vpop.f32.mrb[0].mxu0
          %4604 = vdwg.mxu0
          %v4605 = vmax.f32 %v4597, 0.0
          %v4606 = vmax.f32 %v4602, 0.0
          %v4607 = vld [vmem:[%s10] sm:$0xff]
          %v4608 = vld [vmem:[%s10 + $0x8] sm:$0xff]
          %v4609 = vld [vmem:[%s10 + $0x10] sm:$0xff]
          %v4610 = vld [vmem:[%s10 + $0x18] sm:$0xff]
          %v4611 = vld [vmem:[%s10 + $0x20] sm:$0xff]
          %v4612 = vld [vmem:[%s10 + $0x28] sm:$0xff]
          %v4613 = vld [vmem:[%s10 + $0x30] sm:$0xff]
          %v4614 = vld [vmem:[%s10 + $0x38] sm:$0xff]
          %v4615 = vld [vmem:[%s10 + $0x40] sm:$0xff]
          %v4616 = vld [vmem:[%s10 + $0x48] sm:$0xff]
          %v4617 = vld [vmem:[%s10 + $0x50] sm:$0xff]
          %v4618 = vld [vmem:[%s10 + $0x58] sm:$0xff]
          %v4619 = vld [vmem:[%s10 + $0x60] sm:$0xff]
          %v4620 = vld [vmem:[%s10 + $0x68] sm:$0xff]
          %v4621 = vld [vmem:[%s10 + $0x70] sm:$0xff]
          %v4622 = vld [vmem:[%s10 + $0x78] sm:$0xff]
          %4623 = vmatprep.subr.mxu0 0.0
          %4624 = vmatpush1.msra.mxu0 %v4607
          %4625 = vmatprep.subr.mxu0 0.0
          %4626 = vmatpush1.msra.mxu0 %v4608
          %4627 = vmatprep.subr.mxu0 0.0
          %4628 = vmatpush1.msra.mxu0 %v4609
          %4629 = vmatprep.subr.mxu0 0.0
          %4630 = vmatpush1.msra.mxu0 %v4610
          %4631 = vmatprep.subr.mxu0 0.0
          %4632 = vmatpush1.msra.mxu0 %v4611
          %4633 = vmatprep.subr.mxu0 0.0
          %4634 = vmatpush1.msra.mxu0 %v4612
          %4635 = vmatprep.subr.mxu0 0.0
          %4636 = vmatpush1.msra.mxu0 %v4613
          %4637 = vmatprep.subr.mxu0 0.0
          %4638 = vmatpush1.msra.mxu0 %v4614
          %4639 = vmatprep.subr.mxu0 0.0
          %4640 = vmatpush1.msra.mxu0 %v4615
          %4641 = vmatprep.subr.mxu0 0.0
          %4642 = vmatpush1.msra.mxu0 %v4616
          %4643 = vmatprep.subr.mxu0 0.0
          %4644 = vmatpush1.msra.mxu0 %v4617
          %4645 = vmatprep.subr.mxu0 0.0
          %4646 = vmatpush1.msra.mxu0 %v4618
          %4647 = vmatprep.subr.mxu0 0.0
          %4648 = vmatpush1.msra.mxu0 %v4619
          %4649 = vmatprep.subr.mxu0 0.0
          %4650 = vmatpush1.msra.mxu0 %v4620
          %4651 = vmatprep.subr.mxu0 0.0
          %4652 = vmatpush1.msra.mxu0 %v4621
          %4653 = vmatprep.subr.mxu0 0.0
          %4654 = vmatpush1.msra.mxu0 %v4622
          %4655 = vmatprep.subr.mxu0 0.0
          %4656 = vmatpush1.msra.mxu0 0.0
          %4657 = vmatprep.subr.mxu0 0.0
          %4658 = vmatpush1.msra.mxu0 0.0
          %4659 = vmatprep.subr.mxu0 0.0
          %4660 = vmatpush1.msra.mxu0 0.0
          %4661 = vmatprep.subr.mxu0 0.0
          %4662 = vmatpush1.msra.mxu0 0.0
          %4663 = vmatprep.subr.mxu0 0.0
          %4664 = vmatpush1.msra.mxu0 0.0
          %4665 = vmatprep.subr.mxu0 0.0
          %4666 = vmatpush1.msra.mxu0 0.0
          %4667 = vmatprep.subr.mxu0 0.0
          %4668 = vmatpush1.msra.mxu0 0.0
          %4669 = vmatprep.subr.mxu0 0.0
          %4670 = vmatpush1.msra.mxu0 0.0
          %4671 = vmatprep.subr.mxu0 0.0
          %4672 = vmatpush1.msra.mxu0 0.0
          %4673 = vmatprep.subr.mxu0 0.0
          %4674 = vmatpush1.msra.mxu0 0.0
          %4675 = vmatprep.subr.mxu0 0.0
          %4676 = vmatpush1.msra.mxu0 0.0
          %4677 = vmatprep.subr.mxu0 0.0
          %4678 = vmatpush1.msra.mxu0 0.0
          %4679 = vmatprep.subr.mxu0 0.0
          %4680 = vmatpush1.msra.mxu0 0.0
          %4681 = vmatprep.subr.mxu0 0.0
          %4682 = vmatpush1.msra.mxu0 0.0
          %4683 = vmatprep.subr.mxu0 0.0
          %4684 = vmatpush1.msra.mxu0 0.0
          %4685 = vmatprep.subr.mxu0 0.0
          %4686 = vmatpush1.msra.mxu0 0.0
          %4687 = vmatprep.mubr.f32.mxu0 0.0
          %4688 = vmatmul.mubr.f32.gmra.mrb[0].mxu0 %v4605
          %v4689 = vpop.f32.mrb[0].mxu0
          %v4690 = vadd.f32 0.0, %v4689
          %v4691 = vpop.f32.mrb[0].mxu0
          %4692 = vmatprep.mubr.f32.mxu0 0.0
          %4693 = vmatmul.mubr.f32.gmra.mrb[0].mxu0 %v4606
          %v4694 = vpop.f32.mrb[0].mxu0
          %v4695 = vadd.f32 0.0, %v4694
          %v4696 = vpop.f32.mrb[0].mxu0
          %4697 = vdwg.mxu0
          %v4699 = vsel %vm709, %v4695, 0
          %4701 = vmatprep.subr.mxu0 0.0
          %4702 = vmatpush1.msra.mxu0 %v4690
          %4703 = vmatprep.subr.mxu0 0.0
          %4704 = vmatpush1.msra.mxu0 %v4699
          %4705 = vmatprep.subr.mxu0 0.0
          %4706 = vmatpush1.msra.mxu0 0.0
          %4707 = vmatprep.subr.mxu0 0.0
          %4708 = vmatpush1.msra.mxu0 0.0
          %4709 = vmatprep.subr.mxu0 0.0
          %4710 = vmatpush1.msra.mxu0 0.0
          %4711 = vmatprep.subr.mxu0 0.0
          %4712 = vmatpush1.msra.mxu0 0.0
          %4713 = vmatprep.subr.mxu0 0.0
          %4714 = vmatpush1.msra.mxu0 0.0
          %4715 = vmatprep.subr.mxu0 0.0
          %4716 = vmatpush1.msra.mxu0 0.0
          %4717 = vmatprep.subr.mxu0 0.0
          %4718 = vmatpush1.msra.mxu0 0.0
          %4719 = vmatprep.subr.mxu0 0.0
          %4720 = vmatpush1.msra.mxu0 0.0
          %4721 = vmatprep.subr.mxu0 0.0
          %4722 = vmatpush1.msra.mxu0 0.0
          %4723 = vmatprep.subr.mxu0 0.0
          %4724 = vmatpush1.msra.mxu0 0.0
          %4725 = vmatprep.subr.mxu0 0.0
          %4726 = vmatpush1.msra.mxu0 0.0
          %4727 = vmatprep.subr.mxu0 0.0
          %4728 = vmatpush1.msra.mxu0 0.0
          %4729 = vmatprep.subr.mxu0 0.0
          %4730 = vmatpush1.msra.mxu0 0.0
          %4731 = vmatprep.subr.mxu0 0.0
          %4732 = vmatpush1.msra.mxu0 0.0
          %4733 = vmatprep.subr.mxu0 0.0
          %4734 = vmatpush1.msra.mxu0 0.0
          %4735 = vmatprep.subr.mxu0 0.0
          %4736 = vmatpush1.msra.mxu0 0.0
          %4737 = vmatprep.subr.mxu0 0.0
          %4738 = vmatpush1.msra.mxu0 0.0
          %4739 = vmatprep.subr.mxu0 0.0
          %4740 = vmatpush1.msra.mxu0 0.0
          %4741 = vmatprep.subr.mxu0 0.0
          %4742 = vmatpush1.msra.mxu0 0.0
          %4743 = vmatprep.subr.mxu0 0.0
          %4744 = vmatpush1.msra.mxu0 0.0
          %4745 = vmatprep.subr.mxu0 0.0
          %4746 = vmatpush1.msra.mxu0 0.0
          %4747 = vmatprep.subr.mxu0 0.0
          %4748 = vmatpush1.msra.mxu0 0.0
          %4749 = vmatprep.subr.mxu0 0.0
          %4750 = vmatpush1.msra.mxu0 0.0
          %4751 = vmatprep.subr.mxu0 0.0
          %4752 = vmatpush1.msra.mxu0 0.0
          %4753 = vmatprep.subr.mxu0 0.0
          %4754 = vmatpush1.msra.mxu0 0.0
          %4755 = vmatprep.subr.mxu0 0.0
          %4756 = vmatpush1.msra.mxu0 0.0
          %4757 = vmatprep.subr.mxu0 0.0
          %4758 = vmatpush1.msra.mxu0 0.0
          %4759 = vmatprep.subr.mxu0 0.0
          %4760 = vmatpush1.msra.mxu0 0.0
          %4761 = vmatprep.subr.mxu0 0.0
          %4762 = vmatpush1.msra.mxu0 0.0
          %4763 = vmatprep.subr.mxu0 0.0
          %4764 = vmatpush1.msra.mxu0 0.0
          %4765 = vmatprep.mubr.f32.mxu0 0.0
          %4766 = vmatmul.mubr.f32.gmra.mrb[0].mxu0 %v4522
          %v4767 = vpop.f32.mrb[0].mxu0
          %v4768 = vadd.f32 0.0, %v4767
          %v4769 = vpop.f32.mrb[0].mxu0
          %4770 = vmatprep.mubr.f32.mxu0 0.0
          %4771 = vmatmul.mubr.f32.gmra.mrb[0].mxu0 %v4525
          %v4772 = vpop.f32.mrb[0].mxu0
          %v4773 = vadd.f32 0.0, %v4772
          %v4774 = vpop.f32.mrb[0].mxu0
          %4775 = vdwg.mxu0
          %4776 = vst [vmem:[%s13] sm:$0xff] %v4768
          %4777 = vst [vmem:[%s13 + $0x8] sm:$0x3] %v4773
          %4778 = vst [vmem:[#allocation7] sm:$0xff] %v4605
          %4779 = vst [vmem:[#allocation7 + $0x8] sm:$0x3] %v4606
        $region72: #{lsg_forward.1} parent=63 // pred_fallthru
          _
        // Predicated region
        $region73: #{lsg_forward.1} parent=63 // pred_check
          %p4780 = pneg %p277
        $region74: #{lsg_forward.1} parent=63 // pred_check_branch
          %4782 = sbr.rel (%p4780) target = $region76
        $region75: #{lsg_forward.1} parent=63 // pred_region
          %s4784 = ssub.s32 32, 32
          %4785 = vsyncadd [#allocation4], %s4784
          %s4787 = sshll.u32 [#allocation3], 4
          %s4788 = int_to_ptr.vmem [resolvable:$true] %s4787
          %4790 = dma.vmem_to_hbm [thread:$0]  %s4788, 32, %s11, [#allocation4]
        $region76: #{lsg_forward.1} parent=63 // pred_fallthru
          _
        // Predicated region
        $region77: #{lsg_forward.1} parent=63 // pred_check
          %p4791 = pneg %p298
        $region78: #{lsg_forward.1} parent=63 // pred_check_branch
          %4793 = sbr.rel (%p4791) target = $region80
        $region79: #{lsg_forward.1} parent=63 // pred_region
          %s4795 = ssub.s32 32, 32
          %4796 = vsyncadd [#allocation6], %s4795
          %s4798 = sshll.u32 [#allocation5], 4
          %s4799 = int_to_ptr.vmem [resolvable:$true] %s4798
          %4801 = dma.vmem_to_hbm [thread:$0]  %s4799, 32, %s12, [#allocation6]
        $region80: #{lsg_forward.1} parent=63 // pred_fallthru
          _
        // Predicated region
        $region81: #{lsg_forward.1} parent=63 // pred_check
          %p4802 = pneg %p319
        $region82: #{lsg_forward.1} parent=63 // pred_check_branch
          %4804 = sbr.rel (%p4802) target = $region84
        $region83: #{lsg_forward.1} parent=63 // pred_region
          _
        $region84: #{lsg_forward.1} parent=63 // pred_fallthru
          _
        // Predicated region
        $region85: #{lsg_forward.1} parent=63 // pred_check
          %p4805 = pneg %p340
        $region86: #{lsg_forward.1} parent=63 // pred_check_branch
          %4807 = sbr.rel (%p4805) target = $region88
        $region87: #{lsg_forward.1} parent=63 // pred_region
          %s4809 = ssub.s32 256, 256
          %4810 = vsyncadd [#allocation6], %s4809
          %s4811 = sshll.u32 [#allocation7], 4
          %s4812 = int_to_ptr.vmem [resolvable:$true] %s4811
          %4817 = dma.vmem_to_hbm [thread:$0]  %s4812, 256, %s14, [#allocation6], 128, 128, 8
        $region88: #{lsg_forward.1} parent=63 // pred_fallthru
          _
        // Predicated region
        $region89: #{lsg_forward.1} parent=63 // pred_check
          %p4818 = pneg %p277
        $region90: #{lsg_forward.1} parent=63 // pred_check_branch
          %4820 = sbr.rel (%p4818) target = $region92
        $region91: #{lsg_forward.1} parent=63 // pred_region
          %4821 = dma.done [#allocation4], 32
        $region92: #{lsg_forward.1} parent=63 // pred_fallthru
          _
        // Predicated region
        $region93: #{lsg_forward.1} parent=63 // pred_check
          %p4822 = pneg %p298
        $region94: #{lsg_forward.1} parent=63 // pred_check_branch
          %4824 = sbr.rel (%p4822) target = $region96
        $region95: #{lsg_forward.1} parent=63 // pred_region
          %4825 = dma.done [#allocation6], 32
        $region96: #{lsg_forward.1} parent=63 // pred_fallthru
          _
        // Predicated region
        $region97: #{lsg_forward.1} parent=63 // pred_check
          %p4826 = pneg %p319
        $region98: #{lsg_forward.1} parent=63 // pred_check_branch
          %4828 = sbr.rel (%p4826) target = $region100
        $region99: #{lsg_forward.1} parent=63 // pred_region
          _
        $region100: #{lsg_forward.1} parent=63 // pred_fallthru
          _
        // Predicated region
        $region101: #{lsg_forward.1} parent=63 // pred_check
          %p4829 = pneg %p340
        $region102: #{lsg_forward.1} parent=63 // pred_check_branch
          %4831 = sbr.rel (%p4829) target = $region104
        $region103: #{lsg_forward.1} parent=63 // pred_region
          %4832 = dma.done [#allocation6], 256
        $region104: #{lsg_forward.1} parent=63 // pred_fallthru
          _
      $region64: #{lsg_forward.1} parent=5 // pred_fallthru
        _
      %p4833 = scmp.le.s32.totalorder 2, %s23
      // Predicated region
      $region105: #{lsg_forward.1} parent=5 // pred_check
        %p4834 = pneg %p4833
      $region106: #{lsg_forward.1} parent=5 // pred_check_branch
        %4836 = sbr.rel (%p4834) target = $region108
      $region107: #{lsg_forward.1} parent=5 // pred_region
        %s4837 = ssub.s32 %s23, 2
      $region108: #{lsg_forward.1} parent=5 // pred_fallthru
        _
    $region6: #{lsg_forward.1} parent=1 // loop_footer
      %s27 = sadd.s32 1, %s23
    $region7: #{lsg_forward.1} parent=1 // loop_footer_branch
      %22 = sbr.rel target = $region3
    $region8: #{lsg_forward.1} parent=1 // loop_exit
      _
    %4838 = vsyncpa [#allocation4], 1
    %s4839 = scalar_lea.sflag [#allocation4], 1
    %4840 = vsyncpa %s4839, 1
    %4841 = vsyncpa [#allocation6], 1

</llo_original>
